<compile_context>
chip_gen: v7x
topology: tpu7x:2x2x1
jax: 0.10.0
libtpu: 0.0.40
codegen_flags: <defaults>
</compile_context>

<pallas_src>
import math
import functools

import jax
import jax.numpy as jnp
from jax import lax
from jax.experimental import pallas as pl
from jax.experimental.pallas import tpu as pltpu

LN_EPS = 1e-5  # torch.nn.LayerNorm default
NEG_BIG = -1e30  # finite "minus infinity" (avoids NaN if rows were ever fully masked)


def lambda_init_fn(depth):
    depth = depth + 1
    return 0.8 - 0.6 * math.exp(-0.3 * depth)


# ----------------------------------------------------------------------------
# Pallas kernel: grid = (B, num_q_blocks).  K/V cached in VMEM scratch per batch.
# ----------------------------------------------------------------------------
def transformer_block_kernel(
    lam_ref,                       # SMEM (H,) f32   per-head lambda_
    xfull_ref,                     # (1, T, C)  f32  full sequence (for K/V)
    xq_ref,                        # (1, TQ, C) f32  query block (+ residual)
    ln1_w_ref, ln1_b_ref,          # (1, C) f32
    wq1_ref, wq2_ref,              # (C, H*hs) bf16  (1/sqrt(hs) folded in)
    wk1_ref, wk2_ref,              # (C, H*hs) bf16
    wv_ref,                        # (C, 2C)   bf16
    lnh_w_ref, lnh_b_ref,          # (1, 2*hs) f32   shared per-head LayerNorm
    wo_w_ref, wo_b_ref,            # (2C, C) bf16 ((1-lambda_init) folded), (1, C) f32
    ln2_w_ref, ln2_b_ref,          # (1, C) f32
    w1_ref, b1_ref,                # (C, 4C) bf16, (1, 4C) f32
    w2_ref, b2_ref,                # (4C, C) bf16, (1, C) f32
    o_ref,                         # (1, TQ, C) f32
    k1_scr, k2_scr, v_scr,         # VMEM (T, H*hs) bf16 x2, (T, 2C) bf16
    cat_scr,                       # VMEM (TQ, 2C) f32
    *,
    num_heads, head_size, block_q,
):
    H, hs = num_heads, head_size
    TQ = block_q
    T = xfull_ref.shape[1]
    qi = pl.program_id(1)

    def layernorm(v, w, b):
        mu = jnp.mean(v, axis=-1, keepdims=True)
        var = jnp.mean((v - mu) ** 2, axis=-1, keepdims=True)
        return (v - mu) * lax.rsqrt(var + LN_EPS) * w + b

    def softmax(s):
        m = jnp.max(s, axis=-1, keepdims=True)
        e = jnp.exp(s - m)
        return e * pl.reciprocal(jnp.sum(e, axis=-1, keepdims=True), approx=True)

    # ---- once per batch element: fused K/V projections for the full sequence ----
    @pl.when(qi == 0)
    def _():
        xn_full = layernorm(xfull_ref[0], ln1_w_ref[0], ln1_b_ref[0]).astype(jnp.bfloat16)
        k1_scr[...] = jnp.dot(xn_full, wk1_ref[...],
                              preferred_element_type=jnp.float32).astype(jnp.bfloat16)
        k2_scr[...] = jnp.dot(xn_full, wk2_ref[...],
                              preferred_element_type=jnp.float32).astype(jnp.bfloat16)
        v_scr[...] = jnp.dot(xn_full, wv_ref[...],
                             preferred_element_type=jnp.float32).astype(jnp.bfloat16)

    # ---- LayerNorm 1 + fused Q projections for this query block ----
    xq = xq_ref[0]                                                   # (TQ, C) f32
    xqn = layernorm(xq, ln1_w_ref[0], ln1_b_ref[0]).astype(jnp.bfloat16)
    q1a = jnp.dot(xqn, wq1_ref[...], preferred_element_type=jnp.float32)  # (TQ, H*hs)
    q2a = jnp.dot(xqn, wq2_ref[...], preferred_element_type=jnp.float32)

    # additive causal mask, computed once and shared by all heads
    row = lax.broadcasted_iota(jnp.int32, (TQ, T), 0) + qi * TQ
    col = lax.broadcasted_iota(jnp.int32, (TQ, T), 1)
    mask_add = jnp.where(col <= row, 0.0, NEG_BIG).astype(jnp.float32)

    lnh_w = lnh_w_ref[0]
    lnh_b = lnh_b_ref[0]
    dn = (((1,), (1,)), ((), ()))   # contract last dims:  q @ k.T

    # Per-head differential attention (scores are intrinsically per-head).
    for h in range(H):
        sl_q = slice(h * hs, (h + 1) * hs)
        sl_v = slice(h * 2 * hs, (h + 1) * 2 * hs)
        q1 = q1a[:, sl_q].astype(jnp.bfloat16)
        q2 = q2a[:, sl_q].astype(jnp.bfloat16)
        k1 = k1_scr[:, sl_q]
        k2 = k2_scr[:, sl_q]

        s1 = lax.dot_general(q1, k1, dn, preferred_element_type=jnp.float32) + mask_add
        s2 = lax.dot_general(q2, k2, dn, preferred_element_type=jnp.float32) + mask_add

        w = softmax(s1) - lam_ref[h] * softmax(s2)                   # (TQ, T) f32
        out_h = jnp.dot(w.astype(jnp.bfloat16), v_scr[:, sl_v],
                        preferred_element_type=jnp.float32)          # (TQ, 2*hs)
        # write the head-LayerNormed output straight into the concat slab
        cat_scr[:, sl_v] = layernorm(out_h, lnh_w, lnh_b)

    # TODO(synk): dropout layers are identity (eval mode); no RNG needed here.
    cat = cat_scr[...].astype(jnp.bfloat16)                          # (TQ, 2C)
    attn = jnp.dot(cat, wo_w_ref[...], preferred_element_type=jnp.float32) + wo_b_ref[0]
    h1 = xq + attn

    # ---- LayerNorm 2 -> feed-forward (tiled over the query block) ----
    h1n = layernorm(h1, ln2_w_ref[0], ln2_b_ref[0]).astype(jnp.bfloat16)
    f = jnp.dot(h1n, w1_ref[...], preferred_element_type=jnp.float32) + b1_ref[0]
    f = jnp.maximum(f, 0.0).astype(jnp.bfloat16)
    f = jnp.dot(f, w2_ref[...], preferred_element_type=jnp.float32) + b2_ref[0]

    o_ref[0] = h1 + f


# ----------------------------------------------------------------------------
# Wrapper
# ----------------------------------------------------------------------------
def transformer_block(x, params, *, num_heads, head_size, depth, block_q=None):
    B, T, C = x.shape
    H, hs = num_heads, head_size
    assert C == H * hs, "d_model must equal num_heads * head_size"
    lam_init = lambda_init_fn(depth)

    # per-head scalar lambda_ = exp(sum(lq1*lk1)) - exp(sum(lq2*lk2)) + lambda_init
    lam = (jnp.exp(jnp.sum(params["lambda_q1"] * params["lambda_k1"], axis=-1))
           - jnp.exp(jnp.sum(params["lambda_q2"] * params["lambda_k2"], axis=-1))
           + lam_init).astype(jnp.float32)                            # (H,)

    # --- pack per-head weights into lane-dense (in, out) matrices, bf16 ---
    def pack(w3):                       # (H, C, d) -> (C, H*d)
        return jnp.transpose(w3, (1, 0, 2)).reshape(C, -1)

    scale = 1.0 / math.sqrt(hs)
    wq1 = (pack(params["wq"][:, :, :hs]) * scale).astype(jnp.bfloat16)
    wq2 = (pack(params["wq"][:, :, hs:]) * scale).astype(jnp.bfloat16)
    wk1 = pack(params["wk"][:, :, :hs]).astype(jnp.bfloat16)
    wk2 = pack(params["wk"][:, :, hs:]).astype(jnp.bfloat16)
    wv = pack(params["wv"]).astype(jnp.bfloat16)                      # (C, 2C)
    wo = (params["wo_w"] * (1.0 - lam_init)).astype(jnp.bfloat16)     # fold (1-lambda_init)
    w1 = params["ffn_w1"].astype(jnp.bfloat16)
    w2 = params["ffn_w2"].astype(jnp.bfloat16)

    if block_q is None:
        block_q = 128 if (T % 128 == 0 and T > 128) else T
    assert T % block_q == 0
    nq = T // block_q

    kernel = functools.partial(
        transformer_block_kernel,
        num_heads=H, head_size=hs, block_q=block_q,
    )

    def full(shape):
        return pl.BlockSpec(shape, lambda b, q, _n=len(shape): (0,) * _n)

    in_specs = [
        pl.BlockSpec(memory_space=pltpu.MemorySpace.SMEM),            # lam
        pl.BlockSpec((1, T, C), lambda b, q: (b, 0, 0)),              # x (full seq, K/V)
        pl.BlockSpec((1, block_q, C), lambda b, q: (b, q, 0)),        # x (query block)
        full((1, C)), full((1, C)),                                   # ln1 w/b
        full((C, H * hs)), full((C, H * hs)),                         # Wq1, Wq2
        full((C, H * hs)), full((C, H * hs)),                         # Wk1, Wk2
        full((C, 2 * C)),                                             # Wv
        full((1, 2 * hs)), full((1, 2 * hs)),                         # head LN w/b
        full((2 * C, C)), full((1, C)),                               # Wo w/b
        full((1, C)), full((1, C)),                                   # ln2 w/b
        full((C, 4 * C)), full((1, 4 * C)),                           # ffn1 w/b
        full((4 * C, C)), full((1, C)),                               # ffn2 w/b
    ]
    args = [
        lam, x, x,
        params["ln1_w"], params["ln1_b"],
        wq1, wq2, wk1, wk2, wv,
        params["lnh_w"], params["lnh_b"],
        wo, params["wo_b"],
        params["ln2_w"], params["ln2_b"],
        w1, params["ffn_b1"],
        w2, params["ffn_b2"],
    ]

    scratch_shapes = [
        pltpu.VMEM((T, H * hs), jnp.bfloat16),       # K1 (all heads packed on lanes)
        pltpu.VMEM((T, H * hs), jnp.bfloat16),       # K2
        pltpu.VMEM((T, 2 * C), jnp.bfloat16),        # V
        pltpu.VMEM((block_q, 2 * C), jnp.float32),   # concat slab of head outputs
    ]

    return pl.pallas_call(
        kernel,
        out_shape=jax.ShapeDtypeStruct((B, T, C), jnp.float32),
        grid=(B, nq),
        in_specs=in_specs,
        out_specs=pl.BlockSpec((1, block_q, C), lambda b, q: (b, q, 0)),
        scratch_shapes=scratch_shapes,
        compiler_params=pltpu.CompilerParams(
            # batch axis independent -> megacore sharding on v7x; q-block axis
            # carries the K/V scratch so it stays "arbitrary".
            dimension_semantics=("parallel", "arbitrary"),
            # raise the scoped VMEM limit but keep headroom below v7x's 64 MiB.
            vmem_limit_bytes=48 * 1024 * 1024,
        ),
    )(*args)


# ----------------------------------------------------------------------------
# Pure-JAX reference (mirrors the PyTorch module, eval mode)
# ----------------------------------------------------------------------------
def transformer_block_ref(x, params, *, num_heads, head_size, depth):
    lam_init = lambda_init_fn(depth)

    def ln(v, w, b):
        mu = v.mean(-1, keepdims=True)
        var = ((v - mu) ** 2).mean(-1, keepdims=True)
        return (v - mu) / jnp.sqrt(var + LN_EPS) * w + b

    B, T, C = x.shape
    xn = ln(x, params["ln1_w"][0], params["ln1_b"][0])
    causal = jnp.tril(jnp.ones((T, T), bool))
    heads = []
    for h in range(num_heads):
        q = xn @ params["wq"][h]
        k = xn @ params["wk"][h]
        v = xn @ params["wv"][h]
        q1, q2 = q[..., :head_size], q[..., head_size:]
        k1, k2 = k[..., :head_size], k[..., head_size:]
        s1 = q1 @ jnp.swapaxes(k1, -1, -2) / math.sqrt(head_size)
        s2 = q2 @ jnp.swapaxes(k2, -1, -2) / math.sqrt(head_size)
        s1 = jnp.where(causal, s1, -jnp.inf)
        s2 = jnp.where(causal, s2, -jnp.inf)
        lam = (jnp.exp(jnp.sum(params["lambda_q1"][h] * params["lambda_k1"][h]))
               - jnp.exp(jnp.sum(params["lambda_q2"][h] * params["lambda_k2"][h]))
               + lam_init)
        w = jax.nn.softmax(s1, -1) - lam * jax.nn.softmax(s2, -1)
        o = w @ v
        heads.append(ln(o, params["lnh_w"][0], params["lnh_b"][0]))
    cat = jnp.concatenate(heads, -1) * (1 - lam_init)
    h1 = x + (cat @ params["wo_w"] + params["wo_b"][0])
    h1n = ln(h1, params["ln2_w"][0], params["ln2_b"][0])
    f = jax.nn.relu(h1n @ params["ffn_w1"] + params["ffn_b1"][0])
    f = f @ params["ffn_w2"] + params["ffn_b2"][0]
    return h1 + f


# ----------------------------------------------------------------------------
# Main
# ----------------------------------------------------------------------------
if __name__ == "__main__":
    # small config consistent with the module: 2*d_model == num_heads * 2*head_size
    B, T = 2, 8
    d_model, num_heads, head_size, depth = 32, 4, 8, 0
    C, hs2 = d_model, 2 * head_size

    key = jax.random.PRNGKey(0)
    ks = jax.random.split(key, 16)
    n = lambda k, shape, s=0.1: (s * jax.random.normal(k, shape)).astype(jnp.float32)

    params = {
        "ln1_w": 1.0 + n(ks[0], (1, C)), "ln1_b": n(ks[1], (1, C)),
        "wq": n(ks[2], (num_heads, C, hs2)),
        "wk": n(ks[3], (num_heads, C, hs2)),
        "wv": n(ks[4], (num_heads, C, hs2)),
        "lambda_q1": n(ks[5], (num_heads, head_size)),
        "lambda_q2": n(ks[6], (num_heads, head_size)),
        "lambda_k1": n(ks[7], (num_heads, head_size)),
        "lambda_k2": n(ks[8], (num_heads, head_size)),
        "lnh_w": 1.0 + n(ks[9], (1, hs2)), "lnh_b": n(ks[9], (1, hs2)),
        "wo_w": n(ks[10], (2 * C, C)), "wo_b": n(ks[11], (1, C)),
        "ln2_w": 1.0 + n(ks[12], (1, C)), "ln2_b": n(ks[12], (1, C)),
        "ffn_w1": n(ks[13], (C, 4 * C)), "ffn_b1": n(ks[13], (1, 4 * C)),
        "ffn_w2": n(ks[14], (4 * C, C)), "ffn_b2": n(ks[14], (1, C)),
    }

    x = jax.random.normal(ks[15], (B, T, C), dtype=jnp.float32)

    out = transformer_block(x, params, num_heads=num_heads,
                            head_size=head_size, depth=depth)
    out = jax.block_until_ready(out)

    ref = transformer_block_ref(x, params, num_heads=num_heads,
                                head_size=head_size, depth=depth)
    assert out.shape == (B, T, C)
    # bf16 matmul inputs (+ approx reciprocal) -> ~1e-2 tolerance vs f32 reference
    assert jnp.allclose(out, ref, atol=5e-2, rtol=5e-2), (
        f"max abs err {jnp.max(jnp.abs(out - ref))}")

    print("KERNEL_OK")
</pallas_src>

<mosaic_0001>
module attributes {stable_mosaic.version = 11 : i64} {
  func.func @transformer_block_kernel(%arg0: i32, %arg1: i32, %arg2: memref<4xf32, #tpu.memory_space<smem>>, %arg3: memref<1x8x32xf32, #tpu.memory_space<vmem>>, %arg4: memref<1x8x32xf32, #tpu.memory_space<vmem>>, %arg5: memref<1x32xf32, #tpu.memory_space<vmem>>, %arg6: memref<1x32xf32, #tpu.memory_space<vmem>>, %arg7: memref<32x32xbf16, #tpu.memory_space<vmem>>, %arg8: memref<32x32xbf16, #tpu.memory_space<vmem>>, %arg9: memref<32x32xbf16, #tpu.memory_space<vmem>>, %arg10: memref<32x32xbf16, #tpu.memory_space<vmem>>, %arg11: memref<32x64xbf16, #tpu.memory_space<vmem>>, %arg12: memref<1x16xf32, #tpu.memory_space<vmem>>, %arg13: memref<1x16xf32, #tpu.memory_space<vmem>>, %arg14: memref<64x32xbf16, #tpu.memory_space<vmem>>, %arg15: memref<1x32xf32, #tpu.memory_space<vmem>>, %arg16: memref<1x32xf32, #tpu.memory_space<vmem>>, %arg17: memref<1x32xf32, #tpu.memory_space<vmem>>, %arg18: memref<32x128xbf16, #tpu.memory_space<vmem>>, %arg19: memref<1x128xf32, #tpu.memory_space<vmem>>, %arg20: memref<128x32xbf16, #tpu.memory_space<vmem>>, %arg21: memref<1x32xf32, #tpu.memory_space<vmem>>, %arg22: memref<1x8x32xf32, #tpu.memory_space<vmem>>, %arg23: memref<8x32xbf16, #tpu.memory_space<vmem>>, %arg24: memref<8x32xbf16, #tpu.memory_space<vmem>>, %arg25: memref<8x64xbf16, #tpu.memory_space<vmem>>, %arg26: memref<8x64xf32, #tpu.memory_space<vmem>>) attributes {dimension_semantics = [#tpu.dimension_semantics<parallel>, #tpu.dimension_semantics<arbitrary>], iteration_bounds = array<i64: 2, 1>, scalar_prefetch = 0 : i64, scratch_operands = 4 : i64, tpu.core_type = #tpu.core_type<tc>, window_params = [{transform_indices = @transform_0, window_bounds = array<i64: 4>}, {transform_indices = @transform_1, window_bounds = array<i64: 1, 8, 32>}, {transform_indices = @transform_2, window_bounds = array<i64: 1, 8, 32>}, {pipeline_mode = #tpu.pipeline_mode<synchronous>, transform_indices = @transform_3, window_bounds = array<i64: 1, 32>}, {pipeline_mode = #tpu.pipeline_mode<synchronous>, transform_indices = @transform_4, window_bounds = array<i64: 1, 32>}, {pipeline_mode = #tpu.pipeline_mode<synchronous>, transform_indices = @transform_5, window_bounds = array<i64: 32, 32>}, {pipeline_mode = #tpu.pipeline_mode<synchronous>, transform_indices = @transform_6, window_bounds = array<i64: 32, 32>}, {pipeline_mode = #tpu.pipeline_mode<synchronous>, transform_indices = @transform_7, window_bounds = array<i64: 32, 32>}, {pipeline_mode = #tpu.pipeline_mode<synchronous>, transform_indices = @transform_8, window_bounds = array<i64: 32, 32>}, {pipeline_mode = #tpu.pipeline_mode<synchronous>, transform_indices = @transform_9, window_bounds = array<i64: 32, 64>}, {pipeline_mode = #tpu.pipeline_mode<synchronous>, transform_indices = @transform_10, window_bounds = array<i64: 1, 16>}, {pipeline_mode = #tpu.pipeline_mode<synchronous>, transform_indices = @transform_11, window_bounds = array<i64: 1, 16>}, {pipeline_mode = #tpu.pipeline_mode<synchronous>, transform_indices = @transform_12, window_bounds = array<i64: 64, 32>}, {pipeline_mode = #tpu.pipeline_mode<synchronous>, transform_indices = @transform_13, window_bounds = array<i64: 1, 32>}, {pipeline_mode = #tpu.pipeline_mode<synchronous>, transform_indices = @transform_14, window_bounds = array<i64: 1, 32>}, {pipeline_mode = #tpu.pipeline_mode<synchronous>, transform_indices = @transform_15, window_bounds = array<i64: 1, 32>}, {pipeline_mode = #tpu.pipeline_mode<synchronous>, transform_indices = @transform_16, window_bounds = array<i64: 32, 128>}, {pipeline_mode = #tpu.pipeline_mode<synchronous>, transform_indices = @transform_17, window_bounds = array<i64: 1, 128>}, {pipeline_mode = #tpu.pipeline_mode<synchronous>, transform_indices = @transform_18, window_bounds = array<i64: 128, 32>}, {pipeline_mode = #tpu.pipeline_mode<synchronous>, transform_indices = @transform_19, window_bounds = array<i64: 1, 32>}, {transform_indices = @transform_20, window_bounds = array<i64: 1, 8, 32>}]} {
    %c0_i32 = arith.constant 0 : i32
    %0 = arith.cmpi eq, %arg1, %c0_i32 : i32
    %1 = arith.extui %0 : i1 to i32
    %c0_i32_0 = arith.constant 0 : i32
    %2 = arith.cmpi ne, %1, %c0_i32_0 : i32
    scf.if %2 {
      %c0_129 = arith.constant 0 : index
      %c0_130 = arith.constant 0 : index
      %c0_131 = arith.constant 0 : index
      %359 = vector.load %arg3[%c0_129, %c0_130, %c0_131] : memref<1x8x32xf32, #tpu.memory_space<vmem>>, vector<1x8x32xf32>
      %360 = vector.shape_cast %359 : vector<1x8x32xf32> to vector<8x32xf32>
      %c0_132 = arith.constant 0 : index
      %c0_133 = arith.constant 0 : index
      %361 = vector.load %arg5[%c0_132, %c0_133] : memref<1x32xf32, #tpu.memory_space<vmem>>, vector<1x32xf32>
      %362 = vector.shape_cast %361 : vector<1x32xf32> to vector<32xf32>
      %c0_134 = arith.constant 0 : index
      %c0_135 = arith.constant 0 : index
      %363 = vector.load %arg6[%c0_134, %c0_135] : memref<1x32xf32, #tpu.memory_space<vmem>>, vector<1x32xf32>
      %364 = vector.shape_cast %363 : vector<1x32xf32> to vector<32xf32>
      %cst_136 = arith.constant dense<0.000000e+00> : vector<8xf32>
      %365 = vector.multi_reduction <add>, %360, %cst_136 [1] : vector<8x32xf32> to vector<8xf32>
      %366 = vector.shape_cast %365 : vector<8xf32> to vector<8x1xf32>
      %cst_137 = arith.constant 3.200000e+01 : f32
      %367 = vector.broadcast %cst_137 : f32 to vector<8x1xf32>
      %368 = arith.divf %366, %367 : vector<8x1xf32>
      %369 = vector.broadcast %368 : vector<8x1xf32> to vector<8x32xf32>
      %370 = arith.subf %360, %369 : vector<8x32xf32>
      %371 = arith.mulf %370, %370 : vector<8x32xf32>
      %cst_138 = arith.constant dense<0.000000e+00> : vector<8xf32>
      %372 = vector.multi_reduction <add>, %371, %cst_138 [1] : vector<8x32xf32> to vector<8xf32>
      %373 = vector.shape_cast %372 : vector<8xf32> to vector<8x1xf32>
      %cst_139 = arith.constant 3.200000e+01 : f32
      %374 = vector.broadcast %cst_139 : f32 to vector<8x1xf32>
      %375 = arith.divf %373, %374 : vector<8x1xf32>
      %376 = vector.broadcast %368 : vector<8x1xf32> to vector<8x32xf32>
      %377 = arith.subf %360, %376 : vector<8x32xf32>
      %cst_140 = arith.constant 9.99999974E-6 : f32
      %378 = vector.broadcast %cst_140 : f32 to vector<8x1xf32>
      %379 = arith.addf %375, %378 : vector<8x1xf32>
      %380 = math.rsqrt %379 : vector<8x1xf32>
      %381 = vector.broadcast %380 : vector<8x1xf32> to vector<8x32xf32>
      %382 = arith.mulf %377, %381 : vector<8x32xf32>
      %383 = vector.shape_cast %362 : vector<32xf32> to vector<1x32xf32>
      %384 = vector.broadcast %383 : vector<1x32xf32> to vector<8x32xf32>
      %385 = arith.mulf %382, %384 : vector<8x32xf32>
      %386 = vector.shape_cast %364 : vector<32xf32> to vector<1x32xf32>
      %387 = vector.broadcast %386 : vector<1x32xf32> to vector<8x32xf32>
      %388 = arith.addf %385, %387 : vector<8x32xf32>
      %389 = arith.truncf %388 : vector<8x32xf32> to vector<8x32xbf16>
      %c0_141 = arith.constant 0 : index
      %c0_142 = arith.constant 0 : index
      %390 = vector.load %arg9[%c0_141, %c0_142] : memref<32x32xbf16, #tpu.memory_space<vmem>>, vector<32x32xbf16>
      %cst_143 = arith.constant dense<0.000000e+00> : vector<8x32xf32>
      %391 = tpu.matmul %389, %390, %cst_143 {dimension_numbers = #tpu.dot_dimension_numbers<[1], [0], [0], [1], [0, 0, 1, 1], [], []>} : vector<8x32xbf16>, vector<32x32xbf16>, vector<8x32xf32> -> vector<8x32xf32>
      %392 = arith.truncf %391 : vector<8x32xf32> to vector<8x32xbf16>
      %c0_144 = arith.constant 0 : index
      %c0_145 = arith.constant 0 : index
      %393 = vector.load %arg23[%c0_144, %c0_145] : memref<8x32xbf16, #tpu.memory_space<vmem>>, vector<8x32xbf16>
      tpu.vector_store %arg23[%c0_144, %c0_145], %392 {strides = array<i32>} : memref<8x32xbf16, #tpu.memory_space<vmem>>, vector<8x32xbf16>,
      %c0_146 = arith.constant 0 : index
      %c0_147 = arith.constant 0 : index
      %394 = vector.load %arg10[%c0_146, %c0_147] : memref<32x32xbf16, #tpu.memory_space<vmem>>, vector<32x32xbf16>
      %cst_148 = arith.constant dense<0.000000e+00> : vector<8x32xf32>
      %395 = tpu.matmul %389, %394, %cst_148 {dimension_numbers = #tpu.dot_dimension_numbers<[1], [0], [0], [1], [0, 0, 1, 1], [], []>} : vector<8x32xbf16>, vector<32x32xbf16>, vector<8x32xf32> -> vector<8x32xf32>
      %396 = arith.truncf %395 : vector<8x32xf32> to vector<8x32xbf16>
      %c0_149 = arith.constant 0 : index
      %c0_150 = arith.constant 0 : index
      %397 = vector.load %arg24[%c0_149, %c0_150] : memref<8x32xbf16, #tpu.memory_space<vmem>>, vector<8x32xbf16>
      tpu.vector_store %arg24[%c0_149, %c0_150], %396 {strides = array<i32>} : memref<8x32xbf16, #tpu.memory_space<vmem>>, vector<8x32xbf16>,
      %c0_151 = arith.constant 0 : index
      %c0_152 = arith.constant 0 : index
      %398 = vector.load %arg11[%c0_151, %c0_152] : memref<32x64xbf16, #tpu.memory_space<vmem>>, vector<32x64xbf16>
      %cst_153 = arith.constant dense<0.000000e+00> : vector<8x64xf32>
      %399 = tpu.matmul %389, %398, %cst_153 {dimension_numbers = #tpu.dot_dimension_numbers<[1], [0], [0], [1], [0, 0, 1, 1], [], []>} : vector<8x32xbf16>, vector<32x64xbf16>, vector<8x64xf32> -> vector<8x64xf32>
      %400 = arith.truncf %399 : vector<8x64xf32> to vector<8x64xbf16>
      %c0_154 = arith.constant 0 : index
      %c0_155 = arith.constant 0 : index
      %401 = vector.load %arg25[%c0_154, %c0_155] : memref<8x64xbf16, #tpu.memory_space<vmem>>, vector<8x64xbf16>
      tpu.vector_store %arg25[%c0_154, %c0_155], %400 {strides = array<i32>} : memref<8x64xbf16, #tpu.memory_space<vmem>>, vector<8x64xbf16>,
    } else {
    }
    %c0 = arith.constant 0 : index
    %c0_1 = arith.constant 0 : index
    %c0_2 = arith.constant 0 : index
    %3 = vector.load %arg4[%c0, %c0_1, %c0_2] : memref<1x8x32xf32, #tpu.memory_space<vmem>>, vector<1x8x32xf32>
    %4 = vector.shape_cast %3 : vector<1x8x32xf32> to vector<8x32xf32>
    %c0_3 = arith.constant 0 : index
    %c0_4 = arith.constant 0 : index
    %5 = vector.load %arg5[%c0_3, %c0_4] : memref<1x32xf32, #tpu.memory_space<vmem>>, vector<1x32xf32>
    %6 = vector.shape_cast %5 : vector<1x32xf32> to vector<32xf32>
    %c0_5 = arith.constant 0 : index
    %c0_6 = arith.constant 0 : index
    %7 = vector.load %arg6[%c0_5, %c0_6] : memref<1x32xf32, #tpu.memory_space<vmem>>, vector<1x32xf32>
    %8 = vector.shape_cast %7 : vector<1x32xf32> to vector<32xf32>
    %cst = arith.constant dense<0.000000e+00> : vector<8xf32>
    %9 = vector.multi_reduction <add>, %4, %cst [1] : vector<8x32xf32> to vector<8xf32>
    %10 = vector.shape_cast %9 : vector<8xf32> to vector<8x1xf32>
    %cst_7 = arith.constant 3.200000e+01 : f32
    %11 = vector.broadcast %cst_7 : f32 to vector<8x1xf32>
    %12 = arith.divf %10, %11 : vector<8x1xf32>
    %13 = vector.broadcast %12 : vector<8x1xf32> to vector<8x32xf32>
    %14 = arith.subf %4, %13 : vector<8x32xf32>
    %15 = arith.mulf %14, %14 : vector<8x32xf32>
    %cst_8 = arith.constant dense<0.000000e+00> : vector<8xf32>
    %16 = vector.multi_reduction <add>, %15, %cst_8 [1] : vector<8x32xf32> to vector<8xf32>
    %17 = vector.shape_cast %16 : vector<8xf32> to vector<8x1xf32>
    %cst_9 = arith.constant 3.200000e+01 : f32
    %18 = vector.broadcast %cst_9 : f32 to vector<8x1xf32>
    %19 = arith.divf %17, %18 : vector<8x1xf32>
    %20 = vector.broadcast %12 : vector<8x1xf32> to vector<8x32xf32>
    %21 = arith.subf %4, %20 : vector<8x32xf32>
    %cst_10 = arith.constant 9.99999974E-6 : f32
    %22 = vector.broadcast %cst_10 : f32 to vector<8x1xf32>
    %23 = arith.addf %19, %22 : vector<8x1xf32>
    %24 = math.rsqrt %23 : vector<8x1xf32>
    %25 = vector.broadcast %24 : vector<8x1xf32> to vector<8x32xf32>
    %26 = arith.mulf %21, %25 : vector<8x32xf32>
    %27 = vector.shape_cast %6 : vector<32xf32> to vector<1x32xf32>
    %28 = vector.broadcast %27 : vector<1x32xf32> to vector<8x32xf32>
    %29 = arith.mulf %26, %28 : vector<8x32xf32>
    %30 = vector.shape_cast %8 : vector<32xf32> to vector<1x32xf32>
    %31 = vector.broadcast %30 : vector<1x32xf32> to vector<8x32xf32>
    %32 = arith.addf %29, %31 : vector<8x32xf32>
    %33 = arith.truncf %32 : vector<8x32xf32> to vector<8x32xbf16>
    %c0_11 = arith.constant 0 : index
    %c0_12 = arith.constant 0 : index
    %34 = vector.load %arg7[%c0_11, %c0_12] : memref<32x32xbf16, #tpu.memory_space<vmem>>, vector<32x32xbf16>
    %cst_13 = arith.constant dense<0.000000e+00> : vector<8x32xf32>
    %35 = tpu.matmul %33, %34, %cst_13 {dimension_numbers = #tpu.dot_dimension_numbers<[1], [0], [0], [1], [0, 0, 1, 1], [], []>} : vector<8x32xbf16>, vector<32x32xbf16>, vector<8x32xf32> -> vector<8x32xf32>
    %c0_14 = arith.constant 0 : index
    %c0_15 = arith.constant 0 : index
    %36 = vector.load %arg8[%c0_14, %c0_15] : memref<32x32xbf16, #tpu.memory_space<vmem>>, vector<32x32xbf16>
    %cst_16 = arith.constant dense<0.000000e+00> : vector<8x32xf32>
    %37 = tpu.matmul %33, %36, %cst_16 {dimension_numbers = #tpu.dot_dimension_numbers<[1], [0], [0], [1], [0, 0, 1, 1], [], []>} : vector<8x32xbf16>, vector<32x32xbf16>, vector<8x32xf32> -> vector<8x32xf32>
    %38 = tpu.iota {dimensions = array<i32: 0>} : vector<8x8xi32>
    %c8_i32 = arith.constant 8 : i32
    %39 = arith.muli %arg1, %c8_i32 : i32
    %40 = vector.broadcast %39 : i32 to vector<8x8xi32>
    %41 = arith.addi %38, %40 : vector<8x8xi32>
    %42 = tpu.iota {dimensions = array<i32: 1>} : vector<8x8xi32>
    %43 = arith.cmpi sle, %42, %41 : vector<8x8xi32>
    %cst_17 = arith.constant 0.000000e+00 : f32
    %cst_18 = arith.constant -1.000000e+30 : f32
    %44 = vector.broadcast %cst_17 : f32 to vector<8x8xf32>
    %45 = vector.broadcast %cst_18 : f32 to vector<8x8xf32>
    %46 = arith.select %43, %44, %45 : vector<8x8xi1>, vector<8x8xf32>
    %c0_19 = arith.constant 0 : index
    %c0_20 = arith.constant 0 : index
    %47 = vector.load %arg12[%c0_19, %c0_20] : memref<1x16xf32, #tpu.memory_space<vmem>>, vector<1x16xf32>
    %48 = vector.shape_cast %47 : vector<1x16xf32> to vector<16xf32>
    %c0_21 = arith.constant 0 : index
    %c0_22 = arith.constant 0 : index
    %49 = vector.load %arg13[%c0_21, %c0_22] : memref<1x16xf32, #tpu.memory_space<vmem>>, vector<1x16xf32>
    %50 = vector.shape_cast %49 : vector<1x16xf32> to vector<16xf32>
    %51 = vector.extract_strided_slice %35 {offsets = [0, 0], sizes = [8, 8], strides = [1, 1]} : vector<8x32xf32> to vector<8x8xf32>
    %52 = arith.truncf %51 : vector<8x8xf32> to vector<8x8xbf16>
    %53 = vector.extract_strided_slice %37 {offsets = [0, 0], sizes = [8, 8], strides = [1, 1]} : vector<8x32xf32> to vector<8x8xf32>
    %54 = arith.truncf %53 : vector<8x8xf32> to vector<8x8xbf16>
    %c0_23 = arith.constant 0 : index
    %c0_24 = arith.constant 0 : index
    %55 = vector.load %arg23[%c0_23, %c0_24] : memref<8x32xbf16, #tpu.memory_space<vmem>>, vector<8x8xbf16>
    %c0_25 = arith.constant 0 : index
    %c0_26 = arith.constant 0 : index
    %56 = vector.load %arg24[%c0_25, %c0_26] : memref<8x32xbf16, #tpu.memory_space<vmem>>, vector<8x8xbf16>
    %cst_27 = arith.constant dense<0.000000e+00> : vector<8x8xf32>
    %57 = tpu.matmul %52, %55, %cst_27 {dimension_numbers = #tpu.dot_dimension_numbers<[1], [1], [0], [0], [0, 0, 1, 0], [], []>} : vector<8x8xbf16>, vector<8x8xbf16>, vector<8x8xf32> -> vector<8x8xf32>
    %58 = arith.addf %57, %46 : vector<8x8xf32>
    %cst_28 = arith.constant dense<0.000000e+00> : vector<8x8xf32>
    %59 = tpu.matmul %54, %56, %cst_28 {dimension_numbers = #tpu.dot_dimension_numbers<[1], [1], [0], [0], [0, 0, 1, 0], [], []>} : vector<8x8xbf16>, vector<8x8xbf16>, vector<8x8xf32> -> vector<8x8xf32>
    %60 = arith.addf %59, %46 : vector<8x8xf32>
    %cst_29 = arith.constant dense<0xFF800000> : vector<8xf32>
    %61 = vector.multi_reduction <maximumf>, %58, %cst_29 [1] : vector<8x8xf32> to vector<8xf32>
    %62 = vector.shape_cast %61 : vector<8xf32> to vector<8x1xf32>
    %63 = vector.broadcast %62 : vector<8x1xf32> to vector<8x8xf32>
    %64 = arith.subf %58, %63 : vector<8x8xf32>
    %65 = math.exp %64 : vector<8x8xf32>
    %cst_30 = arith.constant dense<0.000000e+00> : vector<8xf32>
    %66 = vector.multi_reduction <add>, %65, %cst_30 [1] : vector<8x8xf32> to vector<8xf32>
    %67 = vector.shape_cast %66 : vector<8xf32> to vector<8x1xf32>
    %68 = tpu.reciprocal %67 {approx = true} : vector<8x1xf32> -> vector<8x1xf32>
    %69 = vector.broadcast %68 : vector<8x1xf32> to vector<8x8xf32>
    %70 = arith.mulf %65, %69 : vector<8x8xf32>
    %c0_31 = arith.constant 0 : index
    %71 = memref.load %arg2[%c0_31] : memref<4xf32, #tpu.memory_space<smem>>
    %cst_32 = arith.constant dense<0xFF800000> : vector<8xf32>
    %72 = vector.multi_reduction <maximumf>, %60, %cst_32 [1] : vector<8x8xf32> to vector<8xf32>
    %73 = vector.shape_cast %72 : vector<8xf32> to vector<8x1xf32>
    %74 = vector.broadcast %73 : vector<8x1xf32> to vector<8x8xf32>
    %75 = arith.subf %60, %74 : vector<8x8xf32>
    %76 = math.exp %75 : vector<8x8xf32>
    %cst_33 = arith.constant dense<0.000000e+00> : vector<8xf32>
    %77 = vector.multi_reduction <add>, %76, %cst_33 [1] : vector<8x8xf32> to vector<8xf32>
    %78 = vector.shape_cast %77 : vector<8xf32> to vector<8x1xf32>
    %79 = tpu.reciprocal %78 {approx = true} : vector<8x1xf32> -> vector<8x1xf32>
    %80 = vector.broadcast %79 : vector<8x1xf32> to vector<8x8xf32>
    %81 = arith.mulf %76, %80 : vector<8x8xf32>
    %82 = vector.broadcast %71 : f32 to vector<8x8xf32>
    %83 = arith.mulf %82, %81 : vector<8x8xf32>
    %84 = arith.subf %70, %83 : vector<8x8xf32>
    %85 = arith.truncf %84 : vector<8x8xf32> to vector<8x8xbf16>
    %c0_34 = arith.constant 0 : index
    %c0_35 = arith.constant 0 : index
    %86 = vector.load %arg25[%c0_34, %c0_35] : memref<8x64xbf16, #tpu.memory_space<vmem>>, vector<8x16xbf16>
    %cst_36 = arith.constant dense<0.000000e+00> : vector<8x16xf32>
    %87 = tpu.matmul %85, %86, %cst_36 {dimension_numbers = #tpu.dot_dimension_numbers<[1], [0], [0], [1], [0, 0, 1, 1], [], []>} : vector<8x8xbf16>, vector<8x16xbf16>, vector<8x16xf32> -> vector<8x16xf32>
    %cst_37 = arith.constant dense<0.000000e+00> : vector<8xf32>
    %88 = vector.multi_reduction <add>, %87, %cst_37 [1] : vector<8x16xf32> to vector<8xf32>
    %89 = vector.shape_cast %88 : vector<8xf32> to vector<8x1xf32>
    %cst_38 = arith.constant 1.600000e+01 : f32
    %90 = vector.broadcast %cst_38 : f32 to vector<8x1xf32>
    %91 = arith.divf %89, %90 : vector<8x1xf32>
    %92 = vector.broadcast %91 : vector<8x1xf32> to vector<8x16xf32>
    %93 = arith.subf %87, %92 : vector<8x16xf32>
    %94 = arith.mulf %93, %93 : vector<8x16xf32>
    %cst_39 = arith.constant dense<0.000000e+00> : vector<8xf32>
    %95 = vector.multi_reduction <add>, %94, %cst_39 [1] : vector<8x16xf32> to vector<8xf32>
    %96 = vector.shape_cast %95 : vector<8xf32> to vector<8x1xf32>
    %cst_40 = arith.constant 1.600000e+01 : f32
    %97 = vector.broadcast %cst_40 : f32 to vector<8x1xf32>
    %98 = arith.divf %96, %97 : vector<8x1xf32>
    %99 = vector.broadcast %91 : vector<8x1xf32> to vector<8x16xf32>
    %100 = arith.subf %87, %99 : vector<8x16xf32>
    %cst_41 = arith.constant 9.99999974E-6 : f32
    %101 = vector.broadcast %cst_41 : f32 to vector<8x1xf32>
    %102 = arith.addf %98, %101 : vector<8x1xf32>
    %103 = math.rsqrt %102 : vector<8x1xf32>
    %104 = vector.broadcast %103 : vector<8x1xf32> to vector<8x16xf32>
    %105 = arith.mulf %100, %104 : vector<8x16xf32>
    %106 = vector.shape_cast %48 : vector<16xf32> to vector<1x16xf32>
    %107 = vector.broadcast %106 : vector<1x16xf32> to vector<8x16xf32>
    %108 = arith.mulf %105, %107 : vector<8x16xf32>
    %109 = vector.shape_cast %50 : vector<16xf32> to vector<1x16xf32>
    %110 = vector.broadcast %109 : vector<1x16xf32> to vector<8x16xf32>
    %111 = arith.addf %108, %110 : vector<8x16xf32>
    %c0_42 = arith.constant 0 : index
    %c0_43 = arith.constant 0 : index
    %112 = vector.load %arg26[%c0_42, %c0_43] : memref<8x64xf32, #tpu.memory_space<vmem>>, vector<8x16xf32>
    tpu.vector_store %arg26[%c0_42, %c0_43], %111 {strides = array<i32>} : memref<8x64xf32, #tpu.memory_space<vmem>>, vector<8x16xf32>,
    %113 = vector.extract_strided_slice %35 {offsets = [0, 8], sizes = [8, 8], strides = [1, 1]} : vector<8x32xf32> to vector<8x8xf32>
    %114 = arith.truncf %113 : vector<8x8xf32> to vector<8x8xbf16>
    %115 = vector.extract_strided_slice %37 {offsets = [0, 8], sizes = [8, 8], strides = [1, 1]} : vector<8x32xf32> to vector<8x8xf32>
    %116 = arith.truncf %115 : vector<8x8xf32> to vector<8x8xbf16>
    %c0_44 = arith.constant 0 : index
    %c8 = arith.constant 8 : index
    %117 = vector.load %arg23[%c0_44, %c8] : memref<8x32xbf16, #tpu.memory_space<vmem>>, vector<8x8xbf16>
    %c0_45 = arith.constant 0 : index
    %c8_46 = arith.constant 8 : index
    %118 = vector.load %arg24[%c0_45, %c8_46] : memref<8x32xbf16, #tpu.memory_space<vmem>>, vector<8x8xbf16>
    %cst_47 = arith.constant dense<0.000000e+00> : vector<8x8xf32>
    %119 = tpu.matmul %114, %117, %cst_47 {dimension_numbers = #tpu.dot_dimension_numbers<[1], [1], [0], [0], [0, 0, 1, 0], [], []>} : vector<8x8xbf16>, vector<8x8xbf16>, vector<8x8xf32> -> vector<8x8xf32>
    %120 = arith.addf %119, %46 : vector<8x8xf32>
    %cst_48 = arith.constant dense<0.000000e+00> : vector<8x8xf32>
    %121 = tpu.matmul %116, %118, %cst_48 {dimension_numbers = #tpu.dot_dimension_numbers<[1], [1], [0], [0], [0, 0, 1, 0], [], []>} : vector<8x8xbf16>, vector<8x8xbf16>, vector<8x8xf32> -> vector<8x8xf32>
    %122 = arith.addf %121, %46 : vector<8x8xf32>
    %cst_49 = arith.constant dense<0xFF800000> : vector<8xf32>
    %123 = vector.multi_reduction <maximumf>, %120, %cst_49 [1] : vector<8x8xf32> to vector<8xf32>
    %124 = vector.shape_cast %123 : vector<8xf32> to vector<8x1xf32>
    %125 = vector.broadcast %124 : vector<8x1xf32> to vector<8x8xf32>
    %126 = arith.subf %120, %125 : vector<8x8xf32>
    %127 = math.exp %126 : vector<8x8xf32>
    %cst_50 = arith.constant dense<0.000000e+00> : vector<8xf32>
    %128 = vector.multi_reduction <add>, %127, %cst_50 [1] : vector<8x8xf32> to vector<8xf32>
    %129 = vector.shape_cast %128 : vector<8xf32> to vector<8x1xf32>
    %130 = tpu.reciprocal %129 {approx = true} : vector<8x1xf32> -> vector<8x1xf32>
    %131 = vector.broadcast %130 : vector<8x1xf32> to vector<8x8xf32>
    %132 = arith.mulf %127, %131 : vector<8x8xf32>
    %c1 = arith.constant 1 : index
    %133 = memref.load %arg2[%c1] : memref<4xf32, #tpu.memory_space<smem>>
    %cst_51 = arith.constant dense<0xFF800000> : vector<8xf32>
    %134 = vector.multi_reduction <maximumf>, %122, %cst_51 [1] : vector<8x8xf32> to vector<8xf32>
    %135 = vector.shape_cast %134 : vector<8xf32> to vector<8x1xf32>
    %136 = vector.broadcast %135 : vector<8x1xf32> to vector<8x8xf32>
    %137 = arith.subf %122, %136 : vector<8x8xf32>
    %138 = math.exp %137 : vector<8x8xf32>
    %cst_52 = arith.constant dense<0.000000e+00> : vector<8xf32>
    %139 = vector.multi_reduction <add>, %138, %cst_52 [1] : vector<8x8xf32> to vector<8xf32>
    %140 = vector.shape_cast %139 : vector<8xf32> to vector<8x1xf32>
    %141 = tpu.reciprocal %140 {approx = true} : vector<8x1xf32> -> vector<8x1xf32>
    %142 = vector.broadcast %141 : vector<8x1xf32> to vector<8x8xf32>
    %143 = arith.mulf %138, %142 : vector<8x8xf32>
    %144 = vector.broadcast %133 : f32 to vector<8x8xf32>
    %145 = arith.mulf %144, %143 : vector<8x8xf32>
    %146 = arith.subf %132, %145 : vector<8x8xf32>
    %147 = arith.truncf %146 : vector<8x8xf32> to vector<8x8xbf16>
    %c0_53 = arith.constant 0 : index
    %c16 = arith.constant 16 : index
    %148 = vector.load %arg25[%c0_53, %c16] : memref<8x64xbf16, #tpu.memory_space<vmem>>, vector<8x16xbf16>
    %cst_54 = arith.constant dense<0.000000e+00> : vector<8x16xf32>
    %149 = tpu.matmul %147, %148, %cst_54 {dimension_numbers = #tpu.dot_dimension_numbers<[1], [0], [0], [1], [0, 0, 1, 1], [], []>} : vector<8x8xbf16>, vector<8x16xbf16>, vector<8x16xf32> -> vector<8x16xf32>
    %cst_55 = arith.constant dense<0.000000e+00> : vector<8xf32>
    %150 = vector.multi_reduction <add>, %149, %cst_55 [1] : vector<8x16xf32> to vector<8xf32>
    %151 = vector.shape_cast %150 : vector<8xf32> to vector<8x1xf32>
    %cst_56 = arith.constant 1.600000e+01 : f32
    %152 = vector.broadcast %cst_56 : f32 to vector<8x1xf32>
    %153 = arith.divf %151, %152 : vector<8x1xf32>
    %154 = vector.broadcast %153 : vector<8x1xf32> to vector<8x16xf32>
    %155 = arith.subf %149, %154 : vector<8x16xf32>
    %156 = arith.mulf %155, %155 : vector<8x16xf32>
    %cst_57 = arith.constant dense<0.000000e+00> : vector<8xf32>
    %157 = vector.multi_reduction <add>, %156, %cst_57 [1] : vector<8x16xf32> to vector<8xf32>
    %158 = vector.shape_cast %157 : vector<8xf32> to vector<8x1xf32>
    %cst_58 = arith.constant 1.600000e+01 : f32
    %159 = vector.broadcast %cst_58 : f32 to vector<8x1xf32>
    %160 = arith.divf %158, %159 : vector<8x1xf32>
    %161 = vector.broadcast %153 : vector<8x1xf32> to vector<8x16xf32>
    %162 = arith.subf %149, %161 : vector<8x16xf32>
    %cst_59 = arith.constant 9.99999974E-6 : f32
    %163 = vector.broadcast %cst_59 : f32 to vector<8x1xf32>
    %164 = arith.addf %160, %163 : vector<8x1xf32>
    %165 = math.rsqrt %164 : vector<8x1xf32>
    %166 = vector.broadcast %165 : vector<8x1xf32> to vector<8x16xf32>
    %167 = arith.mulf %162, %166 : vector<8x16xf32>
    %168 = vector.shape_cast %48 : vector<16xf32> to vector<1x16xf32>
    %169 = vector.broadcast %168 : vector<1x16xf32> to vector<8x16xf32>
    %170 = arith.mulf %167, %169 : vector<8x16xf32>
    %171 = vector.shape_cast %50 : vector<16xf32> to vector<1x16xf32>
    %172 = vector.broadcast %171 : vector<1x16xf32> to vector<8x16xf32>
    %173 = arith.addf %170, %172 : vector<8x16xf32>
    %c0_60 = arith.constant 0 : index
    %c16_61 = arith.constant 16 : index
    %174 = vector.load %arg26[%c0_60, %c16_61] : memref<8x64xf32, #tpu.memory_space<vmem>>, vector<8x16xf32>
    tpu.vector_store %arg26[%c0_60, %c16_61], %173 {strides = array<i32>} : memref<8x64xf32, #tpu.memory_space<vmem>>, vector<8x16xf32>,
    %175 = vector.extract_strided_slice %35 {offsets = [0, 16], sizes = [8, 8], strides = [1, 1]} : vector<8x32xf32> to vector<8x8xf32>
    %176 = arith.truncf %175 : vector<8x8xf32> to vector<8x8xbf16>
    %177 = vector.extract_strided_slice %37 {offsets = [0, 16], sizes = [8, 8], strides = [1, 1]} : vector<8x32xf32> to vector<8x8xf32>
    %178 = arith.truncf %177 : vector<8x8xf32> to vector<8x8xbf16>
    %c0_62 = arith.constant 0 : index
    %c16_63 = arith.constant 16 : index
    %179 = vector.load %arg23[%c0_62, %c16_63] : memref<8x32xbf16, #tpu.memory_space<vmem>>, vector<8x8xbf16>
    %c0_64 = arith.constant 0 : index
    %c16_65 = arith.constant 16 : index
    %180 = vector.load %arg24[%c0_64, %c16_65] : memref<8x32xbf16, #tpu.memory_space<vmem>>, vector<8x8xbf16>
    %cst_66 = arith.constant dense<0.000000e+00> : vector<8x8xf32>
    %181 = tpu.matmul %176, %179, %cst_66 {dimension_numbers = #tpu.dot_dimension_numbers<[1], [1], [0], [0], [0, 0, 1, 0], [], []>} : vector<8x8xbf16>, vector<8x8xbf16>, vector<8x8xf32> -> vector<8x8xf32>
    %182 = arith.addf %181, %46 : vector<8x8xf32>
    %cst_67 = arith.constant dense<0.000000e+00> : vector<8x8xf32>
    %183 = tpu.matmul %178, %180, %cst_67 {dimension_numbers = #tpu.dot_dimension_numbers<[1], [1], [0], [0], [0, 0, 1, 0], [], []>} : vector<8x8xbf16>, vector<8x8xbf16>, vector<8x8xf32> -> vector<8x8xf32>
    %184 = arith.addf %183, %46 : vector<8x8xf32>
    %cst_68 = arith.constant dense<0xFF800000> : vector<8xf32>
    %185 = vector.multi_reduction <maximumf>, %182, %cst_68 [1] : vector<8x8xf32> to vector<8xf32>
    %186 = vector.shape_cast %185 : vector<8xf32> to vector<8x1xf32>
    %187 = vector.broadcast %186 : vector<8x1xf32> to vector<8x8xf32>
    %188 = arith.subf %182, %187 : vector<8x8xf32>
    %189 = math.exp %188 : vector<8x8xf32>
    %cst_69 = arith.constant dense<0.000000e+00> : vector<8xf32>
    %190 = vector.multi_reduction <add>, %189, %cst_69 [1] : vector<8x8xf32> to vector<8xf32>
    %191 = vector.shape_cast %190 : vector<8xf32> to vector<8x1xf32>
    %192 = tpu.reciprocal %191 {approx = true} : vector<8x1xf32> -> vector<8x1xf32>
    %193 = vector.broadcast %192 : vector<8x1xf32> to vector<8x8xf32>
    %194 = arith.mulf %189, %193 : vector<8x8xf32>
    %c2 = arith.constant 2 : index
    %195 = memref.load %arg2[%c2] : memref<4xf32, #tpu.memory_space<smem>>
    %cst_70 = arith.constant dense<0xFF800000> : vector<8xf32>
    %196 = vector.multi_reduction <maximumf>, %184, %cst_70 [1] : vector<8x8xf32> to vector<8xf32>
    %197 = vector.shape_cast %196 : vector<8xf32> to vector<8x1xf32>
    %198 = vector.broadcast %197 : vector<8x1xf32> to vector<8x8xf32>
    %199 = arith.subf %184, %198 : vector<8x8xf32>
    %200 = math.exp %199 : vector<8x8xf32>
    %cst_71 = arith.constant dense<0.000000e+00> : vector<8xf32>
    %201 = vector.multi_reduction <add>, %200, %cst_71 [1] : vector<8x8xf32> to vector<8xf32>
    %202 = vector.shape_cast %201 : vector<8xf32> to vector<8x1xf32>
    %203 = tpu.reciprocal %202 {approx = true} : vector<8x1xf32> -> vector<8x1xf32>
    %204 = vector.broadcast %203 : vector<8x1xf32> to vector<8x8xf32>
    %205 = arith.mulf %200, %204 : vector<8x8xf32>
    %206 = vector.broadcast %195 : f32 to vector<8x8xf32>
    %207 = arith.mulf %206, %205 : vector<8x8xf32>
    %208 = arith.subf %194, %207 : vector<8x8xf32>
    %209 = arith.truncf %208 : vector<8x8xf32> to vector<8x8xbf16>
    %c0_72 = arith.constant 0 : index
    %c32 = arith.constant 32 : index
    %210 = vector.load %arg25[%c0_72, %c32] : memref<8x64xbf16, #tpu.memory_space<vmem>>, vector<8x16xbf16>
    %cst_73 = arith.constant dense<0.000000e+00> : vector<8x16xf32>
    %211 = tpu.matmul %209, %210, %cst_73 {dimension_numbers = #tpu.dot_dimension_numbers<[1], [0], [0], [1], [0, 0, 1, 1], [], []>} : vector<8x8xbf16>, vector<8x16xbf16>, vector<8x16xf32> -> vector<8x16xf32>
    %cst_74 = arith.constant dense<0.000000e+00> : vector<8xf32>
    %212 = vector.multi_reduction <add>, %211, %cst_74 [1] : vector<8x16xf32> to vector<8xf32>
    %213 = vector.shape_cast %212 : vector<8xf32> to vector<8x1xf32>
    %cst_75 = arith.constant 1.600000e+01 : f32
    %214 = vector.broadcast %cst_75 : f32 to vector<8x1xf32>
    %215 = arith.divf %213, %214 : vector<8x1xf32>
    %216 = vector.broadcast %215 : vector<8x1xf32> to vector<8x16xf32>
    %217 = arith.subf %211, %216 : vector<8x16xf32>
    %218 = arith.mulf %217, %217 : vector<8x16xf32>
    %cst_76 = arith.constant dense<0.000000e+00> : vector<8xf32>
    %219 = vector.multi_reduction <add>, %218, %cst_76 [1] : vector<8x16xf32> to vector<8xf32>
    %220 = vector.shape_cast %219 : vector<8xf32> to vector<8x1xf32>
    %cst_77 = arith.constant 1.600000e+01 : f32
    %221 = vector.broadcast %cst_77 : f32 to vector<8x1xf32>
    %222 = arith.divf %220, %221 : vector<8x1xf32>
    %223 = vector.broadcast %215 : vector<8x1xf32> to vector<8x16xf32>
    %224 = arith.subf %211, %223 : vector<8x16xf32>
    %cst_78 = arith.constant 9.99999974E-6 : f32
    %225 = vector.broadcast %cst_78 : f32 to vector<8x1xf32>
    %226 = arith.addf %222, %225 : vector<8x1xf32>
    %227 = math.rsqrt %226 : vector<8x1xf32>
    %228 = vector.broadcast %227 : vector<8x1xf32> to vector<8x16xf32>
    %229 = arith.mulf %224, %228 : vector<8x16xf32>
    %230 = vector.shape_cast %48 : vector<16xf32> to vector<1x16xf32>
    %231 = vector.broadcast %230 : vector<1x16xf32> to vector<8x16xf32>
    %232 = arith.mulf %229, %231 : vector<8x16xf32>
    %233 = vector.shape_cast %50 : vector<16xf32> to vector<1x16xf32>
    %234 = vector.broadcast %233 : vector<1x16xf32> to vector<8x16xf32>
    %235 = arith.addf %232, %234 : vector<8x16xf32>
    %c0_79 = arith.constant 0 : index
    %c32_80 = arith.constant 32 : index
    %236 = vector.load %arg26[%c0_79, %c32_80] : memref<8x64xf32, #tpu.memory_space<vmem>>, vector<8x16xf32>
    tpu.vector_store %arg26[%c0_79, %c32_80], %235 {strides = array<i32>} : memref<8x64xf32, #tpu.memory_space<vmem>>, vector<8x16xf32>,
    %237 = vector.extract_strided_slice %35 {offsets = [0, 24], sizes = [8, 8], strides = [1, 1]} : vector<8x32xf32> to vector<8x8xf32>
    %238 = arith.truncf %237 : vector<8x8xf32> to vector<8x8xbf16>
    %239 = vector.extract_strided_slice %37 {offsets = [0, 24], sizes = [8, 8], strides = [1, 1]} : vector<8x32xf32> to vector<8x8xf32>
    %240 = arith.truncf %239 : vector<8x8xf32> to vector<8x8xbf16>
    %c0_81 = arith.constant 0 : index
    %c24 = arith.constant 24 : index
    %241 = vector.load %arg23[%c0_81, %c24] : memref<8x32xbf16, #tpu.memory_space<vmem>>, vector<8x8xbf16>
    %c0_82 = arith.constant 0 : index
    %c24_83 = arith.constant 24 : index
    %242 = vector.load %arg24[%c0_82, %c24_83] : memref<8x32xbf16, #tpu.memory_space<vmem>>, vector<8x8xbf16>
    %cst_84 = arith.constant dense<0.000000e+00> : vector<8x8xf32>
    %243 = tpu.matmul %238, %241, %cst_84 {dimension_numbers = #tpu.dot_dimension_numbers<[1], [1], [0], [0], [0, 0, 1, 0], [], []>} : vector<8x8xbf16>, vector<8x8xbf16>, vector<8x8xf32> -> vector<8x8xf32>
    %244 = arith.addf %243, %46 : vector<8x8xf32>
    %cst_85 = arith.constant dense<0.000000e+00> : vector<8x8xf32>
    %245 = tpu.matmul %240, %242, %cst_85 {dimension_numbers = #tpu.dot_dimension_numbers<[1], [1], [0], [0], [0, 0, 1, 0], [], []>} : vector<8x8xbf16>, vector<8x8xbf16>, vector<8x8xf32> -> vector<8x8xf32>
    %246 = arith.addf %245, %46 : vector<8x8xf32>
    %cst_86 = arith.constant dense<0xFF800000> : vector<8xf32>
    %247 = vector.multi_reduction <maximumf>, %244, %cst_86 [1] : vector<8x8xf32> to vector<8xf32>
    %248 = vector.shape_cast %247 : vector<8xf32> to vector<8x1xf32>
    %249 = vector.broadcast %248 : vector<8x1xf32> to vector<8x8xf32>
    %250 = arith.subf %244, %249 : vector<8x8xf32>
    %251 = math.exp %250 : vector<8x8xf32>
    %cst_87 = arith.constant dense<0.000000e+00> : vector<8xf32>
    %252 = vector.multi_reduction <add>, %251, %cst_87 [1] : vector<8x8xf32> to vector<8xf32>
    %253 = vector.shape_cast %252 : vector<8xf32> to vector<8x1xf32>
    %254 = tpu.reciprocal %253 {approx = true} : vector<8x1xf32> -> vector<8x1xf32>
    %255 = vector.broadcast %254 : vector<8x1xf32> to vector<8x8xf32>
    %256 = arith.mulf %251, %255 : vector<8x8xf32>
    %c3 = arith.constant 3 : index
    %257 = memref.load %arg2[%c3] : memref<4xf32, #tpu.memory_space<smem>>
    %cst_88 = arith.constant dense<0xFF800000> : vector<8xf32>
    %258 = vector.multi_reduction <maximumf>, %246, %cst_88 [1] : vector<8x8xf32> to vector<8xf32>
    %259 = vector.shape_cast %258 : vector<8xf32> to vector<8x1xf32>
    %260 = vector.broadcast %259 : vector<8x1xf32> to vector<8x8xf32>
    %261 = arith.subf %246, %260 : vector<8x8xf32>
    %262 = math.exp %261 : vector<8x8xf32>
    %cst_89 = arith.constant dense<0.000000e+00> : vector<8xf32>
    %263 = vector.multi_reduction <add>, %262, %cst_89 [1] : vector<8x8xf32> to vector<8xf32>
    %264 = vector.shape_cast %263 : vector<8xf32> to vector<8x1xf32>
    %265 = tpu.reciprocal %264 {approx = true} : vector<8x1xf32> -> vector<8x1xf32>
    %266 = vector.broadcast %265 : vector<8x1xf32> to vector<8x8xf32>
    %267 = arith.mulf %262, %266 : vector<8x8xf32>
    %268 = vector.broadcast %257 : f32 to vector<8x8xf32>
    %269 = arith.mulf %268, %267 : vector<8x8xf32>
    %270 = arith.subf %256, %269 : vector<8x8xf32>
    %271 = arith.truncf %270 : vector<8x8xf32> to vector<8x8xbf16>
    %c0_90 = arith.constant 0 : index
    %c48 = arith.constant 48 : index
    %272 = vector.load %arg25[%c0_90, %c48] : memref<8x64xbf16, #tpu.memory_space<vmem>>, vector<8x16xbf16>
    %cst_91 = arith.constant dense<0.000000e+00> : vector<8x16xf32>
    %273 = tpu.matmul %271, %272, %cst_91 {dimension_numbers = #tpu.dot_dimension_numbers<[1], [0], [0], [1], [0, 0, 1, 1], [], []>} : vector<8x8xbf16>, vector<8x16xbf16>, vector<8x16xf32> -> vector<8x16xf32>
    %cst_92 = arith.constant dense<0.000000e+00> : vector<8xf32>
    %274 = vector.multi_reduction <add>, %273, %cst_92 [1] : vector<8x16xf32> to vector<8xf32>
    %275 = vector.shape_cast %274 : vector<8xf32> to vector<8x1xf32>
    %cst_93 = arith.constant 1.600000e+01 : f32
    %276 = vector.broadcast %cst_93 : f32 to vector<8x1xf32>
    %277 = arith.divf %275, %276 : vector<8x1xf32>
    %278 = vector.broadcast %277 : vector<8x1xf32> to vector<8x16xf32>
    %279 = arith.subf %273, %278 : vector<8x16xf32>
    %280 = arith.mulf %279, %279 : vector<8x16xf32>
    %cst_94 = arith.constant dense<0.000000e+00> : vector<8xf32>
    %281 = vector.multi_reduction <add>, %280, %cst_94 [1] : vector<8x16xf32> to vector<8xf32>
    %282 = vector.shape_cast %281 : vector<8xf32> to vector<8x1xf32>
    %cst_95 = arith.constant 1.600000e+01 : f32
    %283 = vector.broadcast %cst_95 : f32 to vector<8x1xf32>
    %284 = arith.divf %282, %283 : vector<8x1xf32>
    %285 = vector.broadcast %277 : vector<8x1xf32> to vector<8x16xf32>
    %286 = arith.subf %273, %285 : vector<8x16xf32>
    %cst_96 = arith.constant 9.99999974E-6 : f32
    %287 = vector.broadcast %cst_96 : f32 to vector<8x1xf32>
    %288 = arith.addf %284, %287 : vector<8x1xf32>
    %289 = math.rsqrt %288 : vector<8x1xf32>
    %290 = vector.broadcast %289 : vector<8x1xf32> to vector<8x16xf32>
    %291 = arith.mulf %286, %290 : vector<8x16xf32>
    %292 = vector.shape_cast %48 : vector<16xf32> to vector<1x16xf32>
    %293 = vector.broadcast %292 : vector<1x16xf32> to vector<8x16xf32>
    %294 = arith.mulf %291, %293 : vector<8x16xf32>
    %295 = vector.shape_cast %50 : vector<16xf32> to vector<1x16xf32>
    %296 = vector.broadcast %295 : vector<1x16xf32> to vector<8x16xf32>
    %297 = arith.addf %294, %296 : vector<8x16xf32>
    %c0_97 = arith.constant 0 : index
    %c48_98 = arith.constant 48 : index
    %298 = vector.load %arg26[%c0_97, %c48_98] : memref<8x64xf32, #tpu.memory_space<vmem>>, vector<8x16xf32>
    tpu.vector_store %arg26[%c0_97, %c48_98], %297 {strides = array<i32>} : memref<8x64xf32, #tpu.memory_space<vmem>>, vector<8x16xf32>,
    %c0_99 = arith.constant 0 : index
    %c0_100 = arith.constant 0 : index
    %299 = vector.load %arg26[%c0_99, %c0_100] : memref<8x64xf32, #tpu.memory_space<vmem>>, vector<8x64xf32>
    %300 = arith.truncf %299 : vector<8x64xf32> to vector<8x64xbf16>
    %c0_101 = arith.constant 0 : index
    %c0_102 = arith.constant 0 : index
    %301 = vector.load %arg14[%c0_101, %c0_102] : memref<64x32xbf16, #tpu.memory_space<vmem>>, vector<64x32xbf16>
    %cst_103 = arith.constant dense<0.000000e+00> : vector<8x32xf32>
    %302 = tpu.matmul %300, %301, %cst_103 {dimension_numbers = #tpu.dot_dimension_numbers<[1], [0], [0], [1], [0, 0, 1, 1], [], []>} : vector<8x64xbf16>, vector<64x32xbf16>, vector<8x32xf32> -> vector<8x32xf32>
    %c0_104 = arith.constant 0 : index
    %c0_105 = arith.constant 0 : index
    %303 = vector.load %arg15[%c0_104, %c0_105] : memref<1x32xf32, #tpu.memory_space<vmem>>, vector<1x32xf32>
    %304 = vector.shape_cast %303 : vector<1x32xf32> to vector<32xf32>
    %305 = vector.shape_cast %304 : vector<32xf32> to vector<1x32xf32>
    %306 = vector.broadcast %305 : vector<1x32xf32> to vector<8x32xf32>
    %307 = arith.addf %302, %306 : vector<8x32xf32>
    %308 = arith.addf %4, %307 : vector<8x32xf32>
    %c0_106 = arith.constant 0 : index
    %c0_107 = arith.constant 0 : index
    %309 = vector.load %arg16[%c0_106, %c0_107] : memref<1x32xf32, #tpu.memory_space<vmem>>, vector<1x32xf32>
    %310 = vector.shape_cast %309 : vector<1x32xf32> to vector<32xf32>
    %c0_108 = arith.constant 0 : index
    %c0_109 = arith.constant 0 : index
    %311 = vector.load %arg17[%c0_108, %c0_109] : memref<1x32xf32, #tpu.memory_space<vmem>>, vector<1x32xf32>
    %312 = vector.shape_cast %311 : vector<1x32xf32> to vector<32xf32>
    %cst_110 = arith.constant dense<0.000000e+00> : vector<8xf32>
    %313 = vector.multi_reduction <add>, %308, %cst_110 [1] : vector<8x32xf32> to vector<8xf32>
    %314 = vector.shape_cast %313 : vector<8xf32> to vector<8x1xf32>
    %cst_111 = arith.constant 3.200000e+01 : f32
    %315 = vector.broadcast %cst_111 : f32 to vector<8x1xf32>
    %316 = arith.divf %314, %315 : vector<8x1xf32>
    %317 = vector.broadcast %316 : vector<8x1xf32> to vector<8x32xf32>
    %318 = arith.subf %308, %317 : vector<8x32xf32>
    %319 = arith.mulf %318, %318 : vector<8x32xf32>
    %cst_112 = arith.constant dense<0.000000e+00> : vector<8xf32>
    %320 = vector.multi_reduction <add>, %319, %cst_112 [1] : vector<8x32xf32> to vector<8xf32>
    %321 = vector.shape_cast %320 : vector<8xf32> to vector<8x1xf32>
    %cst_113 = arith.constant 3.200000e+01 : f32
    %322 = vector.broadcast %cst_113 : f32 to vector<8x1xf32>
    %323 = arith.divf %321, %322 : vector<8x1xf32>
    %324 = vector.broadcast %316 : vector<8x1xf32> to vector<8x32xf32>
    %325 = arith.subf %308, %324 : vector<8x32xf32>
    %cst_114 = arith.constant 9.99999974E-6 : f32
    %326 = vector.broadcast %cst_114 : f32 to vector<8x1xf32>
    %327 = arith.addf %323, %326 : vector<8x1xf32>
    %328 = math.rsqrt %327 : vector<8x1xf32>
    %329 = vector.broadcast %328 : vector<8x1xf32> to vector<8x32xf32>
    %330 = arith.mulf %325, %329 : vector<8x32xf32>
    %331 = vector.shape_cast %310 : vector<32xf32> to vector<1x32xf32>
    %332 = vector.broadcast %331 : vector<1x32xf32> to vector<8x32xf32>
    %333 = arith.mulf %330, %332 : vector<8x32xf32>
    %334 = vector.shape_cast %312 : vector<32xf32> to vector<1x32xf32>
    %335 = vector.broadcast %334 : vector<1x32xf32> to vector<8x32xf32>
    %336 = arith.addf %333, %335 : vector<8x32xf32>
    %337 = arith.truncf %336 : vector<8x32xf32> to vector<8x32xbf16>
    %c0_115 = arith.constant 0 : index
    %c0_116 = arith.constant 0 : index
    %338 = vector.load %arg18[%c0_115, %c0_116] : memref<32x128xbf16, #tpu.memory_space<vmem>>, vector<32x128xbf16>
    %cst_117 = arith.constant dense<0.000000e+00> : vector<8x128xf32>
    %339 = tpu.matmul %337, %338, %cst_117 {dimension_numbers = #tpu.dot_dimension_numbers<[1], [0], [0], [1], [0, 0, 1, 1], [], []>} : vector<8x32xbf16>, vector<32x128xbf16>, vector<8x128xf32> -> vector<8x128xf32>
    %c0_118 = arith.constant 0 : index
    %c0_119 = arith.constant 0 : index
    %340 = vector.load %arg19[%c0_118, %c0_119] : memref<1x128xf32, #tpu.memory_space<vmem>>, vector<1x128xf32>
    %341 = vector.shape_cast %340 : vector<1x128xf32> to vector<128xf32>
    %342 = vector.shape_cast %341 : vector<128xf32> to vector<1x128xf32>
    %343 = vector.broadcast %342 : vector<1x128xf32> to vector<8x128xf32>
    %344 = arith.addf %339, %343 : vector<8x128xf32>
    %cst_120 = arith.constant 0.000000e+00 : f32
    %345 = vector.broadcast %cst_120 : f32 to vector<8x128xf32>
    %346 = arith.maximumf %344, %345 : vector<8x128xf32>
    %347 = arith.truncf %346 : vector<8x128xf32> to vector<8x128xbf16>
    %c0_121 = arith.constant 0 : index
    %c0_122 = arith.constant 0 : index
    %348 = vector.load %arg20[%c0_121, %c0_122] : memref<128x32xbf16, #tpu.memory_space<vmem>>, vector<128x32xbf16>
    %cst_123 = arith.constant dense<0.000000e+00> : vector<8x32xf32>
    %349 = tpu.matmul %347, %348, %cst_123 {dimension_numbers = #tpu.dot_dimension_numbers<[1], [0], [0], [1], [0, 0, 1, 1], [], []>} : vector<8x128xbf16>, vector<128x32xbf16>, vector<8x32xf32> -> vector<8x32xf32>
    %c0_124 = arith.constant 0 : index
    %c0_125 = arith.constant 0 : index
    %350 = vector.load %arg21[%c0_124, %c0_125] : memref<1x32xf32, #tpu.memory_space<vmem>>, vector<1x32xf32>
    %351 = vector.shape_cast %350 : vector<1x32xf32> to vector<32xf32>
    %352 = vector.shape_cast %351 : vector<32xf32> to vector<1x32xf32>
    %353 = vector.broadcast %352 : vector<1x32xf32> to vector<8x32xf32>
    %354 = arith.addf %349, %353 : vector<8x32xf32>
    %355 = arith.addf %308, %354 : vector<8x32xf32>
    %c0_126 = arith.constant 0 : index
    %c0_127 = arith.constant 0 : index
    %c0_128 = arith.constant 0 : index
    %356 = vector.load %arg22[%c0_126, %c0_127, %c0_128] : memref<1x8x32xf32, #tpu.memory_space<vmem>>, vector<1x8x32xf32>
    %357 = vector.shape_cast %356 : vector<1x8x32xf32> to vector<8x32xf32>
    %358 = vector.shape_cast %355 : vector<8x32xf32> to vector<1x8x32xf32>
    tpu.vector_store %arg22[%c0_126, %c0_127, %c0_128], %358 {strides = array<i32>} : memref<1x8x32xf32, #tpu.memory_space<vmem>>, vector<1x8x32xf32>,
    return
  }
  func.func @transform_0(%arg0: i32, %arg1: i32) -> i32 {
    %c0_i32 = arith.constant 0 : i32
    %c0_i32_0 = arith.constant 0 : i32
    return %c0_i32 : i32
  }
  func.func @transform_1(%arg0: i32, %arg1: i32) -> (i32, i32, i32) {
    %c0_i32 = arith.constant 0 : i32
    %c0_i32_0 = arith.constant 0 : i32
    %c0_i32_1 = arith.constant 0 : i32
    return %arg0, %c0_i32, %c0_i32_0 : i32, i32, i32
  }
  func.func @transform_2(%arg0: i32, %arg1: i32) -> (i32, i32, i32) {
    %c0_i32 = arith.constant 0 : i32
    %c0_i32_0 = arith.constant 0 : i32
    return %arg0, %arg1, %c0_i32 : i32, i32, i32
  }
  func.func @transform_3(%arg0: i32, %arg1: i32) -> (i32, i32) {
    %c0_i32 = arith.constant 0 : i32
    %c0_i32_0 = arith.constant 0 : i32
    %c0_i32_1 = arith.constant 0 : i32
    return %c0_i32, %c0_i32_0 : i32, i32
  }
  func.func @transform_4(%arg0: i32, %arg1: i32) -> (i32, i32) {
    %c0_i32 = arith.constant 0 : i32
    %c0_i32_0 = arith.constant 0 : i32
    %c0_i32_1 = arith.constant 0 : i32
    return %c0_i32, %c0_i32_0 : i32, i32
  }
  func.func @transform_5(%arg0: i32, %arg1: i32) -> (i32, i32) {
    %c0_i32 = arith.constant 0 : i32
    %c0_i32_0 = arith.constant 0 : i32
    %c0_i32_1 = arith.constant 0 : i32
    return %c0_i32, %c0_i32_0 : i32, i32
  }
  func.func @transform_6(%arg0: i32, %arg1: i32) -> (i32, i32) {
    %c0_i32 = arith.constant 0 : i32
    %c0_i32_0 = arith.constant 0 : i32
    %c0_i32_1 = arith.constant 0 : i32
    return %c0_i32, %c0_i32_0 : i32, i32
  }
  func.func @transform_7(%arg0: i32, %arg1: i32) -> (i32, i32) {
    %c0_i32 = arith.constant 0 : i32
    %c0_i32_0 = arith.constant 0 : i32
    %c0_i32_1 = arith.constant 0 : i32
    return %c0_i32, %c0_i32_0 : i32, i32
  }
  func.func @transform_8(%arg0: i32, %arg1: i32) -> (i32, i32) {
    %c0_i32 = arith.constant 0 : i32
    %c0_i32_0 = arith.constant 0 : i32
    %c0_i32_1 = arith.constant 0 : i32
    return %c0_i32, %c0_i32_0 : i32, i32
  }
  func.func @transform_9(%arg0: i32, %arg1: i32) -> (i32, i32) {
    %c0_i32 = arith.constant 0 : i32
    %c0_i32_0 = arith.constant 0 : i32
    %c0_i32_1 = arith.constant 0 : i32
    return %c0_i32, %c0_i32_0 : i32, i32
  }
  func.func @transform_10(%arg0: i32, %arg1: i32) -> (i32, i32) {
    %c0_i32 = arith.constant 0 : i32
    %c0_i32_0 = arith.constant 0 : i32
    %c0_i32_1 = arith.constant 0 : i32
    return %c0_i32, %c0_i32_0 : i32, i32
  }
  func.func @transform_11(%arg0: i32, %arg1: i32) -> (i32, i32) {
    %c0_i32 = arith.constant 0 : i32
    %c0_i32_0 = arith.constant 0 : i32
    %c0_i32_1 = arith.constant 0 : i32
    return %c0_i32, %c0_i32_0 : i32, i32
  }
  func.func @transform_12(%arg0: i32, %arg1: i32) -> (i32, i32) {
    %c0_i32 = arith.constant 0 : i32
    %c0_i32_0 = arith.constant 0 : i32
    %c0_i32_1 = arith.constant 0 : i32
    return %c0_i32, %c0_i32_0 : i32, i32
  }
  func.func @transform_13(%arg0: i32, %arg1: i32) -> (i32, i32) {
    %c0_i32 = arith.constant 0 : i32
    %c0_i32_0 = arith.constant 0 : i32
    %c0_i32_1 = arith.constant 0 : i32
    return %c0_i32, %c0_i32_0 : i32, i32
  }
  func.func @transform_14(%arg0: i32, %arg1: i32) -> (i32, i32) {
    %c0_i32 = arith.constant 0 : i32
    %c0_i32_0 = arith.constant 0 : i32
    %c0_i32_1 = arith.constant 0 : i32
    return %c0_i32, %c0_i32_0 : i32, i32
  }
  func.func @transform_15(%arg0: i32, %arg1: i32) -> (i32, i32) {
    %c0_i32 = arith.constant 0 : i32
    %c0_i32_0 = arith.constant 0 : i32
    %c0_i32_1 = arith.constant 0 : i32
    return %c0_i32, %c0_i32_0 : i32, i32
  }
  func.func @transform_16(%arg0: i32, %arg1: i32) -> (i32, i32) {
    %c0_i32 = arith.constant 0 : i32
    %c0_i32_0 = arith.constant 0 : i32
    %c0_i32_1 = arith.constant 0 : i32
    return %c0_i32, %c0_i32_0 : i32, i32
  }
  func.func @transform_17(%arg0: i32, %arg1: i32) -> (i32, i32) {
    %c0_i32 = arith.constant 0 : i32
    %c0_i32_0 = arith.constant 0 : i32
    %c0_i32_1 = arith.constant 0 : i32
    return %c0_i32, %c0_i32_0 : i32, i32
  }
  func.func @transform_18(%arg0: i32, %arg1: i32) -> (i32, i32) {
    %c0_i32 = arith.constant 0 : i32
    %c0_i32_0 = arith.constant 0 : i32
    %c0_i32_1 = arith.constant 0 : i32
    return %c0_i32, %c0_i32_0 : i32, i32
  }
  func.func @transform_19(%arg0: i32, %arg1: i32) -> (i32, i32) {
    %c0_i32 = arith.constant 0 : i32
    %c0_i32_0 = arith.constant 0 : i32
    %c0_i32_1 = arith.constant 0 : i32
    return %c0_i32, %c0_i32_0 : i32, i32
  }
  func.func @transform_20(%arg0: i32, %arg1: i32) -> (i32, i32, i32) {
    %c0_i32 = arith.constant 0 : i32
    %c0_i32_0 = arith.constant 0 : i32
    return %arg0, %arg1, %c0_i32 : i32, i32, i32
  }
}

</mosaic_0001>

<llo_original>
// kernel: tpu_custom_call.1
$region0: #{tpu_custom_call.1}
  #allocation0 [shape = 'u32[]', space=smem, size = 0x4, offset = 0x4, fixed_abs, tag = 'smem constant byte address 0x4 - core index']
  #allocation1 [shape = 'u32[144,128]{1,0:T(1,128)}', space=vmem, size = 0x12000, scoped, tag = 'internal scratch']
  #allocation2 [shape = 'bf16[8,32]{1,0:T(8,128)(2,1)}', space=vmem, size = 0x800, scoped, tag = 'scratch operand']
  #allocation3 [shape = 'bf16[8,32]{1,0:T(8,128)(2,1)}', space=vmem, size = 0x800, scoped, tag = 'scratch operand']
  #allocation4 [shape = 'bf16[8,64]{1,0:T(8,128)(2,1)}', space=vmem, size = 0x800, scoped, tag = 'scratch operand']
  #allocation5 [shape = 'f32[8,64]{1,0:T(8,128)}', space=vmem, size = 0x1000, scoped, tag = 'scratch operand']
  %s0 = inlined_call_operand.hbm [shape: f32[4], index: 0, kind: input, shape index: {}]
  %s1 = inlined_call_operand.vmem [shape: f32[2,8,32], index: 1, kind: input, shape index: {}]
  %s2 = inlined_call_operand.vmem [shape: f32[2,8,32], index: 2, kind: input, shape index: {}]
  %s3 = inlined_call_operand.vmem [shape: f32[1,32], index: 3, kind: input, shape index: {}]
  %s4 = inlined_call_operand.vmem [shape: f32[1,32], index: 4, kind: input, shape index: {}]
  %s5 = inlined_call_operand.vmem [shape: bf16[32,32], index: 5, kind: input, shape index: {}]
  %s6 = inlined_call_operand.vmem [shape: bf16[32,32], index: 6, kind: input, shape index: {}]
  %s7 = inlined_call_operand.vmem [shape: bf16[32,32], index: 7, kind: input, shape index: {}]
  %s8 = inlined_call_operand.vmem [shape: bf16[32,32], index: 8, kind: input, shape index: {}]
  %s9 = inlined_call_operand.vmem [shape: bf16[32,64], index: 9, kind: input, shape index: {}]
  %s10 = inlined_call_operand.vmem [shape: f32[1,16], index: 10, kind: input, shape index: {}]
  %s11 = inlined_call_operand.vmem [shape: f32[1,16], index: 11, kind: input, shape index: {}]
  %s12 = inlined_call_operand.vmem [shape: bf16[64,32], index: 12, kind: input, shape index: {}]
  %s13 = inlined_call_operand.vmem [shape: f32[1,32], index: 13, kind: input, shape index: {}]
  %s14 = inlined_call_operand.vmem [shape: f32[1,32], index: 14, kind: input, shape index: {}]
  %s15 = inlined_call_operand.vmem [shape: f32[1,32], index: 15, kind: input, shape index: {}]
  %s16 = inlined_call_operand.vmem [shape: bf16[32,128], index: 16, kind: input, shape index: {}]
  %s17 = inlined_call_operand.vmem [shape: f32[1,128], index: 17, kind: input, shape index: {}]
  %s18 = inlined_call_operand.vmem [shape: bf16[128,32], index: 18, kind: input, shape index: {}]
  %s19 = inlined_call_operand.vmem [shape: f32[1,32], index: 19, kind: input, shape index: {}]
  %s20 = inlined_call_operand.hbm [shape: f32[2,8,32], index: 20, kind: output, shape index: {}]
  %s21 = sld [smem:[#allocation0]]
  $region121: #{tpu_custom_call.1} parent=0
    _
  %s23 = ssub.s32 1, %s21
  %s24 = scalar_select 0, %s23, %s21
  $region1: #{tpu_custom_call.1} parent=0
    #allocation6 [shape = 'u8[512]{0}', space=smem, size = 0x200, scoped, tag = 'input window, operand 0, single buffered']
    #allocation7 [shape = 's32[2]{0}', space=sflag, size = 0x8, scoped, tag = 'scoped memory for tpu_custom_call.1']
    #allocation8 [shape = 's32[2]{0}', space=sflag, size = 0x8, scoped, tag = 'scoped memory for tpu_custom_call.1']
    #allocation9 [shape = 'u8[8192]{0}', space=vmem, size = 0x2000, scoped, tag = 'output window, operand 0']
    %25 = vsyncpa [#allocation8], 0
    %26 = vsyncpa [#allocation7], 0
    %s27 = scalar_lea.sflag [#allocation7], 1
    %28 = vsyncpa %s27, 0
    loop: start=0, step=1, limit=4
    $region2: #{tpu_custom_call.1} parent=1 // loop_pre_header
      _
    $region3: #{tpu_custom_call.1} parent=1 // loop_header
      %s30 = sphi 0, %s34
      %p31 = scmp.ge.s32.totalorder %s30, 4
      %s37 = sphi 0, %s49
      %s38 = sphi 0, %s45
      %s39 = sphi 0, %s37
      %s40 = sphi 0, %s38
      %s41 = sphi 0, %s39
      %s42 = sphi 0, %s40
      %s50 = sphi 0, %s50
      %s52 = sphi 0, %s50
      %s53 = sphi 0, %s52
      %s67 = sphi 0, %s53
      %s73 = sphi 0, %s75
      %s76 = sphi 0, %s73
      %s77 = sphi 0, %s76
      %s93 = sphi 0, %s77
      %s101 = sphi 0, %s103
      %s104 = sphi 0, %s101
      %s105 = sphi 0, %s104
      %s121 = sphi 0, %s105
      %s125 = sphi 0, %s125
      %s127 = sphi 0, %s125
      %s128 = sphi 0, %s127
      %s142 = sphi 0, %s128
      %s146 = sphi 0, %s146
      %s148 = sphi 0, %s146
      %s149 = sphi 0, %s148
      %s163 = sphi 0, %s149
      %s167 = sphi 0, %s167
      %s169 = sphi 0, %s167
      %s170 = sphi 0, %s169
      %s184 = sphi 0, %s170
      %s188 = sphi 0, %s188
      %s190 = sphi 0, %s188
      %s191 = sphi 0, %s190
      %s205 = sphi 0, %s191
      %s209 = sphi 0, %s209
      %s211 = sphi 0, %s209
      %s212 = sphi 0, %s211
      %s226 = sphi 0, %s212
      %s230 = sphi 0, %s230
      %s232 = sphi 0, %s230
      %s233 = sphi 0, %s232
      %s247 = sphi 0, %s233
      %s251 = sphi 0, %s251
      %s253 = sphi 0, %s251
      %s254 = sphi 0, %s253
      %s268 = sphi 0, %s254
      %s272 = sphi 0, %s272
      %s274 = sphi 0, %s272
      %s275 = sphi 0, %s274
      %s289 = sphi 0, %s275
      %s293 = sphi 0, %s293
      %s295 = sphi 0, %s293
      %s296 = sphi 0, %s295
      %s310 = sphi 0, %s296
      %s314 = sphi 0, %s314
      %s316 = sphi 0, %s314
      %s317 = sphi 0, %s316
      %s331 = sphi 0, %s317
      %s335 = sphi 0, %s335
      %s337 = sphi 0, %s335
      %s338 = sphi 0, %s337
      %s352 = sphi 0, %s338
      %s356 = sphi 0, %s356
      %s358 = sphi 0, %s356
      %s359 = sphi 0, %s358
      %s373 = sphi 0, %s359
      %s377 = sphi 0, %s377
      %s379 = sphi 0, %s377
      %s380 = sphi 0, %s379
      %s394 = sphi 0, %s380
      %s398 = sphi 0, %s398
      %s400 = sphi 0, %s398
      %s401 = sphi 0, %s400
      %s415 = sphi 0, %s401
      %s419 = sphi 0, %s419
      %s421 = sphi 0, %s419
      %s422 = sphi 0, %s421
      %s436 = sphi 0, %s422
      %s440 = sphi 0, %s440
      %s442 = sphi 0, %s440
      %s443 = sphi 0, %s442
      %s457 = sphi 0, %s443
      %s461 = sphi 0, %s461
      %s463 = sphi 0, %s461
      %s464 = sphi 0, %s463
      %s478 = sphi 0, %s464
      %s486 = sphi 0, %s488
      %s489 = sphi 0, %s486
      %s490 = sphi 0, %s489
      %s506 = sphi 0, %s490
    $region4: #{tpu_custom_call.1} parent=1 // loop_header_branch
      %33 = sbr.rel (%p31) target = $region8
    $region5: #{tpu_custom_call.1} parent=1 // loop_body
      %s35 = ssub.s32 %s30, 1
      %s36 = ssub.s32 %s30, 2
      %s43 = sadd.s32 1, %s38
      %p44 = scmp.ge.s32.totalorder %s43, 1
      %s45 = scalar_select %p44, 0, %s43
      %s46 = sadd.s32 1, %s37
      %s47 = scalar_select %p44, %s46, %s37
      %p48 = scmp.ge.s32.totalorder %s47, 2
      %s49 = scalar_select %p48, 0, %s47
      %s51 = sadd.s32 %s50, 1
      %p54 = scmp.eq.s32.totalorder %s30, 1
      %p55 = scmp.ne.s32.totalorder %s50, %s52
      %p56 = scmp.eq.s32.totalorder %s30, 0
      %p57 = por %p55, %p56
      %p58 = scmp.ne.s32.totalorder %s50, %s52
      %p59 = scmp.eq.s32.totalorder %s35, 1
      %p60 = por %p58, %p59
      %p61 = scmp.ne.s32.totalorder %s52, %s53
      %p62 = scmp.eq.s32.totalorder %s35, 0
      %p63 = por %p61, %p62
      %p64 = scmp.ne.s32.totalorder %s52, %s53
      %p65 = scmp.eq.s32.totalorder %s36, 1
      %p66 = por %p64, %p65
      %p68 = scmp.ne.s32.totalorder %s53, %s67
      %p69 = scmp.eq.s32.totalorder %s36, 0
      %p70 = por %p68, %p69
      %s71 = ssub.s32 %s37, %s49
      %p72 = scmp.eq.s32.totalorder %s71, 0
      %s74 = sadd.s32 %s73, 1
      %s75 = scalar_select %p72, %s73, %s74
      %p78 = pneg %p72
      %p79 = scmp.eq.s32.totalorder %s30, 1
      %p80 = por %p78, %p79
      %p81 = scmp.ne.s32.totalorder %s73, %s76
      %p82 = scmp.eq.s32.totalorder %s30, 0
      %p83 = por %p81, %p82
      %p84 = scmp.ne.s32.totalorder %s73, %s76
      %p85 = scmp.eq.s32.totalorder %s35, 1
      %p86 = por %p84, %p85
      %p87 = scmp.ne.s32.totalorder %s76, %s77
      %p88 = scmp.eq.s32.totalorder %s35, 0
      %p89 = por %p87, %p88
      %p90 = scmp.ne.s32.totalorder %s76, %s77
      %p91 = scmp.eq.s32.totalorder %s36, 1
      %p92 = por %p90, %p91
      %p94 = scmp.ne.s32.totalorder %s77, %s93
      %p95 = scmp.eq.s32.totalorder %s36, 0
      %p96 = por %p94, %p95
      %s97 = ssub.s32 %s37, %s49
      %s98 = ssub.s32 %s38, %s45
      %s99 = sor.u32 %s97, %s98
      %p100 = scmp.eq.s32.totalorder %s99, 0
      %s102 = sadd.s32 %s101, 1
      %s103 = scalar_select %p100, %s101, %s102
      %p106 = pneg %p100
      %p107 = scmp.eq.s32.totalorder %s30, 1
      %p108 = por %p106, %p107
      %p109 = scmp.ne.s32.totalorder %s101, %s104
      %p110 = scmp.eq.s32.totalorder %s30, 0
      %p111 = por %p109, %p110
      %p112 = scmp.ne.s32.totalorder %s101, %s104
      %p113 = scmp.eq.s32.totalorder %s35, 1
      %p114 = por %p112, %p113
      %p115 = scmp.ne.s32.totalorder %s104, %s105
      %p116 = scmp.eq.s32.totalorder %s35, 0
      %p117 = por %p115, %p116
      %p118 = scmp.ne.s32.totalorder %s104, %s105
      %p119 = scmp.eq.s32.totalorder %s36, 1
      %p120 = por %p118, %p119
      %p122 = scmp.ne.s32.totalorder %s105, %s121
      %p123 = scmp.eq.s32.totalorder %s36, 0
      %p124 = por %p122, %p123
      %s126 = sadd.s32 %s125, 1
      %p129 = scmp.eq.s32.totalorder %s30, 1
      %p130 = scmp.ne.s32.totalorder %s125, %s127
      %p131 = scmp.eq.s32.totalorder %s30, 0
      %p132 = por %p130, %p131
      %p133 = scmp.ne.s32.totalorder %s125, %s127
      %p134 = scmp.eq.s32.totalorder %s35, 1
      %p135 = por %p133, %p134
      %p136 = scmp.ne.s32.totalorder %s127, %s128
      %p137 = scmp.eq.s32.totalorder %s35, 0
      %p138 = por %p136, %p137
      %p139 = scmp.ne.s32.totalorder %s127, %s128
      %p140 = scmp.eq.s32.totalorder %s36, 1
      %p141 = por %p139, %p140
      %p143 = scmp.ne.s32.totalorder %s128, %s142
      %p144 = scmp.eq.s32.totalorder %s36, 0
      %p145 = por %p143, %p144
      %s147 = sadd.s32 %s146, 1
      %p150 = scmp.eq.s32.totalorder %s30, 1
      %p151 = scmp.ne.s32.totalorder %s146, %s148
      %p152 = scmp.eq.s32.totalorder %s30, 0
      %p153 = por %p151, %p152
      %p154 = scmp.ne.s32.totalorder %s146, %s148
      %p155 = scmp.eq.s32.totalorder %s35, 1
      %p156 = por %p154, %p155
      %p157 = scmp.ne.s32.totalorder %s148, %s149
      %p158 = scmp.eq.s32.totalorder %s35, 0
      %p159 = por %p157, %p158
      %p160 = scmp.ne.s32.totalorder %s148, %s149
      %p161 = scmp.eq.s32.totalorder %s36, 1
      %p162 = por %p160, %p161
      %p164 = scmp.ne.s32.totalorder %s149, %s163
      %p165 = scmp.eq.s32.totalorder %s36, 0
      %p166 = por %p164, %p165
      %s168 = sadd.s32 %s167, 1
      %p171 = scmp.eq.s32.totalorder %s30, 1
      %p172 = scmp.ne.s32.totalorder %s167, %s169
      %p173 = scmp.eq.s32.totalorder %s30, 0
      %p174 = por %p172, %p173
      %p175 = scmp.ne.s32.totalorder %s167, %s169
      %p176 = scmp.eq.s32.totalorder %s35, 1
      %p177 = por %p175, %p176
      %p178 = scmp.ne.s32.totalorder %s169, %s170
      %p179 = scmp.eq.s32.totalorder %s35, 0
      %p180 = por %p178, %p179
      %p181 = scmp.ne.s32.totalorder %s169, %s170
      %p182 = scmp.eq.s32.totalorder %s36, 1
      %p183 = por %p181, %p182
      %p185 = scmp.ne.s32.totalorder %s170, %s184
      %p186 = scmp.eq.s32.totalorder %s36, 0
      %p187 = por %p185, %p186
      %s189 = sadd.s32 %s188, 1
      %p192 = scmp.eq.s32.totalorder %s30, 1
      %p193 = scmp.ne.s32.totalorder %s188, %s190
      %p194 = scmp.eq.s32.totalorder %s30, 0
      %p195 = por %p193, %p194
      %p196 = scmp.ne.s32.totalorder %s188, %s190
      %p197 = scmp.eq.s32.totalorder %s35, 1
      %p198 = por %p196, %p197
      %p199 = scmp.ne.s32.totalorder %s190, %s191
      %p200 = scmp.eq.s32.totalorder %s35, 0
      %p201 = por %p199, %p200
      %p202 = scmp.ne.s32.totalorder %s190, %s191
      %p203 = scmp.eq.s32.totalorder %s36, 1
      %p204 = por %p202, %p203
      %p206 = scmp.ne.s32.totalorder %s191, %s205
      %p207 = scmp.eq.s32.totalorder %s36, 0
      %p208 = por %p206, %p207
      %s210 = sadd.s32 %s209, 1
      %p213 = scmp.eq.s32.totalorder %s30, 1
      %p214 = scmp.ne.s32.totalorder %s209, %s211
      %p215 = scmp.eq.s32.totalorder %s30, 0
      %p216 = por %p214, %p215
      %p217 = scmp.ne.s32.totalorder %s209, %s211
      %p218 = scmp.eq.s32.totalorder %s35, 1
      %p219 = por %p217, %p218
      %p220 = scmp.ne.s32.totalorder %s211, %s212
      %p221 = scmp.eq.s32.totalorder %s35, 0
      %p222 = por %p220, %p221
      %p223 = scmp.ne.s32.totalorder %s211, %s212
      %p224 = scmp.eq.s32.totalorder %s36, 1
      %p225 = por %p223, %p224
      %p227 = scmp.ne.s32.totalorder %s212, %s226
      %p228 = scmp.eq.s32.totalorder %s36, 0
      %p229 = por %p227, %p228
      %s231 = sadd.s32 %s230, 1
      %p234 = scmp.eq.s32.totalorder %s30, 1
      %p235 = scmp.ne.s32.totalorder %s230, %s232
      %p236 = scmp.eq.s32.totalorder %s30, 0
      %p237 = por %p235, %p236
      %p238 = scmp.ne.s32.totalorder %s230, %s232
      %p239 = scmp.eq.s32.totalorder %s35, 1
      %p240 = por %p238, %p239
      %p241 = scmp.ne.s32.totalorder %s232, %s233
      %p242 = scmp.eq.s32.totalorder %s35, 0
      %p243 = por %p241, %p242
      %p244 = scmp.ne.s32.totalorder %s232, %s233
      %p245 = scmp.eq.s32.totalorder %s36, 1
      %p246 = por %p244, %p245
      %p248 = scmp.ne.s32.totalorder %s233, %s247
      %p249 = scmp.eq.s32.totalorder %s36, 0
      %p250 = por %p248, %p249
      %s252 = sadd.s32 %s251, 1
      %p255 = scmp.eq.s32.totalorder %s30, 1
      %p256 = scmp.ne.s32.totalorder %s251, %s253
      %p257 = scmp.eq.s32.totalorder %s30, 0
      %p258 = por %p256, %p257
      %p259 = scmp.ne.s32.totalorder %s251, %s253
      %p260 = scmp.eq.s32.totalorder %s35, 1
      %p261 = por %p259, %p260
      %p262 = scmp.ne.s32.totalorder %s253, %s254
      %p263 = scmp.eq.s32.totalorder %s35, 0
      %p264 = por %p262, %p263
      %p265 = scmp.ne.s32.totalorder %s253, %s254
      %p266 = scmp.eq.s32.totalorder %s36, 1
      %p267 = por %p265, %p266
      %p269 = scmp.ne.s32.totalorder %s254, %s268
      %p270 = scmp.eq.s32.totalorder %s36, 0
      %p271 = por %p269, %p270
      %s273 = sadd.s32 %s272, 1
      %p276 = scmp.eq.s32.totalorder %s30, 1
      %p277 = scmp.ne.s32.totalorder %s272, %s274
      %p278 = scmp.eq.s32.totalorder %s30, 0
      %p279 = por %p277, %p278
      %p280 = scmp.ne.s32.totalorder %s272, %s274
      %p281 = scmp.eq.s32.totalorder %s35, 1
      %p282 = por %p280, %p281
      %p283 = scmp.ne.s32.totalorder %s274, %s275
      %p284 = scmp.eq.s32.totalorder %s35, 0
      %p285 = por %p283, %p284
      %p286 = scmp.ne.s32.totalorder %s274, %s275
      %p287 = scmp.eq.s32.totalorder %s36, 1
      %p288 = por %p286, %p287
      %p290 = scmp.ne.s32.totalorder %s275, %s289
      %p291 = scmp.eq.s32.totalorder %s36, 0
      %p292 = por %p290, %p291
      %s294 = sadd.s32 %s293, 1
      %p297 = scmp.eq.s32.totalorder %s30, 1
      %p298 = scmp.ne.s32.totalorder %s293, %s295
      %p299 = scmp.eq.s32.totalorder %s30, 0
      %p300 = por %p298, %p299
      %p301 = scmp.ne.s32.totalorder %s293, %s295
      %p302 = scmp.eq.s32.totalorder %s35, 1
      %p303 = por %p301, %p302
      %p304 = scmp.ne.s32.totalorder %s295, %s296
      %p305 = scmp.eq.s32.totalorder %s35, 0
      %p306 = por %p304, %p305
      %p307 = scmp.ne.s32.totalorder %s295, %s296
      %p308 = scmp.eq.s32.totalorder %s36, 1
      %p309 = por %p307, %p308
      %p311 = scmp.ne.s32.totalorder %s296, %s310
      %p312 = scmp.eq.s32.totalorder %s36, 0
      %p313 = por %p311, %p312
      %s315 = sadd.s32 %s314, 1
      %p318 = scmp.eq.s32.totalorder %s30, 1
      %p319 = scmp.ne.s32.totalorder %s314, %s316
      %p320 = scmp.eq.s32.totalorder %s30, 0
      %p321 = por %p319, %p320
      %p322 = scmp.ne.s32.totalorder %s314, %s316
      %p323 = scmp.eq.s32.totalorder %s35, 1
      %p324 = por %p322, %p323
      %p325 = scmp.ne.s32.totalorder %s316, %s317
      %p326 = scmp.eq.s32.totalorder %s35, 0
      %p327 = por %p325, %p326
      %p328 = scmp.ne.s32.totalorder %s316, %s317
      %p329 = scmp.eq.s32.totalorder %s36, 1
      %p330 = por %p328, %p329
      %p332 = scmp.ne.s32.totalorder %s317, %s331
      %p333 = scmp.eq.s32.totalorder %s36, 0
      %p334 = por %p332, %p333
      %s336 = sadd.s32 %s335, 1
      %p339 = scmp.eq.s32.totalorder %s30, 1
      %p340 = scmp.ne.s32.totalorder %s335, %s337
      %p341 = scmp.eq.s32.totalorder %s30, 0
      %p342 = por %p340, %p341
      %p343 = scmp.ne.s32.totalorder %s335, %s337
      %p344 = scmp.eq.s32.totalorder %s35, 1
      %p345 = por %p343, %p344
      %p346 = scmp.ne.s32.totalorder %s337, %s338
      %p347 = scmp.eq.s32.totalorder %s35, 0
      %p348 = por %p346, %p347
      %p349 = scmp.ne.s32.totalorder %s337, %s338
      %p350 = scmp.eq.s32.totalorder %s36, 1
      %p351 = por %p349, %p350
      %p353 = scmp.ne.s32.totalorder %s338, %s352
      %p354 = scmp.eq.s32.totalorder %s36, 0
      %p355 = por %p353, %p354
      %s357 = sadd.s32 %s356, 1
      %p360 = scmp.eq.s32.totalorder %s30, 1
      %p361 = scmp.ne.s32.totalorder %s356, %s358
      %p362 = scmp.eq.s32.totalorder %s30, 0
      %p363 = por %p361, %p362
      %p364 = scmp.ne.s32.totalorder %s356, %s358
      %p365 = scmp.eq.s32.totalorder %s35, 1
      %p366 = por %p364, %p365
      %p367 = scmp.ne.s32.totalorder %s358, %s359
      %p368 = scmp.eq.s32.totalorder %s35, 0
      %p369 = por %p367, %p368
      %p370 = scmp.ne.s32.totalorder %s358, %s359
      %p371 = scmp.eq.s32.totalorder %s36, 1
      %p372 = por %p370, %p371
      %p374 = scmp.ne.s32.totalorder %s359, %s373
      %p375 = scmp.eq.s32.totalorder %s36, 0
      %p376 = por %p374, %p375
      %s378 = sadd.s32 %s377, 1
      %p381 = scmp.eq.s32.totalorder %s30, 1
      %p382 = scmp.ne.s32.totalorder %s377, %s379
      %p383 = scmp.eq.s32.totalorder %s30, 0
      %p384 = por %p382, %p383
      %p385 = scmp.ne.s32.totalorder %s377, %s379
      %p386 = scmp.eq.s32.totalorder %s35, 1
      %p387 = por %p385, %p386
      %p388 = scmp.ne.s32.totalorder %s379, %s380
      %p389 = scmp.eq.s32.totalorder %s35, 0
      %p390 = por %p388, %p389
      %p391 = scmp.ne.s32.totalorder %s379, %s380
      %p392 = scmp.eq.s32.totalorder %s36, 1
      %p393 = por %p391, %p392
      %p395 = scmp.ne.s32.totalorder %s380, %s394
      %p396 = scmp.eq.s32.totalorder %s36, 0
      %p397 = por %p395, %p396
      %s399 = sadd.s32 %s398, 1
      %p402 = scmp.eq.s32.totalorder %s30, 1
      %p403 = scmp.ne.s32.totalorder %s398, %s400
      %p404 = scmp.eq.s32.totalorder %s30, 0
      %p405 = por %p403, %p404
      %p406 = scmp.ne.s32.totalorder %s398, %s400
      %p407 = scmp.eq.s32.totalorder %s35, 1
      %p408 = por %p406, %p407
      %p409 = scmp.ne.s32.totalorder %s400, %s401
      %p410 = scmp.eq.s32.totalorder %s35, 0
      %p411 = por %p409, %p410
      %p412 = scmp.ne.s32.totalorder %s400, %s401
      %p413 = scmp.eq.s32.totalorder %s36, 1
      %p414 = por %p412, %p413
      %p416 = scmp.ne.s32.totalorder %s401, %s415
      %p417 = scmp.eq.s32.totalorder %s36, 0
      %p418 = por %p416, %p417
      %s420 = sadd.s32 %s419, 1
      %p423 = scmp.eq.s32.totalorder %s30, 1
      %p424 = scmp.ne.s32.totalorder %s419, %s421
      %p425 = scmp.eq.s32.totalorder %s30, 0
      %p426 = por %p424, %p425
      %p427 = scmp.ne.s32.totalorder %s419, %s421
      %p428 = scmp.eq.s32.totalorder %s35, 1
      %p429 = por %p427, %p428
      %p430 = scmp.ne.s32.totalorder %s421, %s422
      %p431 = scmp.eq.s32.totalorder %s35, 0
      %p432 = por %p430, %p431
      %p433 = scmp.ne.s32.totalorder %s421, %s422
      %p434 = scmp.eq.s32.totalorder %s36, 1
      %p435 = por %p433, %p434
      %p437 = scmp.ne.s32.totalorder %s422, %s436
      %p438 = scmp.eq.s32.totalorder %s36, 0
      %p439 = por %p437, %p438
      %s441 = sadd.s32 %s440, 1
      %p444 = scmp.eq.s32.totalorder %s30, 1
      %p445 = scmp.ne.s32.totalorder %s440, %s442
      %p446 = scmp.eq.s32.totalorder %s30, 0
      %p447 = por %p445, %p446
      %p448 = scmp.ne.s32.totalorder %s440, %s442
      %p449 = scmp.eq.s32.totalorder %s35, 1
      %p450 = por %p448, %p449
      %p451 = scmp.ne.s32.totalorder %s442, %s443
      %p452 = scmp.eq.s32.totalorder %s35, 0
      %p453 = por %p451, %p452
      %p454 = scmp.ne.s32.totalorder %s442, %s443
      %p455 = scmp.eq.s32.totalorder %s36, 1
      %p456 = por %p454, %p455
      %p458 = scmp.ne.s32.totalorder %s443, %s457
      %p459 = scmp.eq.s32.totalorder %s36, 0
      %p460 = por %p458, %p459
      %s462 = sadd.s32 %s461, 1
      %p465 = scmp.eq.s32.totalorder %s30, 1
      %p466 = scmp.ne.s32.totalorder %s461, %s463
      %p467 = scmp.eq.s32.totalorder %s30, 0
      %p468 = por %p466, %p467
      %p469 = scmp.ne.s32.totalorder %s461, %s463
      %p470 = scmp.eq.s32.totalorder %s35, 1
      %p471 = por %p469, %p470
      %p472 = scmp.ne.s32.totalorder %s463, %s464
      %p473 = scmp.eq.s32.totalorder %s35, 0
      %p474 = por %p472, %p473
      %p475 = scmp.ne.s32.totalorder %s463, %s464
      %p476 = scmp.eq.s32.totalorder %s36, 1
      %p477 = por %p475, %p476
      %p479 = scmp.ne.s32.totalorder %s464, %s478
      %p480 = scmp.eq.s32.totalorder %s36, 0
      %p481 = por %p479, %p480
      %s482 = ssub.s32 %s37, %s49
      %s483 = ssub.s32 %s38, %s45
      %s484 = sor.u32 %s482, %s483
      %p485 = scmp.eq.s32.totalorder %s484, 0
      %s487 = sadd.s32 %s486, 1
      %s488 = scalar_select %p485, %s486, %s487
      %p491 = pneg %p485
      %p492 = scmp.eq.s32.totalorder %s30, 1
      %p493 = por %p491, %p492
      %p494 = scmp.ne.s32.totalorder %s486, %s489
      %p495 = scmp.eq.s32.totalorder %s30, 0
      %p496 = por %p494, %p495
      %p497 = scmp.ne.s32.totalorder %s486, %s489
      %p498 = scmp.eq.s32.totalorder %s35, 1
      %p499 = por %p497, %p498
      %p500 = scmp.ne.s32.totalorder %s489, %s490
      %p501 = scmp.eq.s32.totalorder %s35, 0
      %p502 = por %p500, %p501
      %p503 = scmp.ne.s32.totalorder %s489, %s490
      %p504 = scmp.eq.s32.totalorder %s36, 1
      %p505 = por %p503, %p504
      %p507 = scmp.ne.s32.totalorder %s490, %s506
      %p508 = scmp.eq.s32.totalorder %s36, 0
      %p509 = por %p507, %p508
      %p510 = scmp.le.s32.totalorder 1, %s30
      %p511 = scmp.lt.s32.totalorder %s30, 3
      %p512 = pnand %p510, %p511
      %p513 = pneg %p512
      // Predicated region
      $region9: #{tpu_custom_call.1} parent=5 // pred_check
        _
      $region10: #{tpu_custom_call.1} parent=5 // pred_check_branch
        %515 = sbr.rel (%p512) target = $region12
      $region11: #{tpu_custom_call.1} parent=5 // pred_region
        %s516 = ssub.s32 %s30, 1
        // Predicated region
        $region13: #{tpu_custom_call.1} parent=11 // pred_check
          %p517 = pneg %p63
        $region14: #{tpu_custom_call.1} parent=11 // pred_check_branch
          %519 = sbr.rel (%p517) target = $region16
        $region15: #{tpu_custom_call.1} parent=11 // pred_region
          %s521 = ssub.s32 16, 16
          %522 = vsyncadd [#allocation8], %s521
          %525 = dma.hbm_to_smem %s0, 16, [#allocation6], [#allocation8]
        $region16: #{tpu_custom_call.1} parent=11 // pred_fallthru
          _
        // Predicated region
        $region17: #{tpu_custom_call.1} parent=11 // pred_check
          %p526 = pneg %p138
        $region18: #{tpu_custom_call.1} parent=11 // pred_check_branch
          %528 = sbr.rel (%p526) target = $region20
        $region19: #{tpu_custom_call.1} parent=11 // pred_region
          _
        $region20: #{tpu_custom_call.1} parent=11 // pred_fallthru
          _
        // Predicated region
        $region21: #{tpu_custom_call.1} parent=11 // pred_check
          %p529 = pneg %p159
        $region22: #{tpu_custom_call.1} parent=11 // pred_check_branch
          %531 = sbr.rel (%p529) target = $region24
        $region23: #{tpu_custom_call.1} parent=11 // pred_region
          _
        $region24: #{tpu_custom_call.1} parent=11 // pred_fallthru
          _
        // Predicated region
        $region25: #{tpu_custom_call.1} parent=11 // pred_check
          %p532 = pneg %p180
        $region26: #{tpu_custom_call.1} parent=11 // pred_check_branch
          %534 = sbr.rel (%p532) target = $region28
        $region27: #{tpu_custom_call.1} parent=11 // pred_region
          _
        $region28: #{tpu_custom_call.1} parent=11 // pred_fallthru
          _
        // Predicated region
        $region29: #{tpu_custom_call.1} parent=11 // pred_check
          %p535 = pneg %p201
        $region30: #{tpu_custom_call.1} parent=11 // pred_check_branch
          %537 = sbr.rel (%p535) target = $region32
        $region31: #{tpu_custom_call.1} parent=11 // pred_region
          _
        $region32: #{tpu_custom_call.1} parent=11 // pred_fallthru
          _
        // Predicated region
        $region33: #{tpu_custom_call.1} parent=11 // pred_check
          %p538 = pneg %p222
        $region34: #{tpu_custom_call.1} parent=11 // pred_check_branch
          %540 = sbr.rel (%p538) target = $region36
        $region35: #{tpu_custom_call.1} parent=11 // pred_region
          _
        $region36: #{tpu_custom_call.1} parent=11 // pred_fallthru
          _
        // Predicated region
        $region37: #{tpu_custom_call.1} parent=11 // pred_check
          %p541 = pneg %p243
        $region38: #{tpu_custom_call.1} parent=11 // pred_check_branch
          %543 = sbr.rel (%p541) target = $region40
        $region39: #{tpu_custom_call.1} parent=11 // pred_region
          _
        $region40: #{tpu_custom_call.1} parent=11 // pred_fallthru
          _
        // Predicated region
        $region41: #{tpu_custom_call.1} parent=11 // pred_check
          %p544 = pneg %p264
        $region42: #{tpu_custom_call.1} parent=11 // pred_check_branch
          %546 = sbr.rel (%p544) target = $region44
        $region43: #{tpu_custom_call.1} parent=11 // pred_region
          _
        $region44: #{tpu_custom_call.1} parent=11 // pred_fallthru
          _
        // Predicated region
        $region45: #{tpu_custom_call.1} parent=11 // pred_check
          %p547 = pneg %p285
        $region46: #{tpu_custom_call.1} parent=11 // pred_check_branch
          %549 = sbr.rel (%p547) target = $region48
        $region47: #{tpu_custom_call.1} parent=11 // pred_region
          _
        $region48: #{tpu_custom_call.1} parent=11 // pred_fallthru
          _
        // Predicated region
        $region49: #{tpu_custom_call.1} parent=11 // pred_check
          %p550 = pneg %p306
        $region50: #{tpu_custom_call.1} parent=11 // pred_check_branch
          %552 = sbr.rel (%p550) target = $region52
        $region51: #{tpu_custom_call.1} parent=11 // pred_region
          _
        $region52: #{tpu_custom_call.1} parent=11 // pred_fallthru
          _
        // Predicated region
        $region53: #{tpu_custom_call.1} parent=11 // pred_check
          %p553 = pneg %p327
        $region54: #{tpu_custom_call.1} parent=11 // pred_check_branch
          %555 = sbr.rel (%p553) target = $region56
        $region55: #{tpu_custom_call.1} parent=11 // pred_region
          _
        $region56: #{tpu_custom_call.1} parent=11 // pred_fallthru
          _
        // Predicated region
        $region57: #{tpu_custom_call.1} parent=11 // pred_check
          %p556 = pneg %p348
        $region58: #{tpu_custom_call.1} parent=11 // pred_check_branch
          %558 = sbr.rel (%p556) target = $region60
        $region59: #{tpu_custom_call.1} parent=11 // pred_region
          _
        $region60: #{tpu_custom_call.1} parent=11 // pred_fallthru
          _
        // Predicated region
        $region61: #{tpu_custom_call.1} parent=11 // pred_check
          %p559 = pneg %p369
        $region62: #{tpu_custom_call.1} parent=11 // pred_check_branch
          %561 = sbr.rel (%p559) target = $region64
        $region63: #{tpu_custom_call.1} parent=11 // pred_region
          _
        $region64: #{tpu_custom_call.1} parent=11 // pred_fallthru
          _
        // Predicated region
        $region65: #{tpu_custom_call.1} parent=11 // pred_check
          %p562 = pneg %p390
        $region66: #{tpu_custom_call.1} parent=11 // pred_check_branch
          %564 = sbr.rel (%p562) target = $region68
        $region67: #{tpu_custom_call.1} parent=11 // pred_region
          _
        $region68: #{tpu_custom_call.1} parent=11 // pred_fallthru
          _
        // Predicated region
        $region69: #{tpu_custom_call.1} parent=11 // pred_check
          %p565 = pneg %p411
        $region70: #{tpu_custom_call.1} parent=11 // pred_check_branch
          %567 = sbr.rel (%p565) target = $region72
        $region71: #{tpu_custom_call.1} parent=11 // pred_region
          _
        $region72: #{tpu_custom_call.1} parent=11 // pred_fallthru
          _
        // Predicated region
        $region73: #{tpu_custom_call.1} parent=11 // pred_check
          %p568 = pneg %p432
        $region74: #{tpu_custom_call.1} parent=11 // pred_check_branch
          %570 = sbr.rel (%p568) target = $region76
        $region75: #{tpu_custom_call.1} parent=11 // pred_region
          _
        $region76: #{tpu_custom_call.1} parent=11 // pred_fallthru
          _
        // Predicated region
        $region77: #{tpu_custom_call.1} parent=11 // pred_check
          %p571 = pneg %p453
        $region78: #{tpu_custom_call.1} parent=11 // pred_check_branch
          %573 = sbr.rel (%p571) target = $region80
        $region79: #{tpu_custom_call.1} parent=11 // pred_region
          _
        $region80: #{tpu_custom_call.1} parent=11 // pred_fallthru
          _
        // Predicated region
        $region81: #{tpu_custom_call.1} parent=11 // pred_check
          %p574 = pneg %p474
        $region82: #{tpu_custom_call.1} parent=11 // pred_check_branch
          %576 = sbr.rel (%p574) target = $region84
        $region83: #{tpu_custom_call.1} parent=11 // pred_region
          _
        $region84: #{tpu_custom_call.1} parent=11 // pred_fallthru
          _
      $region12: #{tpu_custom_call.1} parent=5 // pred_fallthru
        _
      %p577 = scmp.lt.s32.totalorder %s30, 2
      // Predicated region
      $region85: #{tpu_custom_call.1} parent=5 // pred_check
        %p578 = pneg %p577
      $region86: #{tpu_custom_call.1} parent=5 // pred_check_branch
        %580 = sbr.rel (%p578) target = $region88
      $region87: #{tpu_custom_call.1} parent=5 // pred_region
        // Predicated region
        $region89: #{tpu_custom_call.1} parent=87 // pred_check
          %p581 = pneg %p83
        $region90: #{tpu_custom_call.1} parent=87 // pred_check_branch
          %583 = sbr.rel (%p581) target = $region92
        $region91: #{tpu_custom_call.1} parent=87 // pred_region
          %p584 = scmp.lt.s32.totalorder %s37, 1
          %s585 = scalar_select %p584, %s37, 1
          %s586 = smul.addr %s585, 8
          %s587 = scalar_lea.vmem %s1, %s586
        $region92: #{tpu_custom_call.1} parent=87 // pred_fallthru
          _
        // Predicated region
        $region93: #{tpu_custom_call.1} parent=87 // pred_check
          %p588 = pneg %p111
        $region94: #{tpu_custom_call.1} parent=87 // pred_check_branch
          %590 = sbr.rel (%p588) target = $region96
        $region95: #{tpu_custom_call.1} parent=87 // pred_region
          %p591 = scmp.lt.s32.totalorder %s37, 1
          %s592 = scalar_select %p591, %s37, 1
          %p593 = scmp.lt.s32.totalorder %s38, 0
          %s594 = scalar_select %p593, %s38, 0
          %s595 = sadd.s32 %s594, %s592
          %s596 = smul.addr %s595, 8
          %s597 = scalar_lea.vmem %s2, %s596
        $region96: #{tpu_custom_call.1} parent=87 // pred_fallthru
          _
      $region88: #{tpu_custom_call.1} parent=5 // pred_fallthru
        _
      %p598 = scmp.le.s32.totalorder 1, %s30
      %p599 = scmp.lt.s32.totalorder %s30, 3
      %p600 = pnand %p598, %p599
      %p601 = pneg %p600
      // Predicated region
      $region97: #{tpu_custom_call.1} parent=5 // pred_check
        _
      $region98: #{tpu_custom_call.1} parent=5 // pred_check_branch
        %603 = sbr.rel (%p600) target = $region100
      $region99: #{tpu_custom_call.1} parent=5 // pred_region
        %s604 = ssub.s32 %s30, 1
        // Predicated region
        $region101: #{tpu_custom_call.1} parent=99 // pred_check
          %p605 = pneg %p63
        $region102: #{tpu_custom_call.1} parent=99 // pred_check_branch
          %607 = sbr.rel (%p605) target = $region104
        $region103: #{tpu_custom_call.1} parent=99 // pred_region
          %608 = dma.done [#allocation8], 16
        $region104: #{tpu_custom_call.1} parent=99 // pred_fallthru
          _
        %609 = sfence
        %p610 = pneg %p63
        %p611 = pneg %p60
        %p612 = scmp.lt.s32.totalorder %s39, 1
        %s613 = scalar_select %p612, %s39, 1
        %s614 = smul.addr %s613, 8
        %s615 = scalar_lea.vmem %s1, %s614
        %p616 = pneg %p89
        %p617 = pneg %p86
        %p618 = scmp.lt.s32.totalorder %s39, 1
        %s619 = scalar_select %p618, %s39, 1
        %p620 = scmp.lt.s32.totalorder %s40, 0
        %s621 = scalar_select %p620, %s40, 0
        %s622 = sadd.s32 %s621, %s619
        %s623 = smul.addr %s622, 8
        %s624 = scalar_lea.vmem %s2, %s623
        %p625 = pneg %p117
        %p626 = pneg %p114
        %p627 = pneg %p138
        %p628 = pneg %p135
        %p629 = pneg %p159
        %p630 = pneg %p156
        %p631 = pneg %p180
        %p632 = pneg %p177
        %p633 = pneg %p201
        %p634 = pneg %p198
        %p635 = pneg %p222
        %p636 = pneg %p219
        %p637 = pneg %p243
        %p638 = pneg %p240
        %p639 = pneg %p264
        %p640 = pneg %p261
        %p641 = pneg %p285
        %p642 = pneg %p282
        %p643 = pneg %p306
        %p644 = pneg %p303
        %p645 = pneg %p327
        %p646 = pneg %p324
        %p647 = pneg %p348
        %p648 = pneg %p345
        %p649 = pneg %p369
        %p650 = pneg %p366
        %p651 = pneg %p390
        %p652 = pneg %p387
        %p653 = pneg %p411
        %p654 = pneg %p408
        %p655 = pneg %p432
        %p656 = pneg %p429
        %p657 = pneg %p453
        %p658 = pneg %p450
        %p659 = pneg %p474
        %p660 = pneg %p471
        %p661 = pneg %p502
        %p662 = pneg %p499
        %s663 = sand.u32 %s489, 1
        %s664 = scalar_lea.sflag [#allocation7], %s663
        %s665 = sand.u32 %s489, 1
        %s666 = smul.addr %s665, 8
        %s667 = scalar_lea.vmem [#allocation9], %s666
        %p668 = scmp.lt.s32.totalorder %s39, 1
        %s669 = scalar_select %p668, %s39, 1
        %s670 = smul.addr %s669, 8
        %s671 = scalar_lea.vmem %s1, %s670
        %p672 = scmp.lt.s32.totalorder %s39, 1
        %s673 = scalar_select %p672, %s39, 1
        %p674 = scmp.lt.s32.totalorder %s40, 0
        %s675 = scalar_select %p674, %s40, 0
        %s676 = sadd.s32 %s675, %s673
        %s677 = smul.addr %s676, 8
        %s678 = scalar_lea.vmem %s2, %s677
        %p680 = scmp.eq.s32.totalorder %s40, 0
        // Predicated region
        $region105: #{tpu_custom_call.1} parent=99 // pred_check
          %p681 = pneg %p680
        $region106: #{tpu_custom_call.1} parent=99 // pred_check_branch
          %683 = sbr.rel (%p681) target = $region108
        $region107: #{tpu_custom_call.1} parent=99 // pred_region
          %v684 = vld [vmem:[%s671] sm:$0xff]
          %v685 = vld [vmem:[%s3] sm:$0x1]
          %v686 = vld [vmem:[%s4] sm:$0x1]
          %vm687 = vcmask 261120
          %v688 = vsel %vm687, %v684, 0.0
          %689 = vadd.xlane.f32.xlu0 %v688
          %v690 = vpop.xlane.xlu0 %689
          %v691 = vrcp.pop 32.0
          %v692 = vmul.f32 %v690, %v691
          %v693 = vsub.f32 %v684, %v692
          %v694 = vmul.f32 %v693, %v693
          %v695 = vsel %vm687, %v694, 0.0
          %696 = vadd.xlane.f32.xlu0 %v695
          %v697 = vpop.xlane.xlu0 %696
          %v698 = vmul.f32 %v697, %v691
          %v699 = vadd.f32 %v698, 1e-05
          %v700 = vrsqrt.pop %v699
          %v701 = vmul.f32 %v693, %v700
          %v703 = vlaneseq
          %v704 = vshrl.u32 %v703, 7
          %v705 = vsub.s32 0, %v704
          %v706 = vrot.slane %v685, %v705
          %v708 = vmul.f32 %v701, %v706
          %v710 = vlaneseq
          %v711 = vshrl.u32 %v710, 7
          %v712 = vsub.s32 0, %v711
          %v713 = vrot.slane %v686, %v712
          %v715 = vadd.f32 %v708, %v713
          %v716 = vpack.c.bf16 %v715, %v715
          %v717 = vld [vmem:[%s7] sm:$0xf]
          %v718 = vld [vmem:[%s7 + $0x4] sm:$0xf]
          %v719 = vld [vmem:[%s7 + $0x8] sm:$0xf]
          %v720 = vld [vmem:[%s7 + $0xc] sm:$0xf]
          %v725 = vunpack.c.l.b16 %v717
          %v726 = vunpack.c.l.b16 %v718
          %v727 = vunpack.c.l.b16 %v719
          %v728 = vunpack.c.l.b16 %v720
          %v729 = vpack.c.b16 %v726, %v725
          %v730 = vpack.c.b16 %v728, %v727
          %v734 = vsel %vm687, %v716, 0
          %736 = vmatprep.subr.bf16.mxu0 0
          %737 = vmatpush1.bf16.msra.mxu0 %v729
          %738 = vmatprep.subr.bf16.mxu0 0
          %739 = vmatpush1.bf16.msra.mxu0 %v730
          %740 = vmatprep.subr.bf16.mxu0 0
          %741 = vmatpush1.bf16.msra.mxu0 0
          %742 = vmatprep.subr.bf16.mxu0 0
          %743 = vmatpush1.bf16.msra.mxu0 0
          %744 = vmatprep.subr.bf16.mxu0 0
          %745 = vmatpush1.bf16.msra.mxu0 0
          %746 = vmatprep.subr.bf16.mxu0 0
          %747 = vmatpush1.bf16.msra.mxu0 0
          %748 = vmatprep.subr.bf16.mxu0 0
          %749 = vmatpush1.bf16.msra.mxu0 0
          %750 = vmatprep.subr.bf16.mxu0 0
          %751 = vmatpush1.bf16.msra.mxu0 0
          %752 = vmatprep.subr.bf16.mxu0 0
          %753 = vmatpush1.bf16.msra.mxu0 0
          %754 = vmatprep.subr.bf16.mxu0 0
          %755 = vmatpush1.bf16.msra.mxu0 0
          %756 = vmatprep.subr.bf16.mxu0 0
          %757 = vmatpush1.bf16.msra.mxu0 0
          %758 = vmatprep.subr.bf16.mxu0 0
          %759 = vmatpush1.bf16.msra.mxu0 0
          %760 = vmatprep.subr.bf16.mxu0 0
          %761 = vmatpush1.bf16.msra.mxu0 0
          %762 = vmatprep.subr.bf16.mxu0 0
          %763 = vmatpush1.bf16.msra.mxu0 0
          %764 = vmatprep.subr.bf16.mxu0 0
          %765 = vmatpush1.bf16.msra.mxu0 0
          %766 = vmatprep.subr.bf16.mxu0 0
          %767 = vmatpush1.bf16.msra.mxu0 0
          %768 = vmatprep.mubr.bf16.mxu0 0
          %769 = vmatmul.mubr.bf16.gmra.mrb[0].mxu0 %v734
          %v770 = vpop.f32.mrb[0].mxu0
          %v771 = vadd.f32 0.0, %v770
          %v772 = vpop.f32.mrb[0].mxu0
          %v773 = vpop.f32.mrb[0].mxu0
          %v774 = vpop.f32.mrb[0].mxu0
          %775 = vdwg.mxu0
          %v776 = vpack.c.bf16 %v771, %v771
          %vm777 = vcmask 257024
          %778 = vst.msk [vmem:[#allocation2] sm:$0xf] %vm777, %v776
          %v779 = vld [vmem:[%s8] sm:$0xf]
          %v780 = vld [vmem:[%s8 + $0x4] sm:$0xf]
          %v781 = vld [vmem:[%s8 + $0x8] sm:$0xf]
          %v782 = vld [vmem:[%s8 + $0xc] sm:$0xf]
          %v787 = vunpack.c.l.b16 %v779
          %v788 = vunpack.c.l.b16 %v780
          %v789 = vunpack.c.l.b16 %v781
          %v790 = vunpack.c.l.b16 %v782
          %v791 = vpack.c.b16 %v788, %v787
          %v792 = vpack.c.b16 %v790, %v789
          %795 = vmatprep.subr.bf16.mxu0 0
          %796 = vmatpush1.bf16.msra.mxu0 %v791
          %797 = vmatprep.subr.bf16.mxu0 0
          %798 = vmatpush1.bf16.msra.mxu0 %v792
          %799 = vmatprep.subr.bf16.mxu0 0
          %800 = vmatpush1.bf16.msra.mxu0 0
          %801 = vmatprep.subr.bf16.mxu0 0
          %802 = vmatpush1.bf16.msra.mxu0 0
          %803 = vmatprep.subr.bf16.mxu0 0
          %804 = vmatpush1.bf16.msra.mxu0 0
          %805 = vmatprep.subr.bf16.mxu0 0
          %806 = vmatpush1.bf16.msra.mxu0 0
          %807 = vmatprep.subr.bf16.mxu0 0
          %808 = vmatpush1.bf16.msra.mxu0 0
          %809 = vmatprep.subr.bf16.mxu0 0
          %810 = vmatpush1.bf16.msra.mxu0 0
          %811 = vmatprep.subr.bf16.mxu0 0
          %812 = vmatpush1.bf16.msra.mxu0 0
          %813 = vmatprep.subr.bf16.mxu0 0
          %814 = vmatpush1.bf16.msra.mxu0 0
          %815 = vmatprep.subr.bf16.mxu0 0
          %816 = vmatpush1.bf16.msra.mxu0 0
          %817 = vmatprep.subr.bf16.mxu0 0
          %818 = vmatpush1.bf16.msra.mxu0 0
          %819 = vmatprep.subr.bf16.mxu0 0
          %820 = vmatpush1.bf16.msra.mxu0 0
          %821 = vmatprep.subr.bf16.mxu0 0
          %822 = vmatpush1.bf16.msra.mxu0 0
          %823 = vmatprep.subr.bf16.mxu0 0
          %824 = vmatpush1.bf16.msra.mxu0 0
          %825 = vmatprep.subr.bf16.mxu0 0
          %826 = vmatpush1.bf16.msra.mxu0 0
          %827 = vmatprep.mubr.bf16.mxu0 0
          %828 = vmatmul.mubr.bf16.gmra.mrb[0].mxu0 %v734
          %v829 = vpop.f32.mrb[0].mxu0
          %v830 = vadd.f32 0.0, %v829
          %v831 = vpop.f32.mrb[0].mxu0
          %v832 = vpop.f32.mrb[0].mxu0
          %v833 = vpop.f32.mrb[0].mxu0
          %834 = vdwg.mxu0
          %v835 = vpack.c.bf16 %v830, %v830
          %836 = vst.msk [vmem:[#allocation3] sm:$0xf] %vm777, %v835
          %v837 = vld [vmem:[%s9] sm:$0xf]
          %v838 = vld [vmem:[%s9 + $0x4] sm:$0xf]
          %v839 = vld [vmem:[%s9 + $0x8] sm:$0xf]
          %v840 = vld [vmem:[%s9 + $0xc] sm:$0xf]
          %v845 = vunpack.c.l.b16 %v837
          %v846 = vunpack.c.l.b16 %v838
          %v847 = vunpack.c.l.b16 %v839
          %v848 = vunpack.c.l.b16 %v840
          %v849 = vpack.c.b16 %v846, %v845
          %v850 = vpack.c.b16 %v848, %v847
          %853 = vmatprep.subr.bf16.mxu0 0
          %854 = vmatpush1.bf16.msra.mxu0 %v849
          %855 = vmatprep.subr.bf16.mxu0 0
          %856 = vmatpush1.bf16.msra.mxu0 %v850
          %857 = vmatprep.subr.bf16.mxu0 0
          %858 = vmatpush1.bf16.msra.mxu0 0
          %859 = vmatprep.subr.bf16.mxu0 0
          %860 = vmatpush1.bf16.msra.mxu0 0
          %861 = vmatprep.subr.bf16.mxu0 0
          %862 = vmatpush1.bf16.msra.mxu0 0
          %863 = vmatprep.subr.bf16.mxu0 0
          %864 = vmatpush1.bf16.msra.mxu0 0
          %865 = vmatprep.subr.bf16.mxu0 0
          %866 = vmatpush1.bf16.msra.mxu0 0
          %867 = vmatprep.subr.bf16.mxu0 0
          %868 = vmatpush1.bf16.msra.mxu0 0
          %869 = vmatprep.subr.bf16.mxu0 0
          %870 = vmatpush1.bf16.msra.mxu0 0
          %871 = vmatprep.subr.bf16.mxu0 0
          %872 = vmatpush1.bf16.msra.mxu0 0
          %873 = vmatprep.subr.bf16.mxu0 0
          %874 = vmatpush1.bf16.msra.mxu0 0
          %875 = vmatprep.subr.bf16.mxu0 0
          %876 = vmatpush1.bf16.msra.mxu0 0
          %877 = vmatprep.subr.bf16.mxu0 0
          %878 = vmatpush1.bf16.msra.mxu0 0
          %879 = vmatprep.subr.bf16.mxu0 0
          %880 = vmatpush1.bf16.msra.mxu0 0
          %881 = vmatprep.subr.bf16.mxu0 0
          %882 = vmatpush1.bf16.msra.mxu0 0
          %883 = vmatprep.subr.bf16.mxu0 0
          %884 = vmatpush1.bf16.msra.mxu0 0
          %885 = vmatprep.mubr.bf16.mxu0 0
          %886 = vmatmul.mubr.bf16.gmra.mrb[0].mxu0 %v734
          %v887 = vpop.f32.mrb[0].mxu0
          %v888 = vadd.f32 0.0, %v887
          %v889 = vpop.f32.mrb[0].mxu0
          %v890 = vpop.f32.mrb[0].mxu0
          %v891 = vpop.f32.mrb[0].mxu0
          %892 = vdwg.mxu0
          %v893 = vpack.c.bf16 %v888, %v888
          %vm894 = vcmask 519168
          %895 = vst.msk [vmem:[#allocation4] sm:$0xf] %vm894, %v893
        $region108: #{tpu_custom_call.1} parent=99 // pred_fallthru
          _
        %v896 = vld [vmem:[%s678] sm:$0xff]
        %v897 = vld [vmem:[%s3] sm:$0x1]
        %v898 = vld [vmem:[%s4] sm:$0x1]
        %vm899 = vcmask 261120
        %v900 = vsel %vm899, %v896, 0.0
        %901 = vadd.xlane.f32.xlu0 %v900
        %v902 = vpop.xlane.xlu0 %901
        %v903 = vrcp.pop 32.0
        %v904 = vmul.f32 %v902, %v903
        %v905 = vsub.f32 %v896, %v904
        %v906 = vmul.f32 %v905, %v905
        %v907 = vsel %vm899, %v906, 0.0
        %908 = vadd.xlane.f32.xlu0 %v907
        %v909 = vpop.xlane.xlu0 %908
        %v910 = vmul.f32 %v909, %v903
        %v911 = vadd.f32 %v910, 1e-05
        %v912 = vrsqrt.pop %v911
        %v913 = vmul.f32 %v905, %v912
        %v915 = vlaneseq
        %v916 = vshrl.u32 %v915, 7
        %v917 = vsub.s32 0, %v916
        %v918 = vrot.slane %v897, %v917
        %v920 = vmul.f32 %v913, %v918
        %v922 = vlaneseq
        %v923 = vshrl.u32 %v922, 7
        %v924 = vsub.s32 0, %v923
        %v925 = vrot.slane %v898, %v924
        %v927 = vadd.f32 %v920, %v925
        %v928 = vpack.c.bf16 %v927, %v927
        %v929 = vld [vmem:[%s5] sm:$0xf]
        %v930 = vld [vmem:[%s5 + $0x4] sm:$0xf]
        %v931 = vld [vmem:[%s5 + $0x8] sm:$0xf]
        %v932 = vld [vmem:[%s5 + $0xc] sm:$0xf]
        %v937 = vunpack.c.l.b16 %v929
        %v938 = vunpack.c.l.b16 %v930
        %v939 = vunpack.c.l.b16 %v931
        %v940 = vunpack.c.l.b16 %v932
        %v941 = vpack.c.b16 %v938, %v937
        %v942 = vpack.c.b16 %v940, %v939
        %v946 = vsel %vm899, %v928, 0
        %948 = vmatprep.subr.bf16.mxu0 0
        %949 = vmatpush1.bf16.msra.mxu0 %v941
        %950 = vmatprep.subr.bf16.mxu0 0
        %951 = vmatpush1.bf16.msra.mxu0 %v942
        %952 = vmatprep.subr.bf16.mxu0 0
        %953 = vmatpush1.bf16.msra.mxu0 0
        %954 = vmatprep.subr.bf16.mxu0 0
        %955 = vmatpush1.bf16.msra.mxu0 0
        %956 = vmatprep.subr.bf16.mxu0 0
        %957 = vmatpush1.bf16.msra.mxu0 0
        %958 = vmatprep.subr.bf16.mxu0 0
        %959 = vmatpush1.bf16.msra.mxu0 0
        %960 = vmatprep.subr.bf16.mxu0 0
        %961 = vmatpush1.bf16.msra.mxu0 0
        %962 = vmatprep.subr.bf16.mxu0 0
        %963 = vmatpush1.bf16.msra.mxu0 0
        %964 = vmatprep.subr.bf16.mxu0 0
        %965 = vmatpush1.bf16.msra.mxu0 0
        %966 = vmatprep.subr.bf16.mxu0 0
        %967 = vmatpush1.bf16.msra.mxu0 0
        %968 = vmatprep.subr.bf16.mxu0 0
        %969 = vmatpush1.bf16.msra.mxu0 0
        %970 = vmatprep.subr.bf16.mxu0 0
        %971 = vmatpush1.bf16.msra.mxu0 0
        %972 = vmatprep.subr.bf16.mxu0 0
        %973 = vmatpush1.bf16.msra.mxu0 0
        %974 = vmatprep.subr.bf16.mxu0 0
        %975 = vmatpush1.bf16.msra.mxu0 0
        %976 = vmatprep.subr.bf16.mxu0 0
        %977 = vmatpush1.bf16.msra.mxu0 0
        %978 = vmatprep.subr.bf16.mxu0 0
        %979 = vmatpush1.bf16.msra.mxu0 0
        %980 = vmatprep.mubr.bf16.mxu0 0
        %981 = vmatmul.mubr.bf16.gmra.mrb[0].mxu0 %v946
        %v982 = vpop.f32.mrb[0].mxu0
        %v983 = vadd.f32 0.0, %v982
        %v984 = vpop.f32.mrb[0].mxu0
        %v985 = vpop.f32.mrb[0].mxu0
        %v986 = vpop.f32.mrb[0].mxu0
        %987 = vdwg.mxu0
        %v988 = vld [vmem:[%s6] sm:$0xf]
        %v989 = vld [vmem:[%s6 + $0x4] sm:$0xf]
        %v990 = vld [vmem:[%s6 + $0x8] sm:$0xf]
        %v991 = vld [vmem:[%s6 + $0xc] sm:$0xf]
        %v996 = vunpack.c.l.b16 %v988
        %v997 = vunpack.c.l.b16 %v989
        %v998 = vunpack.c.l.b16 %v990
        %v999 = vunpack.c.l.b16 %v991
        %v1000 = vpack.c.b16 %v997, %v996
        %v1001 = vpack.c.b16 %v999, %v998
        %1004 = vmatprep.subr.bf16.mxu0 0
        %1005 = vmatpush1.bf16.msra.mxu0 %v1000
        %1006 = vmatprep.subr.bf16.mxu0 0
        %1007 = vmatpush1.bf16.msra.mxu0 %v1001
        %1008 = vmatprep.subr.bf16.mxu0 0
        %1009 = vmatpush1.bf16.msra.mxu0 0
        %1010 = vmatprep.subr.bf16.mxu0 0
        %1011 = vmatpush1.bf16.msra.mxu0 0
        %1012 = vmatprep.subr.bf16.mxu0 0
        %1013 = vmatpush1.bf16.msra.mxu0 0
        %1014 = vmatprep.subr.bf16.mxu0 0
        %1015 = vmatpush1.bf16.msra.mxu0 0
        %1016 = vmatprep.subr.bf16.mxu0 0
        %1017 = vmatpush1.bf16.msra.mxu0 0
        %1018 = vmatprep.subr.bf16.mxu0 0
        %1019 = vmatpush1.bf16.msra.mxu0 0
        %1020 = vmatprep.subr.bf16.mxu0 0
        %1021 = vmatpush1.bf16.msra.mxu0 0
        %1022 = vmatprep.subr.bf16.mxu0 0
        %1023 = vmatpush1.bf16.msra.mxu0 0
        %1024 = vmatprep.subr.bf16.mxu0 0
        %1025 = vmatpush1.bf16.msra.mxu0 0
        %1026 = vmatprep.subr.bf16.mxu0 0
        %1027 = vmatpush1.bf16.msra.mxu0 0
        %1028 = vmatprep.subr.bf16.mxu0 0
        %1029 = vmatpush1.bf16.msra.mxu0 0
        %1030 = vmatprep.subr.bf16.mxu0 0
        %1031 = vmatpush1.bf16.msra.mxu0 0
        %1032 = vmatprep.subr.bf16.mxu0 0
        %1033 = vmatpush1.bf16.msra.mxu0 0
        %1034 = vmatprep.subr.bf16.mxu0 0
        %1035 = vmatpush1.bf16.msra.mxu0 0
        %1036 = vmatprep.mubr.bf16.mxu0 0
        %1037 = vmatmul.mubr.bf16.gmra.mrb[0].mxu0 %v946
        %v1038 = vpop.f32.mrb[0].mxu0
        %v1039 = vadd.f32 0.0, %v1038
        %v1040 = vpop.f32.mrb[0].mxu0
        %v1041 = vpop.f32.mrb[0].mxu0
        %v1042 = vpop.f32.mrb[0].mxu0
        %1043 = vdwg.mxu0
        %v1044 = vlaneseq
        %v1045 = vshrl.u32 %v1044, 7
        %s1046 = smul.u32 %s40, 8
        %v1047 = vstv %s1046
        %v1048 = vadd.s32 %v1045, %v1047
        %v1049 = vlaneseq
        %v1050 = vand.u32 %v1049, 127
        %vm1051 = vcmp.le.s32.totalorder %v1050, %v1048
        %v1052 = vsel %vm1051, 0.0, -1e+30
        %v1053 = vld [vmem:[%s10] sm:$0x1]
        %v1054 = vld [vmem:[%s11] sm:$0x1]
        %v1055 = vpack.c.bf16 %v983, %v983
        %v1056 = vpack.c.bf16 %v1039, %v1039
        %v1057 = vld [vmem:[#allocation2] sm:$0xf]
        %v1058 = vld [vmem:[#allocation3] sm:$0xf]
        %vm1059 = vcmask 64512
        %v1061 = vsel %vm1059, %v1055, 0
        %v1064 = vsel %vm1059, %v1057, 0
        %1066 = vmatprep.subr.bf16.mxu0 0
        %1067 = vmatpush1.bf16.xpose.msra.mxu0 %v1064
        %1068 = vmatprep.subr.bf16.mxu0 0
        %1069 = vmatpush1.bf16.xpose.msra.mxu0 0
        %1070 = vmatprep.subr.bf16.mxu0 0
        %1071 = vmatpush1.bf16.xpose.msra.mxu0 0
        %1072 = vmatprep.subr.bf16.mxu0 0
        %1073 = vmatpush1.bf16.xpose.msra.mxu0 0
        %1074 = vmatprep.subr.bf16.mxu0 0
        %1075 = vmatpush1.bf16.xpose.msra.mxu0 0
        %1076 = vmatprep.subr.bf16.mxu0 0
        %1077 = vmatpush1.bf16.xpose.msra.mxu0 0
        %1078 = vmatprep.subr.bf16.mxu0 0
        %1079 = vmatpush1.bf16.xpose.msra.mxu0 0
        %1080 = vmatprep.subr.bf16.mxu0 0
        %1081 = vmatpush1.bf16.xpose.msra.mxu0 0
        %1082 = vmatprep.subr.bf16.mxu0 0
        %1083 = vmatpush1.bf16.xpose.msra.mxu0 0
        %1084 = vmatprep.subr.bf16.mxu0 0
        %1085 = vmatpush1.bf16.xpose.msra.mxu0 0
        %1086 = vmatprep.subr.bf16.mxu0 0
        %1087 = vmatpush1.bf16.xpose.msra.mxu0 0
        %1088 = vmatprep.subr.bf16.mxu0 0
        %1089 = vmatpush1.bf16.xpose.msra.mxu0 0
        %1090 = vmatprep.subr.bf16.mxu0 0
        %1091 = vmatpush1.bf16.xpose.msra.mxu0 0
        %1092 = vmatprep.subr.bf16.mxu0 0
        %1093 = vmatpush1.bf16.xpose.msra.mxu0 0
        %1094 = vmatprep.subr.bf16.mxu0 0
        %1095 = vmatpush1.bf16.xpose.msra.mxu0 0
        %1096 = vmatprep.subr.bf16.mxu0 0
        %1097 = vmatpush1.bf16.xpose.msra.mxu0 0
        %1098 = vmatprep.mubr.bf16.mxu0 0
        %1099 = vmatmul.mubr.bf16.gmra.mrb[0].mxu0 %v1061
        %v1100 = vpop.f32.mrb[0].mxu0
        %v1101 = vadd.f32 %v1052, %v1100
        %v1102 = vpop.f32.mrb[0].mxu0
        %v1103 = vpop.f32.mrb[0].mxu0
        %v1104 = vpop.f32.mrb[0].mxu0
        %1105 = vdwg.mxu0
        %v1107 = vsel %vm1059, %v1056, 0
        %v1110 = vsel %vm1059, %v1058, 0
        %1112 = vmatprep.subr.bf16.mxu0 0
        %1113 = vmatpush1.bf16.xpose.msra.mxu0 %v1110
        %1114 = vmatprep.subr.bf16.mxu0 0
        %1115 = vmatpush1.bf16.xpose.msra.mxu0 0
        %1116 = vmatprep.subr.bf16.mxu0 0
        %1117 = vmatpush1.bf16.xpose.msra.mxu0 0
        %1118 = vmatprep.subr.bf16.mxu0 0
        %1119 = vmatpush1.bf16.xpose.msra.mxu0 0
        %1120 = vmatprep.subr.bf16.mxu0 0
        %1121 = vmatpush1.bf16.xpose.msra.mxu0 0
        %1122 = vmatprep.subr.bf16.mxu0 0
        %1123 = vmatpush1.bf16.xpose.msra.mxu0 0
        %1124 = vmatprep.subr.bf16.mxu0 0
        %1125 = vmatpush1.bf16.xpose.msra.mxu0 0
        %1126 = vmatprep.subr.bf16.mxu0 0
        %1127 = vmatpush1.bf16.xpose.msra.mxu0 0
        %1128 = vmatprep.subr.bf16.mxu0 0
        %1129 = vmatpush1.bf16.xpose.msra.mxu0 0
        %1130 = vmatprep.subr.bf16.mxu0 0
        %1131 = vmatpush1.bf16.xpose.msra.mxu0 0
        %1132 = vmatprep.subr.bf16.mxu0 0
        %1133 = vmatpush1.bf16.xpose.msra.mxu0 0
        %1134 = vmatprep.subr.bf16.mxu0 0
        %1135 = vmatpush1.bf16.xpose.msra.mxu0 0
        %1136 = vmatprep.subr.bf16.mxu0 0
        %1137 = vmatpush1.bf16.xpose.msra.mxu0 0
        %1138 = vmatprep.subr.bf16.mxu0 0
        %1139 = vmatpush1.bf16.xpose.msra.mxu0 0
        %1140 = vmatprep.subr.bf16.mxu0 0
        %1141 = vmatpush1.bf16.xpose.msra.mxu0 0
        %1142 = vmatprep.subr.bf16.mxu0 0
        %1143 = vmatpush1.bf16.xpose.msra.mxu0 0
        %1144 = vmatprep.mubr.bf16.mxu0 0
        %1145 = vmatmul.mubr.bf16.gmra.mrb[0].mxu0 %v1107
        %v1146 = vpop.f32.mrb[0].mxu0
        %v1147 = vadd.f32 %v1052, %v1146
        %v1148 = vpop.f32.mrb[0].mxu0
        %v1149 = vpop.f32.mrb[0].mxu0
        %v1150 = vpop.f32.mrb[0].mxu0
        %1151 = vdwg.mxu0
        %v1152 = vsel %vm1059, %v1101, -inf
        %1153 = vmax.xlane.f32.xlu0 %v1152
        %v1154 = vpop.xlane.xlu0 %1153
        %v1155 = vsub.f32 %v1101, %v1154
        %v1156 = vmul.f32 %v1155, 1.442695
        %v1157 = vpow.pop %v1156
        %v1158 = vsel %vm1059, %v1157, 0.0
        %1159 = vadd.xlane.f32.xlu0 %v1158
        %v1160 = vpop.xlane.xlu0 %1159
        %v1161 = vrcp.pop %v1160
        %v1162 = vmul.f32 %v1157, %v1161
        %s1163 = sld [smem:[#allocation6]]
        %v1164 = vsel %vm1059, %v1147, -inf
        %1165 = vmax.xlane.f32.xlu0 %v1164
        %v1166 = vpop.xlane.xlu0 %1165
        %v1167 = vsub.f32 %v1147, %v1166
        %v1168 = vmul.f32 %v1167, 1.442695
        %v1169 = vpow.pop %v1168
        %v1170 = vsel %vm1059, %v1169, 0.0
        %1171 = vadd.xlane.f32.xlu0 %v1170
        %v1172 = vpop.xlane.xlu0 %1171
        %v1173 = vrcp.pop %v1172
        %v1174 = vmul.f32 %v1169, %v1173
        %v1175 = vstv %s1163
        %v1176 = vmul.f32 %v1175, %v1174
        %v1177 = vsub.f32 %v1162, %v1176
        %v1178 = vpack.c.bf16 %v1177, %v1177
        %v1179 = vld [vmem:[#allocation4] sm:$0xf]
        %v1181 = vsel %vm1059, %v1178, 0
        %vm1183 = vcmask 1043456
        %v1185 = vsel %vm1183, %v1179, 0
        %1187 = vmatprep.subr.bf16.mxu0 0
        %1188 = vmatpush1.bf16.msra.mxu0 %v1185
        %1189 = vmatprep.subr.bf16.mxu0 0
        %1190 = vmatpush1.bf16.msra.mxu0 0
        %1191 = vmatprep.subr.bf16.mxu0 0
        %1192 = vmatpush1.bf16.msra.mxu0 0
        %1193 = vmatprep.subr.bf16.mxu0 0
        %1194 = vmatpush1.bf16.msra.mxu0 0
        %1195 = vmatprep.subr.bf16.mxu0 0
        %1196 = vmatpush1.bf16.msra.mxu0 0
        %1197 = vmatprep.subr.bf16.mxu0 0
        %1198 = vmatpush1.bf16.msra.mxu0 0
        %1199 = vmatprep.subr.bf16.mxu0 0
        %1200 = vmatpush1.bf16.msra.mxu0 0
        %1201 = vmatprep.subr.bf16.mxu0 0
        %1202 = vmatpush1.bf16.msra.mxu0 0
        %1203 = vmatprep.subr.bf16.mxu0 0
        %1204 = vmatpush1.bf16.msra.mxu0 0
        %1205 = vmatprep.subr.bf16.mxu0 0
        %1206 = vmatpush1.bf16.msra.mxu0 0
        %1207 = vmatprep.subr.bf16.mxu0 0
        %1208 = vmatpush1.bf16.msra.mxu0 0
        %1209 = vmatprep.subr.bf16.mxu0 0
        %1210 = vmatpush1.bf16.msra.mxu0 0
        %1211 = vmatprep.subr.bf16.mxu0 0
        %1212 = vmatpush1.bf16.msra.mxu0 0
        %1213 = vmatprep.subr.bf16.mxu0 0
        %1214 = vmatpush1.bf16.msra.mxu0 0
        %1215 = vmatprep.subr.bf16.mxu0 0
        %1216 = vmatpush1.bf16.msra.mxu0 0
        %1217 = vmatprep.subr.bf16.mxu0 0
        %1218 = vmatpush1.bf16.msra.mxu0 0
        %1219 = vmatprep.mubr.bf16.mxu0 0
        %1220 = vmatmul.mubr.bf16.gmra.mrb[0].mxu0 %v1181
        %v1221 = vpop.f32.mrb[0].mxu0
        %v1222 = vadd.f32 0.0, %v1221
        %v1223 = vpop.f32.mrb[0].mxu0
        %v1224 = vpop.f32.mrb[0].mxu0
        %v1225 = vpop.f32.mrb[0].mxu0
        %1226 = vdwg.mxu0
        %vm1227 = vcmask 130048
        %v1228 = vsel %vm1227, %v1222, 0.0
        %1229 = vadd.xlane.f32.xlu0 %v1228
        %v1230 = vpop.xlane.xlu0 %1229
        %v1231 = vrcp.pop 16.0
        %v1232 = vmul.f32 %v1230, %v1231
        %v1233 = vsub.f32 %v1222, %v1232
        %v1234 = vmul.f32 %v1233, %v1233
        %v1235 = vsel %vm1227, %v1234, 0.0
        %1236 = vadd.xlane.f32.xlu0 %v1235
        %v1237 = vpop.xlane.xlu0 %1236
        %v1238 = vmul.f32 %v1237, %v1231
        %v1239 = vadd.f32 %v1238, 1e-05
        %v1240 = vrsqrt.pop %v1239
        %v1241 = vmul.f32 %v1233, %v1240
        %v1243 = vlaneseq
        %v1244 = vshrl.u32 %v1243, 7
        %v1245 = vsub.s32 0, %v1244
        %v1246 = vrot.slane %v1053, %v1245
        %v1248 = vmul.f32 %v1241, %v1246
        %v1250 = vlaneseq
        %v1251 = vshrl.u32 %v1250, 7
        %v1252 = vsub.s32 0, %v1251
        %v1253 = vrot.slane %v1054, %v1252
        %v1255 = vadd.f32 %v1248, %v1253
        %1256 = vst.msk [vmem:[#allocation5] sm:$0xff] %vm1227, %v1255
        %v1257 = vld [vmem:[#allocation2] sm:$0xf]
        %v1258 = vld [vmem:[#allocation3] sm:$0xf]
        %1260 = vrot.lane.b32.xlu0 %v1055, 120
        %v1261 = vpop.permute.xlu0 %1260
        %v1263 = vunpack.c.l.b16 %v1257
        %v1264 = vpack.c.b16 %v1263, %v1263
        %1265 = vrot.lane.b32.xlu0 %v1264, 120
        %v1266 = vpop.permute.xlu0 %1265
        %v1268 = vsel %vm1059, %v1261, 0
        %v1271 = vsel %vm1059, %v1266, 0
        %1273 = vmatprep.subr.bf16.mxu0 0
        %1274 = vmatpush1.bf16.xpose.msra.mxu0 %v1271
        %1275 = vmatprep.subr.bf16.mxu0 0
        %1276 = vmatpush1.bf16.xpose.msra.mxu0 0
        %1277 = vmatprep.subr.bf16.mxu0 0
        %1278 = vmatpush1.bf16.xpose.msra.mxu0 0
        %1279 = vmatprep.subr.bf16.mxu0 0
        %1280 = vmatpush1.bf16.xpose.msra.mxu0 0
        %1281 = vmatprep.subr.bf16.mxu0 0
        %1282 = vmatpush1.bf16.xpose.msra.mxu0 0
        %1283 = vmatprep.subr.bf16.mxu0 0
        %1284 = vmatpush1.bf16.xpose.msra.mxu0 0
        %1285 = vmatprep.subr.bf16.mxu0 0
        %1286 = vmatpush1.bf16.xpose.msra.mxu0 0
        %1287 = vmatprep.subr.bf16.mxu0 0
        %1288 = vmatpush1.bf16.xpose.msra.mxu0 0
        %1289 = vmatprep.subr.bf16.mxu0 0
        %1290 = vmatpush1.bf16.xpose.msra.mxu0 0
        %1291 = vmatprep.subr.bf16.mxu0 0
        %1292 = vmatpush1.bf16.xpose.msra.mxu0 0
        %1293 = vmatprep.subr.bf16.mxu0 0
        %1294 = vmatpush1.bf16.xpose.msra.mxu0 0
        %1295 = vmatprep.subr.bf16.mxu0 0
        %1296 = vmatpush1.bf16.xpose.msra.mxu0 0
        %1297 = vmatprep.subr.bf16.mxu0 0
        %1298 = vmatpush1.bf16.xpose.msra.mxu0 0
        %1299 = vmatprep.subr.bf16.mxu0 0
        %1300 = vmatpush1.bf16.xpose.msra.mxu0 0
        %1301 = vmatprep.subr.bf16.mxu0 0
        %1302 = vmatpush1.bf16.xpose.msra.mxu0 0
        %1303 = vmatprep.subr.bf16.mxu0 0
        %1304 = vmatpush1.bf16.xpose.msra.mxu0 0
        %1305 = vmatprep.mubr.bf16.mxu0 0
        %1306 = vmatmul.mubr.bf16.gmra.mrb[0].mxu0 %v1268
        %v1307 = vpop.f32.mrb[0].mxu0
        %v1308 = vadd.f32 %v1052, %v1307
        %v1309 = vpop.f32.mrb[0].mxu0
        %v1310 = vpop.f32.mrb[0].mxu0
        %v1311 = vpop.f32.mrb[0].mxu0
        %1312 = vdwg.mxu0
        %1314 = vrot.lane.b32.xlu0 %v1056, 120
        %v1315 = vpop.permute.xlu0 %1314
        %v1317 = vunpack.c.l.b16 %v1258
        %v1318 = vpack.c.b16 %v1317, %v1317
        %1319 = vrot.lane.b32.xlu0 %v1318, 120
        %v1320 = vpop.permute.xlu0 %1319
        %v1322 = vsel %vm1059, %v1315, 0
        %v1325 = vsel %vm1059, %v1320, 0
        %1327 = vmatprep.subr.bf16.mxu0 0
        %1328 = vmatpush1.bf16.xpose.msra.mxu0 %v1325
        %1329 = vmatprep.subr.bf16.mxu0 0
        %1330 = vmatpush1.bf16.xpose.msra.mxu0 0
        %1331 = vmatprep.subr.bf16.mxu0 0
        %1332 = vmatpush1.bf16.xpose.msra.mxu0 0
        %1333 = vmatprep.subr.bf16.mxu0 0
        %1334 = vmatpush1.bf16.xpose.msra.mxu0 0
        %1335 = vmatprep.subr.bf16.mxu0 0
        %1336 = vmatpush1.bf16.xpose.msra.mxu0 0
        %1337 = vmatprep.subr.bf16.mxu0 0
        %1338 = vmatpush1.bf16.xpose.msra.mxu0 0
        %1339 = vmatprep.subr.bf16.mxu0 0
        %1340 = vmatpush1.bf16.xpose.msra.mxu0 0
        %1341 = vmatprep.subr.bf16.mxu0 0
        %1342 = vmatpush1.bf16.xpose.msra.mxu0 0
        %1343 = vmatprep.subr.bf16.mxu0 0
        %1344 = vmatpush1.bf16.xpose.msra.mxu0 0
        %1345 = vmatprep.subr.bf16.mxu0 0
        %1346 = vmatpush1.bf16.xpose.msra.mxu0 0
        %1347 = vmatprep.subr.bf16.mxu0 0
        %1348 = vmatpush1.bf16.xpose.msra.mxu0 0
        %1349 = vmatprep.subr.bf16.mxu0 0
        %1350 = vmatpush1.bf16.xpose.msra.mxu0 0
        %1351 = vmatprep.subr.bf16.mxu0 0
        %1352 = vmatpush1.bf16.xpose.msra.mxu0 0
        %1353 = vmatprep.subr.bf16.mxu0 0
        %1354 = vmatpush1.bf16.xpose.msra.mxu0 0
        %1355 = vmatprep.subr.bf16.mxu0 0
        %1356 = vmatpush1.bf16.xpose.msra.mxu0 0
        %1357 = vmatprep.subr.bf16.mxu0 0
        %1358 = vmatpush1.bf16.xpose.msra.mxu0 0
        %1359 = vmatprep.mubr.bf16.mxu0 0
        %1360 = vmatmul.mubr.bf16.gmra.mrb[0].mxu0 %v1322
        %v1361 = vpop.f32.mrb[0].mxu0
        %v1362 = vadd.f32 %v1052, %v1361
        %v1363 = vpop.f32.mrb[0].mxu0
        %v1364 = vpop.f32.mrb[0].mxu0
        %v1365 = vpop.f32.mrb[0].mxu0
        %1366 = vdwg.mxu0
        %v1367 = vsel %vm1059, %v1308, -inf
        %1368 = vmax.xlane.f32.xlu0 %v1367
        %v1369 = vpop.xlane.xlu0 %1368
        %v1370 = vsub.f32 %v1308, %v1369
        %v1371 = vmul.f32 %v1370, 1.442695
        %v1372 = vpow.pop %v1371
        %v1373 = vsel %vm1059, %v1372, 0.0
        %1374 = vadd.xlane.f32.xlu0 %v1373
        %v1375 = vpop.xlane.xlu0 %1374
        %v1376 = vrcp.pop %v1375
        %v1377 = vmul.f32 %v1372, %v1376
        %s1378 = sld [smem:[#allocation6 + $0x1]]
        %v1379 = vsel %vm1059, %v1362, -inf
        %1380 = vmax.xlane.f32.xlu0 %v1379
        %v1381 = vpop.xlane.xlu0 %1380
        %v1382 = vsub.f32 %v1362, %v1381
        %v1383 = vmul.f32 %v1382, 1.442695
        %v1384 = vpow.pop %v1383
        %v1385 = vsel %vm1059, %v1384, 0.0
        %1386 = vadd.xlane.f32.xlu0 %v1385
        %v1387 = vpop.xlane.xlu0 %1386
        %v1388 = vrcp.pop %v1387
        %v1389 = vmul.f32 %v1384, %v1388
        %v1390 = vstv %s1378
        %v1391 = vmul.f32 %v1390, %v1389
        %v1392 = vsub.f32 %v1377, %v1391
        %v1393 = vpack.c.bf16 %v1392, %v1392
        %v1394 = vld [vmem:[#allocation4] sm:$0xf]
        %v1396 = vunpack.c.l.b16 %v1394
        %v1397 = vpack.c.b16 %v1396, %v1396
        %1398 = vrot.lane.b32.xlu0 %v1397, 112
        %v1399 = vpop.permute.xlu0 %1398
        %v1401 = vsel %vm1059, %v1393, 0
        %v1404 = vsel %vm1183, %v1399, 0
        %1406 = vmatprep.subr.bf16.mxu0 0
        %1407 = vmatpush1.bf16.msra.mxu0 %v1404
        %1408 = vmatprep.subr.bf16.mxu0 0
        %1409 = vmatpush1.bf16.msra.mxu0 0
        %1410 = vmatprep.subr.bf16.mxu0 0
        %1411 = vmatpush1.bf16.msra.mxu0 0
        %1412 = vmatprep.subr.bf16.mxu0 0
        %1413 = vmatpush1.bf16.msra.mxu0 0
        %1414 = vmatprep.subr.bf16.mxu0 0
        %1415 = vmatpush1.bf16.msra.mxu0 0
        %1416 = vmatprep.subr.bf16.mxu0 0
        %1417 = vmatpush1.bf16.msra.mxu0 0
        %1418 = vmatprep.subr.bf16.mxu0 0
        %1419 = vmatpush1.bf16.msra.mxu0 0
        %1420 = vmatprep.subr.bf16.mxu0 0
        %1421 = vmatpush1.bf16.msra.mxu0 0
        %1422 = vmatprep.subr.bf16.mxu0 0
        %1423 = vmatpush1.bf16.msra.mxu0 0
        %1424 = vmatprep.subr.bf16.mxu0 0
        %1425 = vmatpush1.bf16.msra.mxu0 0
        %1426 = vmatprep.subr.bf16.mxu0 0
        %1427 = vmatpush1.bf16.msra.mxu0 0
        %1428 = vmatprep.subr.bf16.mxu0 0
        %1429 = vmatpush1.bf16.msra.mxu0 0
        %1430 = vmatprep.subr.bf16.mxu0 0
        %1431 = vmatpush1.bf16.msra.mxu0 0
        %1432 = vmatprep.subr.bf16.mxu0 0
        %1433 = vmatpush1.bf16.msra.mxu0 0
        %1434 = vmatprep.subr.bf16.mxu0 0
        %1435 = vmatpush1.bf16.msra.mxu0 0
        %1436 = vmatprep.subr.bf16.mxu0 0
        %1437 = vmatpush1.bf16.msra.mxu0 0
        %1438 = vmatprep.mubr.bf16.mxu0 0
        %1439 = vmatmul.mubr.bf16.gmra.mrb[0].mxu0 %v1401
        %v1440 = vpop.f32.mrb[0].mxu0
        %v1441 = vadd.f32 0.0, %v1440
        %v1442 = vpop.f32.mrb[0].mxu0
        %v1443 = vpop.f32.mrb[0].mxu0
        %v1444 = vpop.f32.mrb[0].mxu0
        %1445 = vdwg.mxu0
        %v1446 = vsel %vm1227, %v1441, 0.0
        %1447 = vadd.xlane.f32.xlu0 %v1446
        %v1448 = vpop.xlane.xlu0 %1447
        %v1449 = vmul.f32 %v1448, %v1231
        %v1450 = vsub.f32 %v1441, %v1449
        %v1451 = vmul.f32 %v1450, %v1450
        %v1452 = vsel %vm1227, %v1451, 0.0
        %1453 = vadd.xlane.f32.xlu0 %v1452
        %v1454 = vpop.xlane.xlu0 %1453
        %v1455 = vmul.f32 %v1454, %v1231
        %v1456 = vadd.f32 %v1455, 1e-05
        %v1457 = vrsqrt.pop %v1456
        %v1458 = vmul.f32 %v1450, %v1457
        %v1459 = vmul.f32 %v1458, %v1246
        %v1460 = vadd.f32 %v1459, %v1253
        %1462 = vrot.lane.b32.xlu0 %v1460, 16
        %v1463 = vpop.permute.xlu0 %1462
        %vm1465 = vcmask 261248
        %1466 = vst.msk [vmem:[#allocation5] sm:$0xff] %vm1465, %v1463
        %v1467 = vld [vmem:[#allocation2] sm:$0xf]
        %v1468 = vld [vmem:[#allocation3] sm:$0xf]
        %1469 = vrot.lane.b32.xlu0 %v1055, 112
        %v1470 = vpop.permute.xlu0 %1469
        %v1472 = vunpack.c.l.b16 %v1467
        %v1473 = vpack.c.b16 %v1472, %v1472
        %1474 = vrot.lane.b32.xlu0 %v1473, 112
        %v1475 = vpop.permute.xlu0 %1474
        %v1477 = vsel %vm1059, %v1470, 0
        %v1480 = vsel %vm1059, %v1475, 0
        %1482 = vmatprep.subr.bf16.mxu0 0
        %1483 = vmatpush1.bf16.xpose.msra.mxu0 %v1480
        %1484 = vmatprep.subr.bf16.mxu0 0
        %1485 = vmatpush1.bf16.xpose.msra.mxu0 0
        %1486 = vmatprep.subr.bf16.mxu0 0
        %1487 = vmatpush1.bf16.xpose.msra.mxu0 0
        %1488 = vmatprep.subr.bf16.mxu0 0
        %1489 = vmatpush1.bf16.xpose.msra.mxu0 0
        %1490 = vmatprep.subr.bf16.mxu0 0
        %1491 = vmatpush1.bf16.xpose.msra.mxu0 0
        %1492 = vmatprep.subr.bf16.mxu0 0
        %1493 = vmatpush1.bf16.xpose.msra.mxu0 0
        %1494 = vmatprep.subr.bf16.mxu0 0
        %1495 = vmatpush1.bf16.xpose.msra.mxu0 0
        %1496 = vmatprep.subr.bf16.mxu0 0
        %1497 = vmatpush1.bf16.xpose.msra.mxu0 0
        %1498 = vmatprep.subr.bf16.mxu0 0
        %1499 = vmatpush1.bf16.xpose.msra.mxu0 0
        %1500 = vmatprep.subr.bf16.mxu0 0
        %1501 = vmatpush1.bf16.xpose.msra.mxu0 0
        %1502 = vmatprep.subr.bf16.mxu0 0
        %1503 = vmatpush1.bf16.xpose.msra.mxu0 0
        %1504 = vmatprep.subr.bf16.mxu0 0
        %1505 = vmatpush1.bf16.xpose.msra.mxu0 0
        %1506 = vmatprep.subr.bf16.mxu0 0
        %1507 = vmatpush1.bf16.xpose.msra.mxu0 0
        %1508 = vmatprep.subr.bf16.mxu0 0
        %1509 = vmatpush1.bf16.xpose.msra.mxu0 0
        %1510 = vmatprep.subr.bf16.mxu0 0
        %1511 = vmatpush1.bf16.xpose.msra.mxu0 0
        %1512 = vmatprep.subr.bf16.mxu0 0
        %1513 = vmatpush1.bf16.xpose.msra.mxu0 0
        %1514 = vmatprep.mubr.bf16.mxu0 0
        %1515 = vmatmul.mubr.bf16.gmra.mrb[0].mxu0 %v1477
        %v1516 = vpop.f32.mrb[0].mxu0
        %v1517 = vadd.f32 %v1052, %v1516
        %v1518 = vpop.f32.mrb[0].mxu0
        %v1519 = vpop.f32.mrb[0].mxu0
        %v1520 = vpop.f32.mrb[0].mxu0
        %1521 = vdwg.mxu0
        %1522 = vrot.lane.b32.xlu0 %v1056, 112
        %v1523 = vpop.permute.xlu0 %1522
        %v1525 = vunpack.c.l.b16 %v1468
        %v1526 = vpack.c.b16 %v1525, %v1525
        %1527 = vrot.lane.b32.xlu0 %v1526, 112
        %v1528 = vpop.permute.xlu0 %1527
        %v1530 = vsel %vm1059, %v1523, 0
        %v1533 = vsel %vm1059, %v1528, 0
        %1535 = vmatprep.subr.bf16.mxu0 0
        %1536 = vmatpush1.bf16.xpose.msra.mxu0 %v1533
        %1537 = vmatprep.subr.bf16.mxu0 0
        %1538 = vmatpush1.bf16.xpose.msra.mxu0 0
        %1539 = vmatprep.subr.bf16.mxu0 0
        %1540 = vmatpush1.bf16.xpose.msra.mxu0 0
        %1541 = vmatprep.subr.bf16.mxu0 0
        %1542 = vmatpush1.bf16.xpose.msra.mxu0 0
        %1543 = vmatprep.subr.bf16.mxu0 0
        %1544 = vmatpush1.bf16.xpose.msra.mxu0 0
        %1545 = vmatprep.subr.bf16.mxu0 0
        %1546 = vmatpush1.bf16.xpose.msra.mxu0 0
        %1547 = vmatprep.subr.bf16.mxu0 0
        %1548 = vmatpush1.bf16.xpose.msra.mxu0 0
        %1549 = vmatprep.subr.bf16.mxu0 0
        %1550 = vmatpush1.bf16.xpose.msra.mxu0 0
        %1551 = vmatprep.subr.bf16.mxu0 0
        %1552 = vmatpush1.bf16.xpose.msra.mxu0 0
        %1553 = vmatprep.subr.bf16.mxu0 0
        %1554 = vmatpush1.bf16.xpose.msra.mxu0 0
        %1555 = vmatprep.subr.bf16.mxu0 0
        %1556 = vmatpush1.bf16.xpose.msra.mxu0 0
        %1557 = vmatprep.subr.bf16.mxu0 0
        %1558 = vmatpush1.bf16.xpose.msra.mxu0 0
        %1559 = vmatprep.subr.bf16.mxu0 0
        %1560 = vmatpush1.bf16.xpose.msra.mxu0 0
        %1561 = vmatprep.subr.bf16.mxu0 0
        %1562 = vmatpush1.bf16.xpose.msra.mxu0 0
        %1563 = vmatprep.subr.bf16.mxu0 0
        %1564 = vmatpush1.bf16.xpose.msra.mxu0 0
        %1565 = vmatprep.subr.bf16.mxu0 0
        %1566 = vmatpush1.bf16.xpose.msra.mxu0 0
        %1567 = vmatprep.mubr.bf16.mxu0 0
        %1568 = vmatmul.mubr.bf16.gmra.mrb[0].mxu0 %v1530
        %v1569 = vpop.f32.mrb[0].mxu0
        %v1570 = vadd.f32 %v1052, %v1569
        %v1571 = vpop.f32.mrb[0].mxu0
        %v1572 = vpop.f32.mrb[0].mxu0
        %v1573 = vpop.f32.mrb[0].mxu0
        %1574 = vdwg.mxu0
        %v1575 = vsel %vm1059, %v1517, -inf
        %1576 = vmax.xlane.f32.xlu0 %v1575
        %v1577 = vpop.xlane.xlu0 %1576
        %v1578 = vsub.f32 %v1517, %v1577
        %v1579 = vmul.f32 %v1578, 1.442695
        %v1580 = vpow.pop %v1579
        %v1581 = vsel %vm1059, %v1580, 0.0
        %1582 = vadd.xlane.f32.xlu0 %v1581
        %v1583 = vpop.xlane.xlu0 %1582
        %v1584 = vrcp.pop %v1583
        %v1585 = vmul.f32 %v1580, %v1584
        %s1586 = sld [smem:[#allocation6 + $0x2]]
        %v1587 = vsel %vm1059, %v1570, -inf
        %1588 = vmax.xlane.f32.xlu0 %v1587
        %v1589 = vpop.xlane.xlu0 %1588
        %v1590 = vsub.f32 %v1570, %v1589
        %v1591 = vmul.f32 %v1590, 1.442695
        %v1592 = vpow.pop %v1591
        %v1593 = vsel %vm1059, %v1592, 0.0
        %1594 = vadd.xlane.f32.xlu0 %v1593
        %v1595 = vpop.xlane.xlu0 %1594
        %v1596 = vrcp.pop %v1595
        %v1597 = vmul.f32 %v1592, %v1596
        %v1598 = vstv %s1586
        %v1599 = vmul.f32 %v1598, %v1597
        %v1600 = vsub.f32 %v1585, %v1599
        %v1601 = vpack.c.bf16 %v1600, %v1600
        %v1602 = vld [vmem:[#allocation4] sm:$0xf]
        %v1604 = vunpack.c.l.b16 %v1602
        %v1605 = vpack.c.b16 %v1604, %v1604
        %1606 = vrot.lane.b32.xlu0 %v1605, 96
        %v1607 = vpop.permute.xlu0 %1606
        %v1609 = vsel %vm1059, %v1601, 0
        %v1612 = vsel %vm1183, %v1607, 0
        %1614 = vmatprep.subr.bf16.mxu0 0
        %1615 = vmatpush1.bf16.msra.mxu0 %v1612
        %1616 = vmatprep.subr.bf16.mxu0 0
        %1617 = vmatpush1.bf16.msra.mxu0 0
        %1618 = vmatprep.subr.bf16.mxu0 0
        %1619 = vmatpush1.bf16.msra.mxu0 0
        %1620 = vmatprep.subr.bf16.mxu0 0
        %1621 = vmatpush1.bf16.msra.mxu0 0
        %1622 = vmatprep.subr.bf16.mxu0 0
        %1623 = vmatpush1.bf16.msra.mxu0 0
        %1624 = vmatprep.subr.bf16.mxu0 0
        %1625 = vmatpush1.bf16.msra.mxu0 0
        %1626 = vmatprep.subr.bf16.mxu0 0
        %1627 = vmatpush1.bf16.msra.mxu0 0
        %1628 = vmatprep.subr.bf16.mxu0 0
        %1629 = vmatpush1.bf16.msra.mxu0 0
        %1630 = vmatprep.subr.bf16.mxu0 0
        %1631 = vmatpush1.bf16.msra.mxu0 0
        %1632 = vmatprep.subr.bf16.mxu0 0
        %1633 = vmatpush1.bf16.msra.mxu0 0
        %1634 = vmatprep.subr.bf16.mxu0 0
        %1635 = vmatpush1.bf16.msra.mxu0 0
        %1636 = vmatprep.subr.bf16.mxu0 0
        %1637 = vmatpush1.bf16.msra.mxu0 0
        %1638 = vmatprep.subr.bf16.mxu0 0
        %1639 = vmatpush1.bf16.msra.mxu0 0
        %1640 = vmatprep.subr.bf16.mxu0 0
        %1641 = vmatpush1.bf16.msra.mxu0 0
        %1642 = vmatprep.subr.bf16.mxu0 0
        %1643 = vmatpush1.bf16.msra.mxu0 0
        %1644 = vmatprep.subr.bf16.mxu0 0
        %1645 = vmatpush1.bf16.msra.mxu0 0
        %1646 = vmatprep.mubr.bf16.mxu0 0
        %1647 = vmatmul.mubr.bf16.gmra.mrb[0].mxu0 %v1609
        %v1648 = vpop.f32.mrb[0].mxu0
        %v1649 = vadd.f32 0.0, %v1648
        %v1650 = vpop.f32.mrb[0].mxu0
        %v1651 = vpop.f32.mrb[0].mxu0
        %v1652 = vpop.f32.mrb[0].mxu0
        %1653 = vdwg.mxu0
        %v1654 = vsel %vm1227, %v1649, 0.0
        %1655 = vadd.xlane.f32.xlu0 %v1654
        %v1656 = vpop.xlane.xlu0 %1655
        %v1657 = vmul.f32 %v1656, %v1231
        %v1658 = vsub.f32 %v1649, %v1657
        %v1659 = vmul.f32 %v1658, %v1658
        %v1660 = vsel %vm1227, %v1659, 0.0
        %1661 = vadd.xlane.f32.xlu0 %v1660
        %v1662 = vpop.xlane.xlu0 %1661
        %v1663 = vmul.f32 %v1662, %v1231
        %v1664 = vadd.f32 %v1663, 1e-05
        %v1665 = vrsqrt.pop %v1664
        %v1666 = vmul.f32 %v1658, %v1665
        %v1667 = vmul.f32 %v1666, %v1246
        %v1668 = vadd.f32 %v1667, %v1253
        %1670 = vrot.lane.b32.xlu0 %v1668, 32
        %v1671 = vpop.permute.xlu0 %1670
        %vm1673 = vcmask 392448
        %1674 = vst.msk [vmem:[#allocation5] sm:$0xff] %vm1673, %v1671
        %v1675 = vld [vmem:[#allocation2] sm:$0xf]
        %v1676 = vld [vmem:[#allocation3] sm:$0xf]
        %1677 = vrot.lane.b32.xlu0 %v1055, 104
        %v1678 = vpop.permute.xlu0 %1677
        %v1680 = vunpack.c.l.b16 %v1675
        %v1681 = vpack.c.b16 %v1680, %v1680
        %1682 = vrot.lane.b32.xlu0 %v1681, 104
        %v1683 = vpop.permute.xlu0 %1682
        %v1685 = vsel %vm1059, %v1678, 0
        %v1688 = vsel %vm1059, %v1683, 0
        %1690 = vmatprep.subr.bf16.mxu0 0
        %1691 = vmatpush1.bf16.xpose.msra.mxu0 %v1688
        %1692 = vmatprep.subr.bf16.mxu0 0
        %1693 = vmatpush1.bf16.xpose.msra.mxu0 0
        %1694 = vmatprep.subr.bf16.mxu0 0
        %1695 = vmatpush1.bf16.xpose.msra.mxu0 0
        %1696 = vmatprep.subr.bf16.mxu0 0
        %1697 = vmatpush1.bf16.xpose.msra.mxu0 0
        %1698 = vmatprep.subr.bf16.mxu0 0
        %1699 = vmatpush1.bf16.xpose.msra.mxu0 0
        %1700 = vmatprep.subr.bf16.mxu0 0
        %1701 = vmatpush1.bf16.xpose.msra.mxu0 0
        %1702 = vmatprep.subr.bf16.mxu0 0
        %1703 = vmatpush1.bf16.xpose.msra.mxu0 0
        %1704 = vmatprep.subr.bf16.mxu0 0
        %1705 = vmatpush1.bf16.xpose.msra.mxu0 0
        %1706 = vmatprep.subr.bf16.mxu0 0
        %1707 = vmatpush1.bf16.xpose.msra.mxu0 0
        %1708 = vmatprep.subr.bf16.mxu0 0
        %1709 = vmatpush1.bf16.xpose.msra.mxu0 0
        %1710 = vmatprep.subr.bf16.mxu0 0
        %1711 = vmatpush1.bf16.xpose.msra.mxu0 0
        %1712 = vmatprep.subr.bf16.mxu0 0
        %1713 = vmatpush1.bf16.xpose.msra.mxu0 0
        %1714 = vmatprep.subr.bf16.mxu0 0
        %1715 = vmatpush1.bf16.xpose.msra.mxu0 0
        %1716 = vmatprep.subr.bf16.mxu0 0
        %1717 = vmatpush1.bf16.xpose.msra.mxu0 0
        %1718 = vmatprep.subr.bf16.mxu0 0
        %1719 = vmatpush1.bf16.xpose.msra.mxu0 0
        %1720 = vmatprep.subr.bf16.mxu0 0
        %1721 = vmatpush1.bf16.xpose.msra.mxu0 0
        %1722 = vmatprep.mubr.bf16.mxu0 0
        %1723 = vmatmul.mubr.bf16.gmra.mrb[0].mxu0 %v1685
        %v1724 = vpop.f32.mrb[0].mxu0
        %v1725 = vadd.f32 %v1052, %v1724
        %v1726 = vpop.f32.mrb[0].mxu0
        %v1727 = vpop.f32.mrb[0].mxu0
        %v1728 = vpop.f32.mrb[0].mxu0
        %1729 = vdwg.mxu0
        %1730 = vrot.lane.b32.xlu0 %v1056, 104
        %v1731 = vpop.permute.xlu0 %1730
        %v1733 = vunpack.c.l.b16 %v1676
        %v1734 = vpack.c.b16 %v1733, %v1733
        %1735 = vrot.lane.b32.xlu0 %v1734, 104
        %v1736 = vpop.permute.xlu0 %1735
        %v1738 = vsel %vm1059, %v1731, 0
        %v1741 = vsel %vm1059, %v1736, 0
        %1743 = vmatprep.subr.bf16.mxu0 0
        %1744 = vmatpush1.bf16.xpose.msra.mxu0 %v1741
        %1745 = vmatprep.subr.bf16.mxu0 0
        %1746 = vmatpush1.bf16.xpose.msra.mxu0 0
        %1747 = vmatprep.subr.bf16.mxu0 0
        %1748 = vmatpush1.bf16.xpose.msra.mxu0 0
        %1749 = vmatprep.subr.bf16.mxu0 0
        %1750 = vmatpush1.bf16.xpose.msra.mxu0 0
        %1751 = vmatprep.subr.bf16.mxu0 0
        %1752 = vmatpush1.bf16.xpose.msra.mxu0 0
        %1753 = vmatprep.subr.bf16.mxu0 0
        %1754 = vmatpush1.bf16.xpose.msra.mxu0 0
        %1755 = vmatprep.subr.bf16.mxu0 0
        %1756 = vmatpush1.bf16.xpose.msra.mxu0 0
        %1757 = vmatprep.subr.bf16.mxu0 0
        %1758 = vmatpush1.bf16.xpose.msra.mxu0 0
        %1759 = vmatprep.subr.bf16.mxu0 0
        %1760 = vmatpush1.bf16.xpose.msra.mxu0 0
        %1761 = vmatprep.subr.bf16.mxu0 0
        %1762 = vmatpush1.bf16.xpose.msra.mxu0 0
        %1763 = vmatprep.subr.bf16.mxu0 0
        %1764 = vmatpush1.bf16.xpose.msra.mxu0 0
        %1765 = vmatprep.subr.bf16.mxu0 0
        %1766 = vmatpush1.bf16.xpose.msra.mxu0 0
        %1767 = vmatprep.subr.bf16.mxu0 0
        %1768 = vmatpush1.bf16.xpose.msra.mxu0 0
        %1769 = vmatprep.subr.bf16.mxu0 0
        %1770 = vmatpush1.bf16.xpose.msra.mxu0 0
        %1771 = vmatprep.subr.bf16.mxu0 0
        %1772 = vmatpush1.bf16.xpose.msra.mxu0 0
        %1773 = vmatprep.subr.bf16.mxu0 0
        %1774 = vmatpush1.bf16.xpose.msra.mxu0 0
        %1775 = vmatprep.mubr.bf16.mxu0 0
        %1776 = vmatmul.mubr.bf16.gmra.mrb[0].mxu0 %v1738
        %v1777 = vpop.f32.mrb[0].mxu0
        %v1778 = vadd.f32 %v1052, %v1777
        %v1779 = vpop.f32.mrb[0].mxu0
        %v1780 = vpop.f32.mrb[0].mxu0
        %v1781 = vpop.f32.mrb[0].mxu0
        %1782 = vdwg.mxu0
        %v1783 = vsel %vm1059, %v1725, -inf
        %1784 = vmax.xlane.f32.xlu0 %v1783
        %v1785 = vpop.xlane.xlu0 %1784
        %v1786 = vsub.f32 %v1725, %v1785
        %v1787 = vmul.f32 %v1786, 1.442695
        %v1788 = vpow.pop %v1787
        %v1789 = vsel %vm1059, %v1788, 0.0
        %1790 = vadd.xlane.f32.xlu0 %v1789
        %v1791 = vpop.xlane.xlu0 %1790
        %v1792 = vrcp.pop %v1791
        %v1793 = vmul.f32 %v1788, %v1792
        %s1794 = sld [smem:[#allocation6 + $0x3]]
        %v1795 = vsel %vm1059, %v1778, -inf
        %1796 = vmax.xlane.f32.xlu0 %v1795
        %v1797 = vpop.xlane.xlu0 %1796
        %v1798 = vsub.f32 %v1778, %v1797
        %v1799 = vmul.f32 %v1798, 1.442695
        %v1800 = vpow.pop %v1799
        %v1801 = vsel %vm1059, %v1800, 0.0
        %1802 = vadd.xlane.f32.xlu0 %v1801
        %v1803 = vpop.xlane.xlu0 %1802
        %v1804 = vrcp.pop %v1803
        %v1805 = vmul.f32 %v1800, %v1804
        %v1806 = vstv %s1794
        %v1807 = vmul.f32 %v1806, %v1805
        %v1808 = vsub.f32 %v1793, %v1807
        %v1809 = vpack.c.bf16 %v1808, %v1808
        %v1810 = vld [vmem:[#allocation4] sm:$0xf]
        %v1812 = vunpack.c.l.b16 %v1810
        %v1813 = vpack.c.b16 %v1812, %v1812
        %1814 = vrot.lane.b32.xlu0 %v1813, 80
        %v1815 = vpop.permute.xlu0 %1814
        %v1817 = vsel %vm1059, %v1809, 0
        %v1820 = vsel %vm1183, %v1815, 0
        %1822 = vmatprep.subr.bf16.mxu0 0
        %1823 = vmatpush1.bf16.msra.mxu0 %v1820
        %1824 = vmatprep.subr.bf16.mxu0 0
        %1825 = vmatpush1.bf16.msra.mxu0 0
        %1826 = vmatprep.subr.bf16.mxu0 0
        %1827 = vmatpush1.bf16.msra.mxu0 0
        %1828 = vmatprep.subr.bf16.mxu0 0
        %1829 = vmatpush1.bf16.msra.mxu0 0
        %1830 = vmatprep.subr.bf16.mxu0 0
        %1831 = vmatpush1.bf16.msra.mxu0 0
        %1832 = vmatprep.subr.bf16.mxu0 0
        %1833 = vmatpush1.bf16.msra.mxu0 0
        %1834 = vmatprep.subr.bf16.mxu0 0
        %1835 = vmatpush1.bf16.msra.mxu0 0
        %1836 = vmatprep.subr.bf16.mxu0 0
        %1837 = vmatpush1.bf16.msra.mxu0 0
        %1838 = vmatprep.subr.bf16.mxu0 0
        %1839 = vmatpush1.bf16.msra.mxu0 0
        %1840 = vmatprep.subr.bf16.mxu0 0
        %1841 = vmatpush1.bf16.msra.mxu0 0
        %1842 = vmatprep.subr.bf16.mxu0 0
        %1843 = vmatpush1.bf16.msra.mxu0 0
        %1844 = vmatprep.subr.bf16.mxu0 0
        %1845 = vmatpush1.bf16.msra.mxu0 0
        %1846 = vmatprep.subr.bf16.mxu0 0
        %1847 = vmatpush1.bf16.msra.mxu0 0
        %1848 = vmatprep.subr.bf16.mxu0 0
        %1849 = vmatpush1.bf16.msra.mxu0 0
        %1850 = vmatprep.subr.bf16.mxu0 0
        %1851 = vmatpush1.bf16.msra.mxu0 0
        %1852 = vmatprep.subr.bf16.mxu0 0
        %1853 = vmatpush1.bf16.msra.mxu0 0
        %1854 = vmatprep.mubr.bf16.mxu0 0
        %1855 = vmatmul.mubr.bf16.gmra.mrb[0].mxu0 %v1817
        %v1856 = vpop.f32.mrb[0].mxu0
        %v1857 = vadd.f32 0.0, %v1856
        %v1858 = vpop.f32.mrb[0].mxu0
        %v1859 = vpop.f32.mrb[0].mxu0
        %v1860 = vpop.f32.mrb[0].mxu0
        %1861 = vdwg.mxu0
        %v1862 = vsel %vm1227, %v1857, 0.0
        %1863 = vadd.xlane.f32.xlu0 %v1862
        %v1864 = vpop.xlane.xlu0 %1863
        %v1865 = vmul.f32 %v1864, %v1231
        %v1866 = vsub.f32 %v1857, %v1865
        %v1867 = vmul.f32 %v1866, %v1866
        %v1868 = vsel %vm1227, %v1867, 0.0
        %1869 = vadd.xlane.f32.xlu0 %v1868
        %v1870 = vpop.xlane.xlu0 %1869
        %v1871 = vmul.f32 %v1870, %v1231
        %v1872 = vadd.f32 %v1871, 1e-05
        %v1873 = vrsqrt.pop %v1872
        %v1874 = vmul.f32 %v1866, %v1873
        %v1875 = vmul.f32 %v1874, %v1246
        %v1876 = vadd.f32 %v1875, %v1253
        %1878 = vrot.lane.b32.xlu0 %v1876, 48
        %v1879 = vpop.permute.xlu0 %1878
        %vm1881 = vcmask 523648
        %1882 = vst.msk [vmem:[#allocation5] sm:$0xff] %vm1881, %v1879
        %v1883 = vld [vmem:[#allocation5] sm:$0xff]
        %v1884 = vpack.c.bf16 %v1883, %v1883
        %v1885 = vld [vmem:[%s12] sm:$0xf]
        %v1886 = vld [vmem:[%s12 + $0x4] sm:$0xf]
        %v1887 = vld [vmem:[%s12 + $0x8] sm:$0xf]
        %v1888 = vld [vmem:[%s12 + $0xc] sm:$0xf]
        %v1889 = vld [vmem:[%s12 + $0x10] sm:$0xf]
        %v1890 = vld [vmem:[%s12 + $0x14] sm:$0xf]
        %v1891 = vld [vmem:[%s12 + $0x18] sm:$0xf]
        %v1892 = vld [vmem:[%s12 + $0x1c] sm:$0xf]
        %v1893 = vld [vmem:[%s13] sm:$0x1]
        %v1895 = vlaneseq
        %v1896 = vshrl.u32 %v1895, 7
        %v1897 = vsub.s32 0, %v1896
        %v1898 = vrot.slane %v1893, %v1897
        %v1908 = vunpack.c.l.b16 %v1885
        %v1909 = vunpack.c.l.b16 %v1886
        %v1910 = vunpack.c.l.b16 %v1887
        %v1911 = vunpack.c.l.b16 %v1888
        %v1912 = vunpack.c.l.b16 %v1889
        %v1913 = vunpack.c.l.b16 %v1890
        %v1914 = vunpack.c.l.b16 %v1891
        %v1915 = vunpack.c.l.b16 %v1892
        %v1916 = vpack.c.b16 %v1909, %v1908
        %v1917 = vpack.c.b16 %v1911, %v1910
        %v1918 = vpack.c.b16 %v1913, %v1912
        %v1919 = vpack.c.b16 %v1915, %v1914
        %vm1924 = vcmask 523264
        %v1926 = vsel %vm1924, %v1884, 0
        %1928 = vmatprep.subr.bf16.mxu0 0
        %1929 = vmatpush1.bf16.msra.mxu0 %v1916
        %1930 = vmatprep.subr.bf16.mxu0 0
        %1931 = vmatpush1.bf16.msra.mxu0 %v1917
        %1932 = vmatprep.subr.bf16.mxu0 0
        %1933 = vmatpush1.bf16.msra.mxu0 %v1918
        %1934 = vmatprep.subr.bf16.mxu0 0
        %1935 = vmatpush1.bf16.msra.mxu0 %v1919
        %1936 = vmatprep.subr.bf16.mxu0 0
        %1937 = vmatpush1.bf16.msra.mxu0 0
        %1938 = vmatprep.subr.bf16.mxu0 0
        %1939 = vmatpush1.bf16.msra.mxu0 0
        %1940 = vmatprep.subr.bf16.mxu0 0
        %1941 = vmatpush1.bf16.msra.mxu0 0
        %1942 = vmatprep.subr.bf16.mxu0 0
        %1943 = vmatpush1.bf16.msra.mxu0 0
        %1944 = vmatprep.subr.bf16.mxu0 0
        %1945 = vmatpush1.bf16.msra.mxu0 0
        %1946 = vmatprep.subr.bf16.mxu0 0
        %1947 = vmatpush1.bf16.msra.mxu0 0
        %1948 = vmatprep.subr.bf16.mxu0 0
        %1949 = vmatpush1.bf16.msra.mxu0 0
        %1950 = vmatprep.subr.bf16.mxu0 0
        %1951 = vmatpush1.bf16.msra.mxu0 0
        %1952 = vmatprep.subr.bf16.mxu0 0
        %1953 = vmatpush1.bf16.msra.mxu0 0
        %1954 = vmatprep.subr.bf16.mxu0 0
        %1955 = vmatpush1.bf16.msra.mxu0 0
        %1956 = vmatprep.subr.bf16.mxu0 0
        %1957 = vmatpush1.bf16.msra.mxu0 0
        %1958 = vmatprep.subr.bf16.mxu0 0
        %1959 = vmatpush1.bf16.msra.mxu0 0
        %1960 = vmatprep.mubr.bf16.mxu0 0
        %1961 = vmatmul.mubr.bf16.gmra.mrb[0].mxu0 %v1926
        %v1962 = vpop.f32.mrb[0].mxu0
        %v1963 = vadd.f32 %v1898, %v1962
        %v1964 = vpop.f32.mrb[0].mxu0
        %v1965 = vpop.f32.mrb[0].mxu0
        %v1966 = vpop.f32.mrb[0].mxu0
        %1967 = vdwg.mxu0
        %v1968 = vadd.f32 %v896, %v1963
        %v1969 = vld [vmem:[%s14] sm:$0x1]
        %v1970 = vld [vmem:[%s15] sm:$0x1]
        %v1971 = vsel %vm899, %v1968, 0.0
        %1972 = vadd.xlane.f32.xlu0 %v1971
        %v1973 = vpop.xlane.xlu0 %1972
        %v1974 = vmul.f32 %v1973, %v903
        %v1975 = vsub.f32 %v1968, %v1974
        %v1976 = vmul.f32 %v1975, %v1975
        %v1977 = vsel %vm899, %v1976, 0.0
        %1978 = vadd.xlane.f32.xlu0 %v1977
        %v1979 = vpop.xlane.xlu0 %1978
        %v1980 = vmul.f32 %v1979, %v903
        %v1981 = vadd.f32 %v1980, 1e-05
        %v1982 = vrsqrt.pop %v1981
        %v1983 = vmul.f32 %v1975, %v1982
        %v1985 = vlaneseq
        %v1986 = vshrl.u32 %v1985, 7
        %v1987 = vsub.s32 0, %v1986
        %v1988 = vrot.slane %v1969, %v1987
        %v1990 = vmul.f32 %v1983, %v1988
        %v1992 = vlaneseq
        %v1993 = vshrl.u32 %v1992, 7
        %v1994 = vsub.s32 0, %v1993
        %v1995 = vrot.slane %v1970, %v1994
        %v1997 = vadd.f32 %v1990, %v1995
        %v1998 = vpack.c.bf16 %v1997, %v1997
        %v1999 = vld [vmem:[%s16] sm:$0xf]
        %v2000 = vld [vmem:[%s16 + $0x4] sm:$0xf]
        %v2001 = vld [vmem:[%s16 + $0x8] sm:$0xf]
        %v2002 = vld [vmem:[%s16 + $0xc] sm:$0xf]
        %v2003 = vld [vmem:[%s17] sm:$0x1]
        %v2005 = vlaneseq
        %v2006 = vshrl.u32 %v2005, 7
        %v2007 = vsub.s32 0, %v2006
        %v2008 = vrot.slane %v2003, %v2007
        %v2014 = vunpack.c.l.b16 %v1999
        %v2015 = vunpack.c.l.b16 %v2000
        %v2016 = vunpack.c.l.b16 %v2001
        %v2017 = vunpack.c.l.b16 %v2002
        %v2018 = vpack.c.b16 %v2015, %v2014
        %v2019 = vpack.c.b16 %v2017, %v2016
        %v2023 = vsel %vm899, %v1998, 0
        %2025 = vmatprep.subr.bf16.mxu0 0
        %2026 = vmatpush1.bf16.msra.mxu0 %v2018
        %2027 = vmatprep.subr.bf16.mxu0 0
        %2028 = vmatpush1.bf16.msra.mxu0 %v2019
        %2029 = vmatprep.subr.bf16.mxu0 0
        %2030 = vmatpush1.bf16.msra.mxu0 0
        %2031 = vmatprep.subr.bf16.mxu0 0
        %2032 = vmatpush1.bf16.msra.mxu0 0
        %2033 = vmatprep.subr.bf16.mxu0 0
        %2034 = vmatpush1.bf16.msra.mxu0 0
        %2035 = vmatprep.subr.bf16.mxu0 0
        %2036 = vmatpush1.bf16.msra.mxu0 0
        %2037 = vmatprep.subr.bf16.mxu0 0
        %2038 = vmatpush1.bf16.msra.mxu0 0
        %2039 = vmatprep.subr.bf16.mxu0 0
        %2040 = vmatpush1.bf16.msra.mxu0 0
        %2041 = vmatprep.subr.bf16.mxu0 0
        %2042 = vmatpush1.bf16.msra.mxu0 0
        %2043 = vmatprep.subr.bf16.mxu0 0
        %2044 = vmatpush1.bf16.msra.mxu0 0
        %2045 = vmatprep.subr.bf16.mxu0 0
        %2046 = vmatpush1.bf16.msra.mxu0 0
        %2047 = vmatprep.subr.bf16.mxu0 0
        %2048 = vmatpush1.bf16.msra.mxu0 0
        %2049 = vmatprep.subr.bf16.mxu0 0
        %2050 = vmatpush1.bf16.msra.mxu0 0
        %2051 = vmatprep.subr.bf16.mxu0 0
        %2052 = vmatpush1.bf16.msra.mxu0 0
        %2053 = vmatprep.subr.bf16.mxu0 0
        %2054 = vmatpush1.bf16.msra.mxu0 0
        %2055 = vmatprep.subr.bf16.mxu0 0
        %2056 = vmatpush1.bf16.msra.mxu0 0
        %2057 = vmatprep.mubr.bf16.mxu0 0
        %2058 = vmatmul.mubr.bf16.gmra.mrb[0].mxu0 %v2023
        %v2059 = vpop.f32.mrb[0].mxu0
        %v2060 = vadd.f32 %v2008, %v2059
        %v2061 = vpop.f32.mrb[0].mxu0
        %v2062 = vpop.f32.mrb[0].mxu0
        %v2063 = vpop.f32.mrb[0].mxu0
        %2064 = vdwg.mxu0
        %v2065 = vmax.f32 %v2060, 0.0
        %v2066 = vpack.c.bf16 %v2065, %v2065
        %v2067 = vld [vmem:[%s18] sm:$0xf]
        %v2068 = vld [vmem:[%s18 + $0x4] sm:$0xf]
        %v2069 = vld [vmem:[%s18 + $0x8] sm:$0xf]
        %v2070 = vld [vmem:[%s18 + $0xc] sm:$0xf]
        %v2071 = vld [vmem:[%s18 + $0x10] sm:$0xf]
        %v2072 = vld [vmem:[%s18 + $0x14] sm:$0xf]
        %v2073 = vld [vmem:[%s18 + $0x18] sm:$0xf]
        %v2074 = vld [vmem:[%s18 + $0x1c] sm:$0xf]
        %v2075 = vld [vmem:[%s18 + $0x20] sm:$0xf]
        %v2076 = vld [vmem:[%s18 + $0x24] sm:$0xf]
        %v2077 = vld [vmem:[%s18 + $0x28] sm:$0xf]
        %v2078 = vld [vmem:[%s18 + $0x2c] sm:$0xf]
        %v2079 = vld [vmem:[%s18 + $0x30] sm:$0xf]
        %v2080 = vld [vmem:[%s18 + $0x34] sm:$0xf]
        %v2081 = vld [vmem:[%s18 + $0x38] sm:$0xf]
        %v2082 = vld [vmem:[%s18 + $0x3c] sm:$0xf]
        %v2083 = vld [vmem:[%s19] sm:$0x1]
        %v2085 = vlaneseq
        %v2086 = vshrl.u32 %v2085, 7
        %v2087 = vsub.s32 0, %v2086
        %v2088 = vrot.slane %v2083, %v2087
        %v2106 = vunpack.c.l.b16 %v2067
        %v2107 = vunpack.c.l.b16 %v2068
        %v2108 = vunpack.c.l.b16 %v2069
        %v2109 = vunpack.c.l.b16 %v2070
        %v2110 = vunpack.c.l.b16 %v2071
        %v2111 = vunpack.c.l.b16 %v2072
        %v2112 = vunpack.c.l.b16 %v2073
        %v2113 = vunpack.c.l.b16 %v2074
        %v2114 = vunpack.c.l.b16 %v2075
        %v2115 = vunpack.c.l.b16 %v2076
        %v2116 = vunpack.c.l.b16 %v2077
        %v2117 = vunpack.c.l.b16 %v2078
        %v2118 = vunpack.c.l.b16 %v2079
        %v2119 = vunpack.c.l.b16 %v2080
        %v2120 = vunpack.c.l.b16 %v2081
        %v2121 = vunpack.c.l.b16 %v2082
        %v2122 = vpack.c.b16 %v2107, %v2106
        %v2123 = vpack.c.b16 %v2109, %v2108
        %v2124 = vpack.c.b16 %v2111, %v2110
        %v2125 = vpack.c.b16 %v2113, %v2112
        %v2126 = vpack.c.b16 %v2115, %v2114
        %v2127 = vpack.c.b16 %v2117, %v2116
        %v2128 = vpack.c.b16 %v2119, %v2118
        %v2129 = vpack.c.b16 %v2121, %v2120
        %2138 = vmatprep.subr.bf16.mxu0 0
        %2139 = vmatpush1.bf16.msra.mxu0 %v2122
        %2140 = vmatprep.subr.bf16.mxu0 0
        %2141 = vmatpush1.bf16.msra.mxu0 %v2123
        %2142 = vmatprep.subr.bf16.mxu0 0
        %2143 = vmatpush1.bf16.msra.mxu0 %v2124
        %2144 = vmatprep.subr.bf16.mxu0 0
        %2145 = vmatpush1.bf16.msra.mxu0 %v2125
        %2146 = vmatprep.subr.bf16.mxu0 0
        %2147 = vmatpush1.bf16.msra.mxu0 %v2126
        %2148 = vmatprep.subr.bf16.mxu0 0
        %2149 = vmatpush1.bf16.msra.mxu0 %v2127
        %2150 = vmatprep.subr.bf16.mxu0 0
        %2151 = vmatpush1.bf16.msra.mxu0 %v2128
        %2152 = vmatprep.subr.bf16.mxu0 0
        %2153 = vmatpush1.bf16.msra.mxu0 %v2129
        %2154 = vmatprep.subr.bf16.mxu0 0
        %2155 = vmatpush1.bf16.msra.mxu0 0
        %2156 = vmatprep.subr.bf16.mxu0 0
        %2157 = vmatpush1.bf16.msra.mxu0 0
        %2158 = vmatprep.subr.bf16.mxu0 0
        %2159 = vmatpush1.bf16.msra.mxu0 0
        %2160 = vmatprep.subr.bf16.mxu0 0
        %2161 = vmatpush1.bf16.msra.mxu0 0
        %2162 = vmatprep.subr.bf16.mxu0 0
        %2163 = vmatpush1.bf16.msra.mxu0 0
        %2164 = vmatprep.subr.bf16.mxu0 0
        %2165 = vmatpush1.bf16.msra.mxu0 0
        %2166 = vmatprep.subr.bf16.mxu0 0
        %2167 = vmatpush1.bf16.msra.mxu0 0
        %2168 = vmatprep.subr.bf16.mxu0 0
        %2169 = vmatpush1.bf16.msra.mxu0 0
        %2170 = vmatprep.mubr.bf16.mxu0 0
        %2171 = vmatmul.mubr.bf16.gmra.mrb[0].mxu0 %v2066
        %v2172 = vpop.f32.mrb[0].mxu0
        %v2173 = vadd.f32 %v2088, %v2172
        %v2174 = vpop.f32.mrb[0].mxu0
        %v2175 = vpop.f32.mrb[0].mxu0
        %v2176 = vpop.f32.mrb[0].mxu0
        %2177 = vdwg.mxu0
        %v2178 = vadd.f32 %v1968, %v2173
        %2179 = vst.msk [vmem:[%s667] sm:$0xff] %vm899, %v2178
        %s2180 = sand.u32 %s489, 1
        %s2181 = scalar_lea.sflag [#allocation7], %s2180
        %s2182 = sand.u32 %s489, 1
        %s2183 = smul.addr %s2182, 8
        %s2184 = scalar_lea.vmem [#allocation9], %s2183
        // Predicated region
        $region109: #{tpu_custom_call.1} parent=99 // pred_check
          %p2185 = pneg %p499
        $region110: #{tpu_custom_call.1} parent=99 // pred_check_branch
          %2187 = sbr.rel (%p2185) target = $region112
        $region111: #{tpu_custom_call.1} parent=99 // pred_region
          %s2189 = ssub.s32 128, 128
          %2190 = vsyncadd %s2181, %s2189
          %s2191 = sadd.s32 %s40, %s39
          %s2192 = smul.addr %s2191, 128
          %s2193 = scalar_lea.hbm %s20, %s2192
          %s2195 = sshll.u32 %s2184, 4
          %s2196 = int_to_ptr.vmem [resolvable:$true] %s2195
          %2198 = dma.vmem_to_hbm [thread:$0]  %s2196, 128, %s2193, %s2181
        $region112: #{tpu_custom_call.1} parent=99 // pred_fallthru
          _
      $region100: #{tpu_custom_call.1} parent=5 // pred_fallthru
        _
      %p2199 = scmp.le.s32.totalorder 2, %s30
      // Predicated region
      $region113: #{tpu_custom_call.1} parent=5 // pred_check
        %p2200 = pneg %p2199
      $region114: #{tpu_custom_call.1} parent=5 // pred_check_branch
        %2202 = sbr.rel (%p2200) target = $region116
      $region115: #{tpu_custom_call.1} parent=5 // pred_region
        %s2203 = ssub.s32 %s30, 2
        // Predicated region
        $region117: #{tpu_custom_call.1} parent=115 // pred_check
          %p2204 = pneg %p505
        $region118: #{tpu_custom_call.1} parent=115 // pred_check_branch
          %2206 = sbr.rel (%p2204) target = $region120
        $region119: #{tpu_custom_call.1} parent=115 // pred_region
          %s2207 = sand.u32 %s490, 1
          %s2208 = scalar_lea.sflag [#allocation7], %s2207
          %s2209 = sand.u32 %s490, 1
          %s2210 = smul.addr %s2209, 8
          %s2211 = scalar_lea.vmem [#allocation9], %s2210
          %2212 = dma.done %s2208, 128
        $region120: #{tpu_custom_call.1} parent=115 // pred_fallthru
          _
      $region116: #{tpu_custom_call.1} parent=5 // pred_fallthru
        _
    $region6: #{tpu_custom_call.1} parent=1 // loop_footer
      %s34 = sadd.s32 1, %s30
    $region7: #{tpu_custom_call.1} parent=1 // loop_footer_branch
      %29 = sbr.rel target = $region3
    $region8: #{tpu_custom_call.1} parent=1 // loop_exit
      _
    %2213 = vsyncpa [#allocation7], 1
    %s2214 = scalar_lea.sflag [#allocation7], 1
    %2215 = vsyncpa %s2214, 1
    %2216 = vsyncpa [#allocation8], 1
    %s2217 = scalar_lea.sflag [#allocation8], 1
    %2218 = vsyncpa %s2217, 1

</llo_original>
